<compile_context>
chip_gen: v5e
topology: v5e:2x2
jax: 0.10.0
libtpu: 0.0.40
codegen_flags: <defaults>
</compile_context>

<pallas_src>
import functools

import jax
import jax.numpy as jnp
from jax.experimental import pallas as pl
from jax.experimental.pallas import tpu as pltpu

EPS = 1e-5


# ----------------------------- kernels ------------------------------------- #

def _conv3x3_kernel(*refs, fuse_input_bn_relu):
    """3x3 conv (pad=1, stride=1) + bias as ONE bf16 MXU matmul per image.

    Optionally fuses a per-channel affine + ReLU (the previous layer's BatchNorm)
    into the input load.  Also emits per-image per-channel (sum, sum-of-squares)
    partials of the raw conv output so BatchNorm batch statistics can be reduced
    cheaply outside the kernel (two-pass BN -> the kernel stays tileable).
    """
    if fuse_input_bn_relu:
        x_ref, w_ref, b_ref, scale_ref, shift_ref, z_ref, stats_ref = refs
    else:
        x_ref, w_ref, b_ref, z_ref, stats_ref = refs
        scale_ref = shift_ref = None

    _, H, W, Cin = x_ref.shape
    Cout = z_ref.shape[3]

    x = x_ref[0]                                              # (H, W, Cin) f32
    if fuse_input_bn_relu:
        x = jnp.maximum(x * scale_ref[...].reshape(1, 1, Cin)
                        + shift_ref[...].reshape(1, 1, Cin), 0.0)
    a = x.astype(jnp.bfloat16)

    # dx-shifted views; zero padding along W is folded into the shifts.
    zc = jnp.zeros((H, 1, Cin), jnp.bfloat16)
    c_m = jnp.concatenate([zc, a[:, :W - 1, :]], axis=1)      # x[h, w-1]
    c_p = jnp.concatenate([a[:, 1:, :], zc], axis=1)          # x[h, w+1]
    row = jnp.concatenate([c_m, a, c_p], axis=2)              # (H, W, 3*Cin): dx=0,1,2

    # dy shifts are leading-axis shifts (cheap, no relayout).
    zr = jnp.zeros((1, W, 3 * Cin), jnp.bfloat16)
    up = jnp.concatenate([zr, row[:H - 1]], axis=0)           # x[h-1, ...]  (dy=0)
    dn = jnp.concatenate([row[1:], zr], axis=0)               # x[h+1, ...]  (dy=2)
    patches = jnp.concatenate([up, row, dn], axis=2)          # (H, W, 9*Cin): (dy, dx, ci)
    patches = patches.reshape(H * W, 9 * Cin)

    acc = jnp.dot(patches, w_ref[...],                        # single MXU matmul
                  preferred_element_type=jnp.float32)         # (H*W, Cout) f32
    acc = acc + b_ref[...]                                    # (1, Cout) broadcast

    z_ref[0] = acc.reshape(H, W, Cout)
    s = jnp.sum(acc, axis=0, keepdims=True)                   # (1, Cout)
    ss = jnp.sum(acc * acc, axis=0, keepdims=True)            # (1, Cout)
    stats_ref[0] = jnp.concatenate([s, ss], axis=0)           # (2, Cout)


def _bn_relu_pool_kernel(z_ref, scale_ref, shift_ref, feat_ref, pool_ref):
    """Fused BatchNorm affine + ReLU + MaxPool2d(kernel=2, stride=2) epilogue."""
    _, H, W, C = z_ref.shape
    y = jnp.maximum(z_ref[0] * scale_ref[...].reshape(1, 1, C)
                    + shift_ref[...].reshape(1, 1, C), 0.0)
    feat_ref[0] = y
    yh = jnp.max(y.reshape(H // 2, 2, W, C), axis=1)                  # pool along H
    pool_ref[0] = jnp.max(yh.reshape(H // 2, W // 2, 2, C), axis=2)   # pool along W


# ----------------------------- wrappers ------------------------------------ #

def _conv3x3(x, wmat, b, in_scale=None, in_shift=None):
    """x: (N,H,W,Cin) f32 NHWC; wmat: (9*Cin, Cout) bf16.  Returns (z, stats)."""
    N, H, W, Cin = x.shape
    Cout = wmat.shape[1]
    fuse = in_scale is not None
    kernel = functools.partial(_conv3x3_kernel, fuse_input_bn_relu=fuse)

    in_specs = [
        pl.BlockSpec((1, H, W, Cin), lambda n: (n, 0, 0, 0)),
        pl.BlockSpec((9 * Cin, Cout), lambda n: (0, 0)),
        pl.BlockSpec((1, Cout), lambda n: (0, 0)),
    ]
    args = [x, wmat, b.reshape(1, Cout)]
    if fuse:
        in_specs += [pl.BlockSpec((1, Cin), lambda n: (0, 0)),
                     pl.BlockSpec((1, Cin), lambda n: (0, 0))]
        args += [in_scale.reshape(1, Cin), in_shift.reshape(1, Cin)]

    z, stats = pl.pallas_call(
        kernel,
        grid=(N,),
        in_specs=in_specs,
        out_specs=[pl.BlockSpec((1, H, W, Cout), lambda n: (n, 0, 0, 0)),
                   pl.BlockSpec((1, 2, Cout), lambda n: (n, 0, 0))],
        out_shape=[jax.ShapeDtypeStruct((N, H, W, Cout), jnp.float32),
                   jax.ShapeDtypeStruct((N, 2, Cout), jnp.float32)],
        compiler_params=pltpu.CompilerParams(
            dimension_semantics=("parallel",)),
    )(*args)
    return z, stats


def _bn_affine(stats, gamma, beta, count):
    """Reduce per-image (sum, sumsq) partials -> folded BN scale/shift (tiny, plain JAX)."""
    s = jnp.sum(stats[:, 0, :], axis=0)
    ss = jnp.sum(stats[:, 1, :], axis=0)
    mean = s / count
    var = ss / count - mean * mean           # biased variance (BatchNorm train mode)
    scale = gamma * jax.lax.rsqrt(var + EPS)
    shift = beta - mean * scale
    return scale, shift


def _bn_relu_pool(z, scale, shift):
    N, H, W, C = z.shape
    assert H % 2 == 0 and W % 2 == 0, "MaxPool2d(2) needs even H, W"
    feat, pooled = pl.pallas_call(
        _bn_relu_pool_kernel,
        grid=(N,),
        in_specs=[pl.BlockSpec((1, H, W, C), lambda n: (n, 0, 0, 0)),
                  pl.BlockSpec((1, C), lambda n: (0, 0)),
                  pl.BlockSpec((1, C), lambda n: (0, 0))],
        out_specs=[pl.BlockSpec((1, H, W, C), lambda n: (n, 0, 0, 0)),
                   pl.BlockSpec((1, H // 2, W // 2, C), lambda n: (n, 0, 0, 0))],
        out_shape=[jax.ShapeDtypeStruct((N, H, W, C), jnp.float32),
                   jax.ShapeDtypeStruct((N, H // 2, W // 2, C), jnp.float32)],
        compiler_params=pltpu.CompilerParams(
            dimension_semantics=("parallel",)),
    )(z, scale.reshape(1, C), shift.reshape(1, C))
    return feat, pooled


def conv_block_and_pool(x, p):
    """One ConvBlock (conv-BN-ReLU x2) + MaxPool2d(2).  x: NHWC.  -> (feat, pooled)."""
    N, H, W, Cin = x.shape
    Cout = p["b1"].shape[0]
    count = float(N * H * W)

    w1 = p["w1"].reshape(9 * Cin, Cout).astype(jnp.bfloat16)
    w2 = p["w2"].reshape(9 * Cout, Cout).astype(jnp.bfloat16)

    z1, st1 = _conv3x3(x, w1, p["b1"])                        # conv1 + bias (+ stats)
    sc1, sh1 = _bn_affine(st1, p["g1"], p["be1"], count)      # BN1 folded affine
    z2, st2 = _conv3x3(z1, w2, p["b2"], sc1, sh1)             # BN1+ReLU fused into conv2 load
    sc2, sh2 = _bn_affine(st2, p["g2"], p["be2"], count)      # BN2 folded affine
    feat, pooled = _bn_relu_pool(z2, sc2, sh2)                # BN2+ReLU+pool fused epilogue
    return feat, pooled


def contractive_block(x_nchw, params):
    """Forward of ContractiveBlock (attention=None).  Returns list of feats (NCHW)."""
    x = jnp.transpose(x_nchw, (0, 2, 3, 1))   # NCHW -> NHWC (boundary glue only)
    feats = []
    for p in params:
        feat, x = conv_block_and_pool(x, p)
        feats.append(jnp.transpose(feat, (0, 3, 1, 2)))  # NCHW to match PyTorch outputs
    return feats


# ----------------------------- params / reference --------------------------- #

def init_params(key, channels):
    params = []
    for i in range(len(channels) - 1):
        cin, cout = channels[i], channels[i + 1]
        key, *ks = jax.random.split(key, 9)

        def conv_w(k, ci, co):
            fan_in = ci * 9
            return jax.random.uniform(k, (3, 3, ci, co), jnp.float32,
                                      -1.0, 1.0) / jnp.sqrt(float(fan_in))

        params.append(dict(
            w1=conv_w(ks[0], cin, cout),
            b1=jax.random.uniform(ks[1], (cout,), jnp.float32, -0.1, 0.1),
            g1=1.0 + 0.1 * jax.random.normal(ks[2], (cout,), jnp.float32),
            be1=0.1 * jax.random.normal(ks[3], (cout,), jnp.float32),
            w2=conv_w(ks[4], cout, cout),
            b2=jax.random.uniform(ks[5], (cout,), jnp.float32, -0.1, 0.1),
            g2=1.0 + 0.1 * jax.random.normal(ks[6], (cout,), jnp.float32),
            be2=0.1 * jax.random.normal(ks[7], (cout,), jnp.float32),
        ))
    return params


def _ref_conv_bn_relu(x, w, b, g, be, match_bf16):
    if match_bf16:  # mimic the kernel's bf16 MXU operands (f32 accumulation)
        x = x.astype(jnp.bfloat16).astype(jnp.float32)
        w = w.astype(jnp.bfloat16).astype(jnp.float32)
    y = jax.lax.conv_general_dilated(
        x, w, (1, 1), ((1, 1), (1, 1)),
        dimension_numbers=("NHWC", "HWIO", "NHWC"),
        precision=jax.lax.Precision.HIGHEST)
    y = y + b
    mean = jnp.mean(y, axis=(0, 1, 2), keepdims=True)
    var = jnp.mean((y - mean) ** 2, axis=(0, 1, 2), keepdims=True)
    y = (y - mean) * jax.lax.rsqrt(var + EPS) * g + be
    return jnp.maximum(y, 0.0)


def _ref_pool(x):
    return jax.lax.reduce_window(x, -jnp.inf, jax.lax.max,
                                 (1, 2, 2, 1), (1, 2, 2, 1), "VALID")


def _ref_forward(x_nchw, params, match_bf16):
    x = jnp.transpose(x_nchw, (0, 2, 3, 1))
    feats = []
    for p in params:
        x = _ref_conv_bn_relu(x, p["w1"], p["b1"], p["g1"], p["be1"], match_bf16)
        x = _ref_conv_bn_relu(x, p["w2"], p["b2"], p["g2"], p["be2"], match_bf16)
        feats.append(jnp.transpose(x, (0, 3, 1, 2)))
        x = _ref_pool(x)
    return feats


# ------------------------------- main --------------------------------------- #

if __name__ == "__main__":
    channels = (4, 8, 16)
    key = jax.random.PRNGKey(0)
    kx, kp = jax.random.split(key)
    x = jax.random.normal(kx, (2, 4, 16, 16), jnp.float32)  # NCHW, like PyTorch
    params = init_params(kp, channels)

    feats = jax.jit(contractive_block)(x, params)
    feats = jax.block_until_ready(feats)

    expected_shapes = [(2, 8, 16, 16), (2, 16, 8, 8)]
    for f, es in zip(feats, expected_shapes):
        assert f.shape == es, (f.shape, es)

    # (a) Tight structural check against a reference with matching numerics
    #     (conv inputs rounded to bf16, like the MXU path).
    ref_match = _ref_forward(x, params, match_bf16=True)
    # (b) Looser sanity check against the exact f32 (PyTorch-equivalent) reference:
    #     only bf16-vs-f32 matmul precision separates the two (amplified by BN).
    ref_exact = _ref_forward(x, params, match_bf16=False)

    for i, (f, rm, re) in enumerate(zip(feats, ref_match, ref_exact)):
        err_m = float(jnp.max(jnp.abs(f - rm)))
        assert err_m < 5e-3, f"stage {i}: structural max abs err {err_m}"
        err_e_max = float(jnp.max(jnp.abs(f - re)))
        err_e_mean = float(jnp.mean(jnp.abs(f - re)))
        assert err_e_max < 1e-1 and err_e_mean < 5e-3, \
            f"stage {i}: vs exact ref max {err_e_max} mean {err_e_mean}"

    print("KERNEL_OK")
</pallas_src>

<mosaic_0001>
module attributes {stable_mosaic.version = 11 : i64} {
  func.func @_conv3x3_kernel(%arg0: i32, %arg1: memref<1x16x16x4xf32, #tpu.memory_space<vmem>>, %arg2: memref<36x8xbf16, #tpu.memory_space<vmem>>, %arg3: memref<1x8xf32, #tpu.memory_space<vmem>>, %arg4: memref<1x16x16x8xf32, #tpu.memory_space<vmem>>, %arg5: memref<1x2x8xf32, #tpu.memory_space<vmem>>) attributes {dimension_semantics = [#tpu.dimension_semantics<parallel>], iteration_bounds = array<i64: 2>, scalar_prefetch = 0 : i64, scratch_operands = 0 : i64, tpu.core_type = #tpu.core_type<tc>, window_params = [{transform_indices = @transform_0, window_bounds = array<i64: 1, 16, 16, 4>}, {pipeline_mode = #tpu.pipeline_mode<synchronous>, transform_indices = @transform_1, window_bounds = array<i64: 36, 8>}, {pipeline_mode = #tpu.pipeline_mode<synchronous>, transform_indices = @transform_2, window_bounds = array<i64: 1, 8>}, {transform_indices = @transform_3, window_bounds = array<i64: 1, 16, 16, 8>}, {transform_indices = @transform_4, window_bounds = array<i64: 1, 2, 8>}]} {
    %c0 = arith.constant 0 : index
    %c0_0 = arith.constant 0 : index
    %c0_1 = arith.constant 0 : index
    %c0_2 = arith.constant 0 : index
    %0 = vector.load %arg1[%c0, %c0_0, %c0_1, %c0_2] : memref<1x16x16x4xf32, #tpu.memory_space<vmem>>, vector<1x16x16x4xf32>
    %1 = vector.shape_cast %0 : vector<1x16x16x4xf32> to vector<16x16x4xf32>
    %2 = arith.truncf %1 : vector<16x16x4xf32> to vector<16x16x4xbf16>
    %cst = arith.constant 0.000000e+00 : bf16
    %3 = vector.broadcast %cst : bf16 to vector<16x1x4xbf16>
    %4 = vector.extract_strided_slice %2 {offsets = [0, 0, 0], sizes = [16, 15, 4], strides = [1, 1, 1]} : vector<16x16x4xbf16> to vector<16x15x4xbf16>
    %5 = tpu.concatenate %3, %4 in 1 : vector<16x1x4xbf16>, vector<16x15x4xbf16> -> vector<16x16x4xbf16>
    %6 = vector.extract_strided_slice %2 {offsets = [0, 1, 0], sizes = [16, 15, 4], strides = [1, 1, 1]} : vector<16x16x4xbf16> to vector<16x15x4xbf16>
    %7 = tpu.concatenate %6, %3 in 1 : vector<16x15x4xbf16>, vector<16x1x4xbf16> -> vector<16x16x4xbf16>
    %8 = tpu.concatenate %5, %2, %7 in 2 : vector<16x16x4xbf16>, vector<16x16x4xbf16>, vector<16x16x4xbf16> -> vector<16x16x12xbf16>
    %cst_3 = arith.constant 0.000000e+00 : bf16
    %9 = vector.broadcast %cst_3 : bf16 to vector<1x16x12xbf16>
    %10 = vector.extract_strided_slice %8 {offsets = [0, 0, 0], sizes = [15, 16, 12], strides = [1, 1, 1]} : vector<16x16x12xbf16> to vector<15x16x12xbf16>
    %11 = tpu.concatenate %9, %10 in 0 : vector<1x16x12xbf16>, vector<15x16x12xbf16> -> vector<16x16x12xbf16>
    %12 = vector.extract_strided_slice %8 {offsets = [1, 0, 0], sizes = [15, 16, 12], strides = [1, 1, 1]} : vector<16x16x12xbf16> to vector<15x16x12xbf16>
    %13 = tpu.concatenate %12, %9 in 0 : vector<15x16x12xbf16>, vector<1x16x12xbf16> -> vector<16x16x12xbf16>
    %14 = tpu.concatenate %11, %8, %13 in 2 : vector<16x16x12xbf16>, vector<16x16x12xbf16>, vector<16x16x12xbf16> -> vector<16x16x36xbf16>
    %15 = vector.shape_cast %14 : vector<16x16x36xbf16> to vector<256x36xbf16>
    %c0_4 = arith.constant 0 : index
    %c0_5 = arith.constant 0 : index
    %16 = vector.load %arg2[%c0_4, %c0_5] : memref<36x8xbf16, #tpu.memory_space<vmem>>, vector<36x8xbf16>
    %cst_6 = arith.constant dense<0.000000e+00> : vector<256x8xf32>
    %17 = tpu.matmul %15, %16, %cst_6 {dimension_numbers = #tpu.dot_dimension_numbers<[1], [0], [0], [1], [0, 0, 1, 1], [], []>} : vector<256x36xbf16>, vector<36x8xbf16>, vector<256x8xf32> -> vector<256x8xf32>
    %c0_7 = arith.constant 0 : index
    %c0_8 = arith.constant 0 : index
    %18 = vector.load %arg3[%c0_7, %c0_8] : memref<1x8xf32, #tpu.memory_space<vmem>>, vector<1x8xf32>
    %19 = vector.broadcast %18 : vector<1x8xf32> to vector<256x8xf32>
    %20 = arith.addf %17, %19 : vector<256x8xf32>
    %21 = vector.shape_cast %20 : vector<256x8xf32> to vector<16x16x8xf32>
    %c0_9 = arith.constant 0 : index
    %c0_10 = arith.constant 0 : index
    %c0_11 = arith.constant 0 : index
    %c0_12 = arith.constant 0 : index
    %22 = vector.load %arg4[%c0_9, %c0_10, %c0_11, %c0_12] : memref<1x16x16x8xf32, #tpu.memory_space<vmem>>, vector<1x16x16x8xf32>
    %23 = vector.shape_cast %22 : vector<1x16x16x8xf32> to vector<16x16x8xf32>
    %24 = vector.shape_cast %21 : vector<16x16x8xf32> to vector<1x16x16x8xf32>
    tpu.vector_store %arg4[%c0_9, %c0_10, %c0_11, %c0_12], %24 {strides = array<i32>} : memref<1x16x16x8xf32, #tpu.memory_space<vmem>>, vector<1x16x16x8xf32>,
    %cst_13 = arith.constant dense<0.000000e+00> : vector<8xf32>
    %25 = vector.multi_reduction <add>, %20, %cst_13 [0] : vector<256x8xf32> to vector<8xf32>
    %26 = vector.shape_cast %25 : vector<8xf32> to vector<1x8xf32>
    %27 = arith.mulf %20, %20 : vector<256x8xf32>
    %cst_14 = arith.constant dense<0.000000e+00> : vector<8xf32>
    %28 = vector.multi_reduction <add>, %27, %cst_14 [0] : vector<256x8xf32> to vector<8xf32>
    %29 = vector.shape_cast %28 : vector<8xf32> to vector<1x8xf32>
    %30 = tpu.concatenate %26, %29 in 0 : vector<1x8xf32>, vector<1x8xf32> -> vector<2x8xf32>
    %c0_15 = arith.constant 0 : index
    %c0_16 = arith.constant 0 : index
    %c0_17 = arith.constant 0 : index
    %31 = vector.load %arg5[%c0_15, %c0_16, %c0_17] : memref<1x2x8xf32, #tpu.memory_space<vmem>>, vector<1x2x8xf32>
    %32 = vector.shape_cast %31 : vector<1x2x8xf32> to vector<2x8xf32>
    %33 = vector.shape_cast %30 : vector<2x8xf32> to vector<1x2x8xf32>
    tpu.vector_store %arg5[%c0_15, %c0_16, %c0_17], %33 {strides = array<i32>} : memref<1x2x8xf32, #tpu.memory_space<vmem>>, vector<1x2x8xf32>,
    return
  }
  func.func @transform_0(%arg0: i32) -> (i32, i32, i32, i32) {
    %c0_i32 = arith.constant 0 : i32
    %c0_i32_0 = arith.constant 0 : i32
    %c0_i32_1 = arith.constant 0 : i32
    %c0_i32_2 = arith.constant 0 : i32
    return %arg0, %c0_i32, %c0_i32_0, %c0_i32_1 : i32, i32, i32, i32
  }
  func.func @transform_1(%arg0: i32) -> (i32, i32) {
    %c0_i32 = arith.constant 0 : i32
    %c0_i32_0 = arith.constant 0 : i32
    %c0_i32_1 = arith.constant 0 : i32
    return %c0_i32, %c0_i32_0 : i32, i32
  }
  func.func @transform_2(%arg0: i32) -> (i32, i32) {
    %c0_i32 = arith.constant 0 : i32
    %c0_i32_0 = arith.constant 0 : i32
    %c0_i32_1 = arith.constant 0 : i32
    return %c0_i32, %c0_i32_0 : i32, i32
  }
  func.func @transform_3(%arg0: i32) -> (i32, i32, i32, i32) {
    %c0_i32 = arith.constant 0 : i32
    %c0_i32_0 = arith.constant 0 : i32
    %c0_i32_1 = arith.constant 0 : i32
    %c0_i32_2 = arith.constant 0 : i32
    return %arg0, %c0_i32, %c0_i32_0, %c0_i32_1 : i32, i32, i32, i32
  }
  func.func @transform_4(%arg0: i32) -> (i32, i32, i32) {
    %c0_i32 = arith.constant 0 : i32
    %c0_i32_0 = arith.constant 0 : i32
    %c0_i32_1 = arith.constant 0 : i32
    return %arg0, %c0_i32, %c0_i32_0 : i32, i32, i32
  }
}

module attributes {stable_mosaic.version = 11 : i64} {
  func.func @_conv3x3_kernel(%arg0: i32, %arg1: memref<1x16x16x8xf32, #tpu.memory_space<vmem>>, %arg2: memref<72x8xbf16, #tpu.memory_space<vmem>>, %arg3: memref<1x8xf32, #tpu.memory_space<vmem>>, %arg4: memref<1x8xf32, #tpu.memory_space<vmem>>, %arg5: memref<1x8xf32, #tpu.memory_space<vmem>>, %arg6: memref<1x16x16x8xf32, #tpu.memory_space<vmem>>, %arg7: memref<1x2x8xf32, #tpu.memory_space<vmem>>) attributes {dimension_semantics = [#tpu.dimension_semantics<parallel>], iteration_bounds = array<i64: 2>, scalar_prefetch = 0 : i64, scratch_operands = 0 : i64, tpu.core_type = #tpu.core_type<tc>, window_params = [{transform_indices = @transform_0, window_bounds = array<i64: 1, 16, 16, 8>}, {pipeline_mode = #tpu.pipeline_mode<synchronous>, transform_indices = @transform_1, window_bounds = array<i64: 72, 8>}, {pipeline_mode = #tpu.pipeline_mode<synchronous>, transform_indices = @transform_2, window_bounds = array<i64: 1, 8>}, {pipeline_mode = #tpu.pipeline_mode<synchronous>, transform_indices = @transform_3, window_bounds = array<i64: 1, 8>}, {pipeline_mode = #tpu.pipeline_mode<synchronous>, transform_indices = @transform_4, window_bounds = array<i64: 1, 8>}, {transform_indices = @transform_5, window_bounds = array<i64: 1, 16, 16, 8>}, {transform_indices = @transform_6, window_bounds = array<i64: 1, 2, 8>}]} {
    %c0 = arith.constant 0 : index
    %c0_0 = arith.constant 0 : index
    %c0_1 = arith.constant 0 : index
    %c0_2 = arith.constant 0 : index
    %0 = vector.load %arg1[%c0, %c0_0, %c0_1, %c0_2] : memref<1x16x16x8xf32, #tpu.memory_space<vmem>>, vector<1x16x16x8xf32>
    %1 = vector.shape_cast %0 : vector<1x16x16x8xf32> to vector<16x16x8xf32>
    %c0_3 = arith.constant 0 : index
    %c0_4 = arith.constant 0 : index
    %2 = vector.load %arg4[%c0_3, %c0_4] : memref<1x8xf32, #tpu.memory_space<vmem>>, vector<1x8xf32>
    %3 = vector.shape_cast %2 : vector<1x8xf32> to vector<1x1x8xf32>
    %4 = vector.broadcast %3 : vector<1x1x8xf32> to vector<16x16x8xf32>
    %5 = arith.mulf %1, %4 : vector<16x16x8xf32>
    %c0_5 = arith.constant 0 : index
    %c0_6 = arith.constant 0 : index
    %6 = vector.load %arg5[%c0_5, %c0_6] : memref<1x8xf32, #tpu.memory_space<vmem>>, vector<1x8xf32>
    %7 = vector.shape_cast %6 : vector<1x8xf32> to vector<1x1x8xf32>
    %8 = vector.broadcast %7 : vector<1x1x8xf32> to vector<16x16x8xf32>
    %9 = arith.addf %5, %8 : vector<16x16x8xf32>
    %cst = arith.constant 0.000000e+00 : f32
    %10 = vector.broadcast %cst : f32 to vector<16x16x8xf32>
    %11 = arith.maximumf %9, %10 : vector<16x16x8xf32>
    %12 = arith.truncf %11 : vector<16x16x8xf32> to vector<16x16x8xbf16>
    %cst_7 = arith.constant 0.000000e+00 : bf16
    %13 = vector.broadcast %cst_7 : bf16 to vector<16x1x8xbf16>
    %14 = vector.extract_strided_slice %12 {offsets = [0, 0, 0], sizes = [16, 15, 8], strides = [1, 1, 1]} : vector<16x16x8xbf16> to vector<16x15x8xbf16>
    %15 = tpu.concatenate %13, %14 in 1 : vector<16x1x8xbf16>, vector<16x15x8xbf16> -> vector<16x16x8xbf16>
    %16 = vector.extract_strided_slice %12 {offsets = [0, 1, 0], sizes = [16, 15, 8], strides = [1, 1, 1]} : vector<16x16x8xbf16> to vector<16x15x8xbf16>
    %17 = tpu.concatenate %16, %13 in 1 : vector<16x15x8xbf16>, vector<16x1x8xbf16> -> vector<16x16x8xbf16>
    %18 = tpu.concatenate %15, %12, %17 in 2 : vector<16x16x8xbf16>, vector<16x16x8xbf16>, vector<16x16x8xbf16> -> vector<16x16x24xbf16>
    %cst_8 = arith.constant 0.000000e+00 : bf16
    %19 = vector.broadcast %cst_8 : bf16 to vector<1x16x24xbf16>
    %20 = vector.extract_strided_slice %18 {offsets = [0, 0, 0], sizes = [15, 16, 24], strides = [1, 1, 1]} : vector<16x16x24xbf16> to vector<15x16x24xbf16>
    %21 = tpu.concatenate %19, %20 in 0 : vector<1x16x24xbf16>, vector<15x16x24xbf16> -> vector<16x16x24xbf16>
    %22 = vector.extract_strided_slice %18 {offsets = [1, 0, 0], sizes = [15, 16, 24], strides = [1, 1, 1]} : vector<16x16x24xbf16> to vector<15x16x24xbf16>
    %23 = tpu.concatenate %22, %19 in 0 : vector<15x16x24xbf16>, vector<1x16x24xbf16> -> vector<16x16x24xbf16>
    %24 = tpu.concatenate %21, %18, %23 in 2 : vector<16x16x24xbf16>, vector<16x16x24xbf16>, vector<16x16x24xbf16> -> vector<16x16x72xbf16>
    %25 = vector.shape_cast %24 : vector<16x16x72xbf16> to vector<256x72xbf16>
    %c0_9 = arith.constant 0 : index
    %c0_10 = arith.constant 0 : index
    %26 = vector.load %arg2[%c0_9, %c0_10] : memref<72x8xbf16, #tpu.memory_space<vmem>>, vector<72x8xbf16>
    %cst_11 = arith.constant dense<0.000000e+00> : vector<256x8xf32>
    %27 = tpu.matmul %25, %26, %cst_11 {dimension_numbers = #tpu.dot_dimension_numbers<[1], [0], [0], [1], [0, 0, 1, 1], [], []>} : vector<256x72xbf16>, vector<72x8xbf16>, vector<256x8xf32> -> vector<256x8xf32>
    %c0_12 = arith.constant 0 : index
    %c0_13 = arith.constant 0 : index
    %28 = vector.load %arg3[%c0_12, %c0_13] : memref<1x8xf32, #tpu.memory_space<vmem>>, vector<1x8xf32>
    %29 = vector.broadcast %28 : vector<1x8xf32> to vector<256x8xf32>
    %30 = arith.addf %27, %29 : vector<256x8xf32>
    %31 = vector.shape_cast %30 : vector<256x8xf32> to vector<16x16x8xf32>
    %c0_14 = arith.constant 0 : index
    %c0_15 = arith.constant 0 : index
    %c0_16 = arith.constant 0 : index
    %c0_17 = arith.constant 0 : index
    %32 = vector.load %arg6[%c0_14, %c0_15, %c0_16, %c0_17] : memref<1x16x16x8xf32, #tpu.memory_space<vmem>>, vector<1x16x16x8xf32>
    %33 = vector.shape_cast %32 : vector<1x16x16x8xf32> to vector<16x16x8xf32>
    %34 = vector.shape_cast %31 : vector<16x16x8xf32> to vector<1x16x16x8xf32>
    tpu.vector_store %arg6[%c0_14, %c0_15, %c0_16, %c0_17], %34 {strides = array<i32>} : memref<1x16x16x8xf32, #tpu.memory_space<vmem>>, vector<1x16x16x8xf32>,
    %cst_18 = arith.constant dense<0.000000e+00> : vector<8xf32>
    %35 = vector.multi_reduction <add>, %30, %cst_18 [0] : vector<256x8xf32> to vector<8xf32>
    %36 = vector.shape_cast %35 : vector<8xf32> to vector<1x8xf32>
    %37 = arith.mulf %30, %30 : vector<256x8xf32>
    %cst_19 = arith.constant dense<0.000000e+00> : vector<8xf32>
    %38 = vector.multi_reduction <add>, %37, %cst_19 [0] : vector<256x8xf32> to vector<8xf32>
    %39 = vector.shape_cast %38 : vector<8xf32> to vector<1x8xf32>
    %40 = tpu.concatenate %36, %39 in 0 : vector<1x8xf32>, vector<1x8xf32> -> vector<2x8xf32>
    %c0_20 = arith.constant 0 : index
    %c0_21 = arith.constant 0 : index
    %c0_22 = arith.constant 0 : index
    %41 = vector.load %arg7[%c0_20, %c0_21, %c0_22] : memref<1x2x8xf32, #tpu.memory_space<vmem>>, vector<1x2x8xf32>
    %42 = vector.shape_cast %41 : vector<1x2x8xf32> to vector<2x8xf32>
    %43 = vector.shape_cast %40 : vector<2x8xf32> to vector<1x2x8xf32>
    tpu.vector_store %arg7[%c0_20, %c0_21, %c0_22], %43 {strides = array<i32>} : memref<1x2x8xf32, #tpu.memory_space<vmem>>, vector<1x2x8xf32>,
    return
  }
  func.func @transform_0(%arg0: i32) -> (i32, i32, i32, i32) {
    %c0_i32 = arith.constant 0 : i32
    %c0_i32_0 = arith.constant 0 : i32
    %c0_i32_1 = arith.constant 0 : i32
    %c0_i32_2 = arith.constant 0 : i32
    return %arg0, %c0_i32, %c0_i32_0, %c0_i32_1 : i32, i32, i32, i32
  }
  func.func @transform_1(%arg0: i32) -> (i32, i32) {
    %c0_i32 = arith.constant 0 : i32
    %c0_i32_0 = arith.constant 0 : i32
    %c0_i32_1 = arith.constant 0 : i32
    return %c0_i32, %c0_i32_0 : i32, i32
  }
  func.func @transform_2(%arg0: i32) -> (i32, i32) {
    %c0_i32 = arith.constant 0 : i32
    %c0_i32_0 = arith.constant 0 : i32
    %c0_i32_1 = arith.constant 0 : i32
    return %c0_i32, %c0_i32_0 : i32, i32
  }
  func.func @transform_3(%arg0: i32) -> (i32, i32) {
    %c0_i32 = arith.constant 0 : i32
    %c0_i32_0 = arith.constant 0 : i32
    %c0_i32_1 = arith.constant 0 : i32
    return %c0_i32, %c0_i32_0 : i32, i32
  }
  func.func @transform_4(%arg0: i32) -> (i32, i32) {
    %c0_i32 = arith.constant 0 : i32
    %c0_i32_0 = arith.constant 0 : i32
    %c0_i32_1 = arith.constant 0 : i32
    return %c0_i32, %c0_i32_0 : i32, i32
  }
  func.func @transform_5(%arg0: i32) -> (i32, i32, i32, i32) {
    %c0_i32 = arith.constant 0 : i32
    %c0_i32_0 = arith.constant 0 : i32
    %c0_i32_1 = arith.constant 0 : i32
    %c0_i32_2 = arith.constant 0 : i32
    return %arg0, %c0_i32, %c0_i32_0, %c0_i32_1 : i32, i32, i32, i32
  }
  func.func @transform_6(%arg0: i32) -> (i32, i32, i32) {
    %c0_i32 = arith.constant 0 : i32
    %c0_i32_0 = arith.constant 0 : i32
    %c0_i32_1 = arith.constant 0 : i32
    return %arg0, %c0_i32, %c0_i32_0 : i32, i32, i32
  }
}

module attributes {stable_mosaic.version = 11 : i64} {
  func.func @_bn_relu_pool_kernel(%arg0: i32, %arg1: memref<1x16x16x8xf32, #tpu.memory_space<vmem>>, %arg2: memref<1x8xf32, #tpu.memory_space<vmem>>, %arg3: memref<1x8xf32, #tpu.memory_space<vmem>>, %arg4: memref<1x16x16x8xf32, #tpu.memory_space<vmem>>, %arg5: memref<1x8x8x8xf32, #tpu.memory_space<vmem>>) attributes {dimension_semantics = [#tpu.dimension_semantics<parallel>], iteration_bounds = array<i64: 2>, scalar_prefetch = 0 : i64, scratch_operands = 0 : i64, tpu.core_type = #tpu.core_type<tc>, window_params = [{transform_indices = @transform_0, window_bounds = array<i64: 1, 16, 16, 8>}, {pipeline_mode = #tpu.pipeline_mode<synchronous>, transform_indices = @transform_1, window_bounds = array<i64: 1, 8>}, {pipeline_mode = #tpu.pipeline_mode<synchronous>, transform_indices = @transform_2, window_bounds = array<i64: 1, 8>}, {transform_indices = @transform_3, window_bounds = array<i64: 1, 16, 16, 8>}, {transform_indices = @transform_4, window_bounds = array<i64: 1, 8, 8, 8>}]} {
    %c0 = arith.constant 0 : index
    %c0_0 = arith.constant 0 : index
    %c0_1 = arith.constant 0 : index
    %c0_2 = arith.constant 0 : index
    %0 = vector.load %arg1[%c0, %c0_0, %c0_1, %c0_2] : memref<1x16x16x8xf32, #tpu.memory_space<vmem>>, vector<1x16x16x8xf32>
    %1 = vector.shape_cast %0 : vector<1x16x16x8xf32> to vector<16x16x8xf32>
    %c0_3 = arith.constant 0 : index
    %c0_4 = arith.constant 0 : index
    %2 = vector.load %arg2[%c0_3, %c0_4] : memref<1x8xf32, #tpu.memory_space<vmem>>, vector<1x8xf32>
    %3 = vector.shape_cast %2 : vector<1x8xf32> to vector<1x1x8xf32>
    %4 = vector.broadcast %3 : vector<1x1x8xf32> to vector<16x16x8xf32>
    %5 = arith.mulf %1, %4 : vector<16x16x8xf32>
    %c0_5 = arith.constant 0 : index
    %c0_6 = arith.constant 0 : index
    %6 = vector.load %arg3[%c0_5, %c0_6] : memref<1x8xf32, #tpu.memory_space<vmem>>, vector<1x8xf32>
    %7 = vector.shape_cast %6 : vector<1x8xf32> to vector<1x1x8xf32>
    %8 = vector.broadcast %7 : vector<1x1x8xf32> to vector<16x16x8xf32>
    %9 = arith.addf %5, %8 : vector<16x16x8xf32>
    %cst = arith.constant 0.000000e+00 : f32
    %10 = vector.broadcast %cst : f32 to vector<16x16x8xf32>
    %11 = arith.maximumf %9, %10 : vector<16x16x8xf32>
    %c0_7 = arith.constant 0 : index
    %c0_8 = arith.constant 0 : index
    %c0_9 = arith.constant 0 : index
    %c0_10 = arith.constant 0 : index
    %12 = vector.load %arg4[%c0_7, %c0_8, %c0_9, %c0_10] : memref<1x16x16x8xf32, #tpu.memory_space<vmem>>, vector<1x16x16x8xf32>
    %13 = vector.shape_cast %12 : vector<1x16x16x8xf32> to vector<16x16x8xf32>
    %14 = vector.shape_cast %11 : vector<16x16x8xf32> to vector<1x16x16x8xf32>
    tpu.vector_store %arg4[%c0_7, %c0_8, %c0_9, %c0_10], %14 {strides = array<i32>} : memref<1x16x16x8xf32, #tpu.memory_space<vmem>>, vector<1x16x16x8xf32>,
    %15 = vector.shape_cast %11 : vector<16x16x8xf32> to vector<8x2x16x8xf32>
    %cst_11 = arith.constant dense<0xFF800000> : vector<8x16x8xf32>
    %16 = vector.multi_reduction <maximumf>, %15, %cst_11 [1] : vector<8x2x16x8xf32> to vector<8x16x8xf32>
    %17 = vector.shape_cast %16 : vector<8x16x8xf32> to vector<8x8x2x8xf32>
    %cst_12 = arith.constant dense<0xFF800000> : vector<8x8x8xf32>
    %18 = vector.multi_reduction <maximumf>, %17, %cst_12 [2] : vector<8x8x2x8xf32> to vector<8x8x8xf32>
    %c0_13 = arith.constant 0 : index
    %c0_14 = arith.constant 0 : index
    %c0_15 = arith.constant 0 : index
    %c0_16 = arith.constant 0 : index
    %19 = vector.load %arg5[%c0_13, %c0_14, %c0_15, %c0_16] : memref<1x8x8x8xf32, #tpu.memory_space<vmem>>, vector<1x8x8x8xf32>
    %20 = vector.shape_cast %19 : vector<1x8x8x8xf32> to vector<8x8x8xf32>
    %21 = vector.shape_cast %18 : vector<8x8x8xf32> to vector<1x8x8x8xf32>
    tpu.vector_store %arg5[%c0_13, %c0_14, %c0_15, %c0_16], %21 {strides = array<i32>} : memref<1x8x8x8xf32, #tpu.memory_space<vmem>>, vector<1x8x8x8xf32>,
    return
  }
  func.func @transform_0(%arg0: i32) -> (i32, i32, i32, i32) {
    %c0_i32 = arith.constant 0 : i32
    %c0_i32_0 = arith.constant 0 : i32
    %c0_i32_1 = arith.constant 0 : i32
    %c0_i32_2 = arith.constant 0 : i32
    return %arg0, %c0_i32, %c0_i32_0, %c0_i32_1 : i32, i32, i32, i32
  }
  func.func @transform_1(%arg0: i32) -> (i32, i32) {
    %c0_i32 = arith.constant 0 : i32
    %c0_i32_0 = arith.constant 0 : i32
    %c0_i32_1 = arith.constant 0 : i32
    return %c0_i32, %c0_i32_0 : i32, i32
  }
  func.func @transform_2(%arg0: i32) -> (i32, i32) {
    %c0_i32 = arith.constant 0 : i32
    %c0_i32_0 = arith.constant 0 : i32
    %c0_i32_1 = arith.constant 0 : i32
    return %c0_i32, %c0_i32_0 : i32, i32
  }
  func.func @transform_3(%arg0: i32) -> (i32, i32, i32, i32) {
    %c0_i32 = arith.constant 0 : i32
    %c0_i32_0 = arith.constant 0 : i32
    %c0_i32_1 = arith.constant 0 : i32
    %c0_i32_2 = arith.constant 0 : i32
    return %arg0, %c0_i32, %c0_i32_0, %c0_i32_1 : i32, i32, i32, i32
  }
  func.func @transform_4(%arg0: i32) -> (i32, i32, i32, i32) {
    %c0_i32 = arith.constant 0 : i32
    %c0_i32_0 = arith.constant 0 : i32
    %c0_i32_1 = arith.constant 0 : i32
    %c0_i32_2 = arith.constant 0 : i32
    return %arg0, %c0_i32, %c0_i32_0, %c0_i32_1 : i32, i32, i32, i32
  }
}

module attributes {stable_mosaic.version = 11 : i64} {
  func.func @_conv3x3_kernel(%arg0: i32, %arg1: memref<1x8x8x8xf32, #tpu.memory_space<vmem>>, %arg2: memref<72x16xbf16, #tpu.memory_space<vmem>>, %arg3: memref<1x16xf32, #tpu.memory_space<vmem>>, %arg4: memref<1x8x8x16xf32, #tpu.memory_space<vmem>>, %arg5: memref<1x2x16xf32, #tpu.memory_space<vmem>>) attributes {dimension_semantics = [#tpu.dimension_semantics<parallel>], iteration_bounds = array<i64: 2>, scalar_prefetch = 0 : i64, scratch_operands = 0 : i64, tpu.core_type = #tpu.core_type<tc>, window_params = [{transform_indices = @transform_0, window_bounds = array<i64: 1, 8, 8, 8>}, {pipeline_mode = #tpu.pipeline_mode<synchronous>, transform_indices = @transform_1, window_bounds = array<i64: 72, 16>}, {pipeline_mode = #tpu.pipeline_mode<synchronous>, transform_indices = @transform_2, window_bounds = array<i64: 1, 16>}, {transform_indices = @transform_3, window_bounds = array<i64: 1, 8, 8, 16>}, {transform_indices = @transform_4, window_bounds = array<i64: 1, 2, 16>}]} {
    %c0 = arith.constant 0 : index
    %c0_0 = arith.constant 0 : index
    %c0_1 = arith.constant 0 : index
    %c0_2 = arith.constant 0 : index
    %0 = vector.load %arg1[%c0, %c0_0, %c0_1, %c0_2] : memref<1x8x8x8xf32, #tpu.memory_space<vmem>>, vector<1x8x8x8xf32>
    %1 = vector.shape_cast %0 : vector<1x8x8x8xf32> to vector<8x8x8xf32>
    %2 = arith.truncf %1 : vector<8x8x8xf32> to vector<8x8x8xbf16>
    %cst = arith.constant 0.000000e+00 : bf16
    %3 = vector.broadcast %cst : bf16 to vector<8x1x8xbf16>
    %4 = vector.extract_strided_slice %2 {offsets = [0, 0, 0], sizes = [8, 7, 8], strides = [1, 1, 1]} : vector<8x8x8xbf16> to vector<8x7x8xbf16>
    %5 = tpu.concatenate %3, %4 in 1 : vector<8x1x8xbf16>, vector<8x7x8xbf16> -> vector<8x8x8xbf16>
    %6 = vector.extract_strided_slice %2 {offsets = [0, 1, 0], sizes = [8, 7, 8], strides = [1, 1, 1]} : vector<8x8x8xbf16> to vector<8x7x8xbf16>
    %7 = tpu.concatenate %6, %3 in 1 : vector<8x7x8xbf16>, vector<8x1x8xbf16> -> vector<8x8x8xbf16>
    %8 = tpu.concatenate %5, %2, %7 in 2 : vector<8x8x8xbf16>, vector<8x8x8xbf16>, vector<8x8x8xbf16> -> vector<8x8x24xbf16>
    %cst_3 = arith.constant 0.000000e+00 : bf16
    %9 = vector.broadcast %cst_3 : bf16 to vector<1x8x24xbf16>
    %10 = vector.extract_strided_slice %8 {offsets = [0, 0, 0], sizes = [7, 8, 24], strides = [1, 1, 1]} : vector<8x8x24xbf16> to vector<7x8x24xbf16>
    %11 = tpu.concatenate %9, %10 in 0 : vector<1x8x24xbf16>, vector<7x8x24xbf16> -> vector<8x8x24xbf16>
    %12 = vector.extract_strided_slice %8 {offsets = [1, 0, 0], sizes = [7, 8, 24], strides = [1, 1, 1]} : vector<8x8x24xbf16> to vector<7x8x24xbf16>
    %13 = tpu.concatenate %12, %9 in 0 : vector<7x8x24xbf16>, vector<1x8x24xbf16> -> vector<8x8x24xbf16>
    %14 = tpu.concatenate %11, %8, %13 in 2 : vector<8x8x24xbf16>, vector<8x8x24xbf16>, vector<8x8x24xbf16> -> vector<8x8x72xbf16>
    %15 = vector.shape_cast %14 : vector<8x8x72xbf16> to vector<64x72xbf16>
    %c0_4 = arith.constant 0 : index
    %c0_5 = arith.constant 0 : index
    %16 = vector.load %arg2[%c0_4, %c0_5] : memref<72x16xbf16, #tpu.memory_space<vmem>>, vector<72x16xbf16>
    %cst_6 = arith.constant dense<0.000000e+00> : vector<64x16xf32>
    %17 = tpu.matmul %15, %16, %cst_6 {dimension_numbers = #tpu.dot_dimension_numbers<[1], [0], [0], [1], [0, 0, 1, 1], [], []>} : vector<64x72xbf16>, vector<72x16xbf16>, vector<64x16xf32> -> vector<64x16xf32>
    %c0_7 = arith.constant 0 : index
    %c0_8 = arith.constant 0 : index
    %18 = vector.load %arg3[%c0_7, %c0_8] : memref<1x16xf32, #tpu.memory_space<vmem>>, vector<1x16xf32>
    %19 = vector.broadcast %18 : vector<1x16xf32> to vector<64x16xf32>
    %20 = arith.addf %17, %19 : vector<64x16xf32>
    %21 = vector.shape_cast %20 : vector<64x16xf32> to vector<8x8x16xf32>
    %c0_9 = arith.constant 0 : index
    %c0_10 = arith.constant 0 : index
    %c0_11 = arith.constant 0 : index
    %c0_12 = arith.constant 0 : index
    %22 = vector.load %arg4[%c0_9, %c0_10, %c0_11, %c0_12] : memref<1x8x8x16xf32, #tpu.memory_space<vmem>>, vector<1x8x8x16xf32>
    %23 = vector.shape_cast %22 : vector<1x8x8x16xf32> to vector<8x8x16xf32>
    %24 = vector.shape_cast %21 : vector<8x8x16xf32> to vector<1x8x8x16xf32>
    tpu.vector_store %arg4[%c0_9, %c0_10, %c0_11, %c0_12], %24 {strides = array<i32>} : memref<1x8x8x16xf32, #tpu.memory_space<vmem>>, vector<1x8x8x16xf32>,
    %cst_13 = arith.constant dense<0.000000e+00> : vector<16xf32>
    %25 = vector.multi_reduction <add>, %20, %cst_13 [0] : vector<64x16xf32> to vector<16xf32>
    %26 = vector.shape_cast %25 : vector<16xf32> to vector<1x16xf32>
    %27 = arith.mulf %20, %20 : vector<64x16xf32>
    %cst_14 = arith.constant dense<0.000000e+00> : vector<16xf32>
    %28 = vector.multi_reduction <add>, %27, %cst_14 [0] : vector<64x16xf32> to vector<16xf32>
    %29 = vector.shape_cast %28 : vector<16xf32> to vector<1x16xf32>
    %30 = tpu.concatenate %26, %29 in 0 : vector<1x16xf32>, vector<1x16xf32> -> vector<2x16xf32>
    %c0_15 = arith.constant 0 : index
    %c0_16 = arith.constant 0 : index
    %c0_17 = arith.constant 0 : index
    %31 = vector.load %arg5[%c0_15, %c0_16, %c0_17] : memref<1x2x16xf32, #tpu.memory_space<vmem>>, vector<1x2x16xf32>
    %32 = vector.shape_cast %31 : vector<1x2x16xf32> to vector<2x16xf32>
    %33 = vector.shape_cast %30 : vector<2x16xf32> to vector<1x2x16xf32>
    tpu.vector_store %arg5[%c0_15, %c0_16, %c0_17], %33 {strides = array<i32>} : memref<1x2x16xf32, #tpu.memory_space<vmem>>, vector<1x2x16xf32>,
    return
  }
  func.func @transform_0(%arg0: i32) -> (i32, i32, i32, i32) {
    %c0_i32 = arith.constant 0 : i32
    %c0_i32_0 = arith.constant 0 : i32
    %c0_i32_1 = arith.constant 0 : i32
    %c0_i32_2 = arith.constant 0 : i32
    return %arg0, %c0_i32, %c0_i32_0, %c0_i32_1 : i32, i32, i32, i32
  }
  func.func @transform_1(%arg0: i32) -> (i32, i32) {
    %c0_i32 = arith.constant 0 : i32
    %c0_i32_0 = arith.constant 0 : i32
    %c0_i32_1 = arith.constant 0 : i32
    return %c0_i32, %c0_i32_0 : i32, i32
  }
  func.func @transform_2(%arg0: i32) -> (i32, i32) {
    %c0_i32 = arith.constant 0 : i32
    %c0_i32_0 = arith.constant 0 : i32
    %c0_i32_1 = arith.constant 0 : i32
    return %c0_i32, %c0_i32_0 : i32, i32
  }
  func.func @transform_3(%arg0: i32) -> (i32, i32, i32, i32) {
    %c0_i32 = arith.constant 0 : i32
    %c0_i32_0 = arith.constant 0 : i32
    %c0_i32_1 = arith.constant 0 : i32
    %c0_i32_2 = arith.constant 0 : i32
    return %arg0, %c0_i32, %c0_i32_0, %c0_i32_1 : i32, i32, i32, i32
  }
  func.func @transform_4(%arg0: i32) -> (i32, i32, i32) {
    %c0_i32 = arith.constant 0 : i32
    %c0_i32_0 = arith.constant 0 : i32
    %c0_i32_1 = arith.constant 0 : i32
    return %arg0, %c0_i32, %c0_i32_0 : i32, i32, i32
  }
}

module attributes {stable_mosaic.version = 11 : i64} {
  func.func @_bn_relu_pool_kernel(%arg0: i32, %arg1: memref<1x8x8x16xf32, #tpu.memory_space<vmem>>, %arg2: memref<1x16xf32, #tpu.memory_space<vmem>>, %arg3: memref<1x16xf32, #tpu.memory_space<vmem>>, %arg4: memref<1x8x8x16xf32, #tpu.memory_space<vmem>>, %arg5: memref<1x4x4x16xf32, #tpu.memory_space<vmem>>) attributes {dimension_semantics = [#tpu.dimension_semantics<parallel>], iteration_bounds = array<i64: 2>, scalar_prefetch = 0 : i64, scratch_operands = 0 : i64, tpu.core_type = #tpu.core_type<tc>, window_params = [{transform_indices = @transform_0, window_bounds = array<i64: 1, 8, 8, 16>}, {pipeline_mode = #tpu.pipeline_mode<synchronous>, transform_indices = @transform_1, window_bounds = array<i64: 1, 16>}, {pipeline_mode = #tpu.pipeline_mode<synchronous>, transform_indices = @transform_2, window_bounds = array<i64: 1, 16>}, {transform_indices = @transform_3, window_bounds = array<i64: 1, 8, 8, 16>}, {transform_indices = @transform_4, window_bounds = array<i64: 1, 4, 4, 16>}]} {
    %c0 = arith.constant 0 : index
    %c0_0 = arith.constant 0 : index
    %c0_1 = arith.constant 0 : index
    %c0_2 = arith.constant 0 : index
    %0 = vector.load %arg1[%c0, %c0_0, %c0_1, %c0_2] : memref<1x8x8x16xf32, #tpu.memory_space<vmem>>, vector<1x8x8x16xf32>
    %1 = vector.shape_cast %0 : vector<1x8x8x16xf32> to vector<8x8x16xf32>
    %c0_3 = arith.constant 0 : index
    %c0_4 = arith.constant 0 : index
    %2 = vector.load %arg2[%c0_3, %c0_4] : memref<1x16xf32, #tpu.memory_space<vmem>>, vector<1x16xf32>
    %3 = vector.shape_cast %2 : vector<1x16xf32> to vector<1x1x16xf32>
    %4 = vector.broadcast %3 : vector<1x1x16xf32> to vector<8x8x16xf32>
    %5 = arith.mulf %1, %4 : vector<8x8x16xf32>
    %c0_5 = arith.constant 0 : index
    %c0_6 = arith.constant 0 : index
    %6 = vector.load %arg3[%c0_5, %c0_6] : memref<1x16xf32, #tpu.memory_space<vmem>>, vector<1x16xf32>
    %7 = vector.shape_cast %6 : vector<1x16xf32> to vector<1x1x16xf32>
    %8 = vector.broadcast %7 : vector<1x1x16xf32> to vector<8x8x16xf32>
    %9 = arith.addf %5, %8 : vector<8x8x16xf32>
    %cst = arith.constant 0.000000e+00 : f32
    %10 = vector.broadcast %cst : f32 to vector<8x8x16xf32>
    %11 = arith.maximumf %9, %10 : vector<8x8x16xf32>
    %c0_7 = arith.constant 0 : index
    %c0_8 = arith.constant 0 : index
    %c0_9 = arith.constant 0 : index
    %c0_10 = arith.constant 0 : index
    %12 = vector.load %arg4[%c0_7, %c0_8, %c0_9, %c0_10] : memref<1x8x8x16xf32, #tpu.memory_space<vmem>>, vector<1x8x8x16xf32>
    %13 = vector.shape_cast %12 : vector<1x8x8x16xf32> to vector<8x8x16xf32>
    %14 = vector.shape_cast %11 : vector<8x8x16xf32> to vector<1x8x8x16xf32>
    tpu.vector_store %arg4[%c0_7, %c0_8, %c0_9, %c0_10], %14 {strides = array<i32>} : memref<1x8x8x16xf32, #tpu.memory_space<vmem>>, vector<1x8x8x16xf32>,
    %15 = vector.shape_cast %11 : vector<8x8x16xf32> to vector<4x2x8x16xf32>
    %cst_11 = arith.constant dense<0xFF800000> : vector<4x8x16xf32>
    %16 = vector.multi_reduction <maximumf>, %15, %cst_11 [1] : vector<4x2x8x16xf32> to vector<4x8x16xf32>
    %17 = vector.shape_cast %16 : vector<4x8x16xf32> to vector<4x4x2x16xf32>
    %cst_12 = arith.constant dense<0xFF800000> : vector<4x4x16xf32>
    %18 = vector.multi_reduction <maximumf>, %17, %cst_12 [2] : vector<4x4x2x16xf32> to vector<4x4x16xf32>
    %c0_13 = arith.constant 0 : index
    %c0_14 = arith.constant 0 : index
    %c0_15 = arith.constant 0 : index
    %c0_16 = arith.constant 0 : index
    %19 = vector.load %arg5[%c0_13, %c0_14, %c0_15, %c0_16] : memref<1x4x4x16xf32, #tpu.memory_space<vmem>>, vector<1x4x4x16xf32>
    %20 = vector.shape_cast %19 : vector<1x4x4x16xf32> to vector<4x4x16xf32>
    %21 = vector.shape_cast %18 : vector<4x4x16xf32> to vector<1x4x4x16xf32>
    tpu.vector_store %arg5[%c0_13, %c0_14, %c0_15, %c0_16], %21 {strides = array<i32>} : memref<1x4x4x16xf32, #tpu.memory_space<vmem>>, vector<1x4x4x16xf32>,
    return
  }
  func.func @transform_0(%arg0: i32) -> (i32, i32, i32, i32) {
    %c0_i32 = arith.constant 0 : i32
    %c0_i32_0 = arith.constant 0 : i32
    %c0_i32_1 = arith.constant 0 : i32
    %c0_i32_2 = arith.constant 0 : i32
    return %arg0, %c0_i32, %c0_i32_0, %c0_i32_1 : i32, i32, i32, i32
  }
  func.func @transform_1(%arg0: i32) -> (i32, i32) {
    %c0_i32 = arith.constant 0 : i32
    %c0_i32_0 = arith.constant 0 : i32
    %c0_i32_1 = arith.constant 0 : i32
    return %c0_i32, %c0_i32_0 : i32, i32
  }
  func.func @transform_2(%arg0: i32) -> (i32, i32) {
    %c0_i32 = arith.constant 0 : i32
    %c0_i32_0 = arith.constant 0 : i32
    %c0_i32_1 = arith.constant 0 : i32
    return %c0_i32, %c0_i32_0 : i32, i32
  }
  func.func @transform_3(%arg0: i32) -> (i32, i32, i32, i32) {
    %c0_i32 = arith.constant 0 : i32
    %c0_i32_0 = arith.constant 0 : i32
    %c0_i32_1 = arith.constant 0 : i32
    %c0_i32_2 = arith.constant 0 : i32
    return %arg0, %c0_i32, %c0_i32_0, %c0_i32_1 : i32, i32, i32, i32
  }
  func.func @transform_4(%arg0: i32) -> (i32, i32, i32, i32) {
    %c0_i32 = arith.constant 0 : i32
    %c0_i32_0 = arith.constant 0 : i32
    %c0_i32_1 = arith.constant 0 : i32
    %c0_i32_2 = arith.constant 0 : i32
    return %arg0, %c0_i32, %c0_i32_0, %c0_i32_1 : i32, i32, i32, i32
  }
}

module attributes {stable_mosaic.version = 11 : i64} {
  func.func @_conv3x3_kernel(%arg0: i32, %arg1: memref<1x8x8x16xf32, #tpu.memory_space<vmem>>, %arg2: memref<144x16xbf16, #tpu.memory_space<vmem>>, %arg3: memref<1x16xf32, #tpu.memory_space<vmem>>, %arg4: memref<1x16xf32, #tpu.memory_space<vmem>>, %arg5: memref<1x16xf32, #tpu.memory_space<vmem>>, %arg6: memref<1x8x8x16xf32, #tpu.memory_space<vmem>>, %arg7: memref<1x2x16xf32, #tpu.memory_space<vmem>>) attributes {dimension_semantics = [#tpu.dimension_semantics<parallel>], iteration_bounds = array<i64: 2>, scalar_prefetch = 0 : i64, scratch_operands = 0 : i64, tpu.core_type = #tpu.core_type<tc>, window_params = [{transform_indices = @transform_0, window_bounds = array<i64: 1, 8, 8, 16>}, {pipeline_mode = #tpu.pipeline_mode<synchronous>, transform_indices = @transform_1, window_bounds = array<i64: 144, 16>}, {pipeline_mode = #tpu.pipeline_mode<synchronous>, transform_indices = @transform_2, window_bounds = array<i64: 1, 16>}, {pipeline_mode = #tpu.pipeline_mode<synchronous>, transform_indices = @transform_3, window_bounds = array<i64: 1, 16>}, {pipeline_mode = #tpu.pipeline_mode<synchronous>, transform_indices = @transform_4, window_bounds = array<i64: 1, 16>}, {transform_indices = @transform_5, window_bounds = array<i64: 1, 8, 8, 16>}, {transform_indices = @transform_6, window_bounds = array<i64: 1, 2, 16>}]} {
    %c0 = arith.constant 0 : index
    %c0_0 = arith.constant 0 : index
    %c0_1 = arith.constant 0 : index
    %c0_2 = arith.constant 0 : index
    %0 = vector.load %arg1[%c0, %c0_0, %c0_1, %c0_2] : memref<1x8x8x16xf32, #tpu.memory_space<vmem>>, vector<1x8x8x16xf32>
    %1 = vector.shape_cast %0 : vector<1x8x8x16xf32> to vector<8x8x16xf32>
    %c0_3 = arith.constant 0 : index
    %c0_4 = arith.constant 0 : index
    %2 = vector.load %arg4[%c0_3, %c0_4] : memref<1x16xf32, #tpu.memory_space<vmem>>, vector<1x16xf32>
    %3 = vector.shape_cast %2 : vector<1x16xf32> to vector<1x1x16xf32>
    %4 = vector.broadcast %3 : vector<1x1x16xf32> to vector<8x8x16xf32>
    %5 = arith.mulf %1, %4 : vector<8x8x16xf32>
    %c0_5 = arith.constant 0 : index
    %c0_6 = arith.constant 0 : index
    %6 = vector.load %arg5[%c0_5, %c0_6] : memref<1x16xf32, #tpu.memory_space<vmem>>, vector<1x16xf32>
    %7 = vector.shape_cast %6 : vector<1x16xf32> to vector<1x1x16xf32>
    %8 = vector.broadcast %7 : vector<1x1x16xf32> to vector<8x8x16xf32>
    %9 = arith.addf %5, %8 : vector<8x8x16xf32>
    %cst = arith.constant 0.000000e+00 : f32
    %10 = vector.broadcast %cst : f32 to vector<8x8x16xf32>
    %11 = arith.maximumf %9, %10 : vector<8x8x16xf32>
    %12 = arith.truncf %11 : vector<8x8x16xf32> to vector<8x8x16xbf16>
    %cst_7 = arith.constant 0.000000e+00 : bf16
    %13 = vector.broadcast %cst_7 : bf16 to vector<8x1x16xbf16>
    %14 = vector.extract_strided_slice %12 {offsets = [0, 0, 0], sizes = [8, 7, 16], strides = [1, 1, 1]} : vector<8x8x16xbf16> to vector<8x7x16xbf16>
    %15 = tpu.concatenate %13, %14 in 1 : vector<8x1x16xbf16>, vector<8x7x16xbf16> -> vector<8x8x16xbf16>
    %16 = vector.extract_strided_slice %12 {offsets = [0, 1, 0], sizes = [8, 7, 16], strides = [1, 1, 1]} : vector<8x8x16xbf16> to vector<8x7x16xbf16>
    %17 = tpu.concatenate %16, %13 in 1 : vector<8x7x16xbf16>, vector<8x1x16xbf16> -> vector<8x8x16xbf16>
    %18 = tpu.concatenate %15, %12, %17 in 2 : vector<8x8x16xbf16>, vector<8x8x16xbf16>, vector<8x8x16xbf16> -> vector<8x8x48xbf16>
    %cst_8 = arith.constant 0.000000e+00 : bf16
    %19 = vector.broadcast %cst_8 : bf16 to vector<1x8x48xbf16>
    %20 = vector.extract_strided_slice %18 {offsets = [0, 0, 0], sizes = [7, 8, 48], strides = [1, 1, 1]} : vector<8x8x48xbf16> to vector<7x8x48xbf16>
    %21 = tpu.concatenate %19, %20 in 0 : vector<1x8x48xbf16>, vector<7x8x48xbf16> -> vector<8x8x48xbf16>
    %22 = vector.extract_strided_slice %18 {offsets = [1, 0, 0], sizes = [7, 8, 48], strides = [1, 1, 1]} : vector<8x8x48xbf16> to vector<7x8x48xbf16>
    %23 = tpu.concatenate %22, %19 in 0 : vector<7x8x48xbf16>, vector<1x8x48xbf16> -> vector<8x8x48xbf16>
    %24 = tpu.concatenate %21, %18, %23 in 2 : vector<8x8x48xbf16>, vector<8x8x48xbf16>, vector<8x8x48xbf16> -> vector<8x8x144xbf16>
    %25 = vector.shape_cast %24 : vector<8x8x144xbf16> to vector<64x144xbf16>
    %c0_9 = arith.constant 0 : index
    %c0_10 = arith.constant 0 : index
    %26 = vector.load %arg2[%c0_9, %c0_10] : memref<144x16xbf16, #tpu.memory_space<vmem>>, vector<144x16xbf16>
    %cst_11 = arith.constant dense<0.000000e+00> : vector<64x16xf32>
    %27 = tpu.matmul %25, %26, %cst_11 {dimension_numbers = #tpu.dot_dimension_numbers<[1], [0], [0], [1], [0, 0, 1, 1], [], []>} : vector<64x144xbf16>, vector<144x16xbf16>, vector<64x16xf32> -> vector<64x16xf32>
    %c0_12 = arith.constant 0 : index
    %c0_13 = arith.constant 0 : index
    %28 = vector.load %arg3[%c0_12, %c0_13] : memref<1x16xf32, #tpu.memory_space<vmem>>, vector<1x16xf32>
    %29 = vector.broadcast %28 : vector<1x16xf32> to vector<64x16xf32>
    %30 = arith.addf %27, %29 : vector<64x16xf32>
    %31 = vector.shape_cast %30 : vector<64x16xf32> to vector<8x8x16xf32>
    %c0_14 = arith.constant 0 : index
    %c0_15 = arith.constant 0 : index
    %c0_16 = arith.constant 0 : index
    %c0_17 = arith.constant 0 : index
    %32 = vector.load %arg6[%c0_14, %c0_15, %c0_16, %c0_17] : memref<1x8x8x16xf32, #tpu.memory_space<vmem>>, vector<1x8x8x16xf32>
    %33 = vector.shape_cast %32 : vector<1x8x8x16xf32> to vector<8x8x16xf32>
    %34 = vector.shape_cast %31 : vector<8x8x16xf32> to vector<1x8x8x16xf32>
    tpu.vector_store %arg6[%c0_14, %c0_15, %c0_16, %c0_17], %34 {strides = array<i32>} : memref<1x8x8x16xf32, #tpu.memory_space<vmem>>, vector<1x8x8x16xf32>,
    %cst_18 = arith.constant dense<0.000000e+00> : vector<16xf32>
    %35 = vector.multi_reduction <add>, %30, %cst_18 [0] : vector<64x16xf32> to vector<16xf32>
    %36 = vector.shape_cast %35 : vector<16xf32> to vector<1x16xf32>
    %37 = arith.mulf %30, %30 : vector<64x16xf32>
    %cst_19 = arith.constant dense<0.000000e+00> : vector<16xf32>
    %38 = vector.multi_reduction <add>, %37, %cst_19 [0] : vector<64x16xf32> to vector<16xf32>
    %39 = vector.shape_cast %38 : vector<16xf32> to vector<1x16xf32>
    %40 = tpu.concatenate %36, %39 in 0 : vector<1x16xf32>, vector<1x16xf32> -> vector<2x16xf32>
    %c0_20 = arith.constant 0 : index
    %c0_21 = arith.constant 0 : index
    %c0_22 = arith.constant 0 : index
    %41 = vector.load %arg7[%c0_20, %c0_21, %c0_22] : memref<1x2x16xf32, #tpu.memory_space<vmem>>, vector<1x2x16xf32>
    %42 = vector.shape_cast %41 : vector<1x2x16xf32> to vector<2x16xf32>
    %43 = vector.shape_cast %40 : vector<2x16xf32> to vector<1x2x16xf32>
    tpu.vector_store %arg7[%c0_20, %c0_21, %c0_22], %43 {strides = array<i32>} : memref<1x2x16xf32, #tpu.memory_space<vmem>>, vector<1x2x16xf32>,
    return
  }
  func.func @transform_0(%arg0: i32) -> (i32, i32, i32, i32) {
    %c0_i32 = arith.constant 0 : i32
    %c0_i32_0 = arith.constant 0 : i32
    %c0_i32_1 = arith.constant 0 : i32
    %c0_i32_2 = arith.constant 0 : i32
    return %arg0, %c0_i32, %c0_i32_0, %c0_i32_1 : i32, i32, i32, i32
  }
  func.func @transform_1(%arg0: i32) -> (i32, i32) {
    %c0_i32 = arith.constant 0 : i32
    %c0_i32_0 = arith.constant 0 : i32
    %c0_i32_1 = arith.constant 0 : i32
    return %c0_i32, %c0_i32_0 : i32, i32
  }
  func.func @transform_2(%arg0: i32) -> (i32, i32) {
    %c0_i32 = arith.constant 0 : i32
    %c0_i32_0 = arith.constant 0 : i32
    %c0_i32_1 = arith.constant 0 : i32
    return %c0_i32, %c0_i32_0 : i32, i32
  }
  func.func @transform_3(%arg0: i32) -> (i32, i32) {
    %c0_i32 = arith.constant 0 : i32
    %c0_i32_0 = arith.constant 0 : i32
    %c0_i32_1 = arith.constant 0 : i32
    return %c0_i32, %c0_i32_0 : i32, i32
  }
  func.func @transform_4(%arg0: i32) -> (i32, i32) {
    %c0_i32 = arith.constant 0 : i32
    %c0_i32_0 = arith.constant 0 : i32
    %c0_i32_1 = arith.constant 0 : i32
    return %c0_i32, %c0_i32_0 : i32, i32
  }
  func.func @transform_5(%arg0: i32) -> (i32, i32, i32, i32) {
    %c0_i32 = arith.constant 0 : i32
    %c0_i32_0 = arith.constant 0 : i32
    %c0_i32_1 = arith.constant 0 : i32
    %c0_i32_2 = arith.constant 0 : i32
    return %arg0, %c0_i32, %c0_i32_0, %c0_i32_1 : i32, i32, i32, i32
  }
  func.func @transform_6(%arg0: i32) -> (i32, i32, i32) {
    %c0_i32 = arith.constant 0 : i32
    %c0_i32_0 = arith.constant 0 : i32
    %c0_i32_1 = arith.constant 0 : i32
    return %arg0, %c0_i32, %c0_i32_0 : i32, i32, i32
  }
}

</mosaic_0001>

<llo_original>
// kernel: contractive_block.6
$region0: #{contractive_block.6}
  #allocation0 [shape = 'u32[]', space=smem, size = 0x4, offset = 0x4, fixed_abs, tag = 'smem constant byte address 0x4 - core index']
  #allocation1 [shape = 'u32[72,128]{1,0:T(1,128)}', space=vmem, size = 0x9000, scoped, tag = 'internal scratch']
  %s0 = inlined_call_operand.vmem [shape: f32[2,16,16,4], index: 0, kind: input, shape index: {}]
  %s1 = inlined_call_operand.vmem [shape: bf16[36,8], index: 1, kind: input, shape index: {}]
  %s2 = inlined_call_operand.vmem [shape: f32[1,8], index: 2, kind: input, shape index: {}]
  %s3 = inlined_call_operand.vmem [shape: f32[2,16,16,8], index: 3, kind: output, shape index: {0}]
  %s4 = inlined_call_operand.vmem [shape: f32[2,2,8], index: 4, kind: output, shape index: {1}]
  %5 = xla_tuple %s3, %s4
  %s6 = sld [smem:[#allocation0]]
  $region53: #{contractive_block.6} parent=0
    _
  %s8 = ssub.s32 1, %s6
  %s9 = scalar_select 0, %s8, %s6
  loop: start=0, step=1, limit=4
  $region2: #{contractive_block.6} parent=0 // loop_pre_header
    _
  $region3: #{contractive_block.6} parent=0 // loop_header
    %s11 = sphi 0, %s15
    %p12 = scmp.ge.s32.totalorder %s11, 4
    %s21 = sphi 0, %s23
    %s24 = sphi 0, %s21
    %s25 = sphi 0, %s24
    %s41 = sphi 0, %s25
    %s45 = sphi 0, %s45
    %s47 = sphi 0, %s45
    %s48 = sphi 0, %s47
    %s62 = sphi 0, %s48
    %s66 = sphi 0, %s66
    %s68 = sphi 0, %s66
    %s69 = sphi 0, %s68
    %s83 = sphi 0, %s69
    %s89 = sphi 0, %s91
    %s92 = sphi 0, %s89
    %s93 = sphi 0, %s92
    %s109 = sphi 0, %s93
    %s115 = sphi 0, %s117
    %s118 = sphi 0, %s115
    %s119 = sphi 0, %s118
    %s135 = sphi 0, %s119
  $region4: #{contractive_block.6} parent=0 // loop_header_branch
    %14 = sbr.rel (%p12) target = $region8
  $region5: #{contractive_block.6} parent=0 // loop_body
    %s16 = ssub.s32 %s11, 1
    %s17 = ssub.s32 %s11, 2
    %s18 = sadd.s32 %s11, 1
    %s19 = ssub.s32 %s11, %s18
    %p20 = scmp.eq.s32.totalorder %s19, 0
    %s22 = sadd.s32 %s21, 1
    %s23 = scalar_select %p20, %s21, %s22
    %p26 = pneg %p20
    %p27 = scmp.eq.s32.totalorder %s11, 1
    %p28 = por %p26, %p27
    %p29 = scmp.ne.s32.totalorder %s21, %s24
    %p30 = scmp.eq.s32.totalorder %s11, 0
    %p31 = por %p29, %p30
    %p32 = scmp.ne.s32.totalorder %s21, %s24
    %p33 = scmp.eq.s32.totalorder %s16, 1
    %p34 = por %p32, %p33
    %p35 = scmp.ne.s32.totalorder %s24, %s25
    %p36 = scmp.eq.s32.totalorder %s16, 0
    %p37 = por %p35, %p36
    %p38 = scmp.ne.s32.totalorder %s24, %s25
    %p39 = scmp.eq.s32.totalorder %s17, 1
    %p40 = por %p38, %p39
    %p42 = scmp.ne.s32.totalorder %s25, %s41
    %p43 = scmp.eq.s32.totalorder %s17, 0
    %p44 = por %p42, %p43
    %s46 = sadd.s32 %s45, 1
    %p49 = scmp.eq.s32.totalorder %s11, 1
    %p50 = scmp.ne.s32.totalorder %s45, %s47
    %p51 = scmp.eq.s32.totalorder %s11, 0
    %p52 = por %p50, %p51
    %p53 = scmp.ne.s32.totalorder %s45, %s47
    %p54 = scmp.eq.s32.totalorder %s16, 1
    %p55 = por %p53, %p54
    %p56 = scmp.ne.s32.totalorder %s47, %s48
    %p57 = scmp.eq.s32.totalorder %s16, 0
    %p58 = por %p56, %p57
    %p59 = scmp.ne.s32.totalorder %s47, %s48
    %p60 = scmp.eq.s32.totalorder %s17, 1
    %p61 = por %p59, %p60
    %p63 = scmp.ne.s32.totalorder %s48, %s62
    %p64 = scmp.eq.s32.totalorder %s17, 0
    %p65 = por %p63, %p64
    %s67 = sadd.s32 %s66, 1
    %p70 = scmp.eq.s32.totalorder %s11, 1
    %p71 = scmp.ne.s32.totalorder %s66, %s68
    %p72 = scmp.eq.s32.totalorder %s11, 0
    %p73 = por %p71, %p72
    %p74 = scmp.ne.s32.totalorder %s66, %s68
    %p75 = scmp.eq.s32.totalorder %s16, 1
    %p76 = por %p74, %p75
    %p77 = scmp.ne.s32.totalorder %s68, %s69
    %p78 = scmp.eq.s32.totalorder %s16, 0
    %p79 = por %p77, %p78
    %p80 = scmp.ne.s32.totalorder %s68, %s69
    %p81 = scmp.eq.s32.totalorder %s17, 1
    %p82 = por %p80, %p81
    %p84 = scmp.ne.s32.totalorder %s69, %s83
    %p85 = scmp.eq.s32.totalorder %s17, 0
    %p86 = por %p84, %p85
    %s87 = ssub.s32 %s11, %s18
    %p88 = scmp.eq.s32.totalorder %s87, 0
    %s90 = sadd.s32 %s89, 1
    %s91 = scalar_select %p88, %s89, %s90
    %p94 = pneg %p88
    %p95 = scmp.eq.s32.totalorder %s11, 1
    %p96 = por %p94, %p95
    %p97 = scmp.ne.s32.totalorder %s89, %s92
    %p98 = scmp.eq.s32.totalorder %s11, 0
    %p99 = por %p97, %p98
    %p100 = scmp.ne.s32.totalorder %s89, %s92
    %p101 = scmp.eq.s32.totalorder %s16, 1
    %p102 = por %p100, %p101
    %p103 = scmp.ne.s32.totalorder %s92, %s93
    %p104 = scmp.eq.s32.totalorder %s16, 0
    %p105 = por %p103, %p104
    %p106 = scmp.ne.s32.totalorder %s92, %s93
    %p107 = scmp.eq.s32.totalorder %s17, 1
    %p108 = por %p106, %p107
    %p110 = scmp.ne.s32.totalorder %s93, %s109
    %p111 = scmp.eq.s32.totalorder %s17, 0
    %p112 = por %p110, %p111
    %s113 = ssub.s32 %s11, %s18
    %p114 = scmp.eq.s32.totalorder %s113, 0
    %s116 = sadd.s32 %s115, 1
    %s117 = scalar_select %p114, %s115, %s116
    %p120 = pneg %p114
    %p121 = scmp.eq.s32.totalorder %s11, 1
    %p122 = por %p120, %p121
    %p123 = scmp.ne.s32.totalorder %s115, %s118
    %p124 = scmp.eq.s32.totalorder %s11, 0
    %p125 = por %p123, %p124
    %p126 = scmp.ne.s32.totalorder %s115, %s118
    %p127 = scmp.eq.s32.totalorder %s16, 1
    %p128 = por %p126, %p127
    %p129 = scmp.ne.s32.totalorder %s118, %s119
    %p130 = scmp.eq.s32.totalorder %s16, 0
    %p131 = por %p129, %p130
    %p132 = scmp.ne.s32.totalorder %s118, %s119
    %p133 = scmp.eq.s32.totalorder %s17, 1
    %p134 = por %p132, %p133
    %p136 = scmp.ne.s32.totalorder %s119, %s135
    %p137 = scmp.eq.s32.totalorder %s17, 0
    %p138 = por %p136, %p137
    %p139 = scmp.le.s32.totalorder 1, %s11
    %p140 = scmp.lt.s32.totalorder %s11, 3
    %p141 = pnand %p139, %p140
    %p142 = pneg %p141
    // Predicated region
    $region9: #{contractive_block.6} parent=5 // pred_check
      _
    $region10: #{contractive_block.6} parent=5 // pred_check_branch
      %144 = sbr.rel (%p141) target = $region12
    $region11: #{contractive_block.6} parent=5 // pred_region
      %s145 = ssub.s32 %s11, 1
      // Predicated region
      $region13: #{contractive_block.6} parent=11 // pred_check
        %p146 = pneg %p58
      $region14: #{contractive_block.6} parent=11 // pred_check_branch
        %148 = sbr.rel (%p146) target = $region16
      $region15: #{contractive_block.6} parent=11 // pred_region
        _
      $region16: #{contractive_block.6} parent=11 // pred_fallthru
        _
      // Predicated region
      $region17: #{contractive_block.6} parent=11 // pred_check
        %p149 = pneg %p79
      $region18: #{contractive_block.6} parent=11 // pred_check_branch
        %151 = sbr.rel (%p149) target = $region20
      $region19: #{contractive_block.6} parent=11 // pred_region
        _
      $region20: #{contractive_block.6} parent=11 // pred_fallthru
        _
    $region12: #{contractive_block.6} parent=5 // pred_fallthru
      _
    %p152 = scmp.lt.s32.totalorder %s11, 2
    // Predicated region
    $region21: #{contractive_block.6} parent=5 // pred_check
      %p153 = pneg %p152
    $region22: #{contractive_block.6} parent=5 // pred_check_branch
      %155 = sbr.rel (%p153) target = $region24
    $region23: #{contractive_block.6} parent=5 // pred_region
      // Predicated region
      $region25: #{contractive_block.6} parent=23 // pred_check
        %p156 = pneg %p31
      $region26: #{contractive_block.6} parent=23 // pred_check_branch
        %158 = sbr.rel (%p156) target = $region28
      $region27: #{contractive_block.6} parent=23 // pred_region
        %p159 = scmp.lt.s32.totalorder %s11, 1
        %s160 = scalar_select %p159, %s11, 1
        %s161 = smul.addr %s160, 32
        %s162 = smul.addr %s161, 8
        %s163 = scalar_lea.vmem %s0, %s162
      $region28: #{contractive_block.6} parent=23 // pred_fallthru
        _
    $region24: #{contractive_block.6} parent=5 // pred_fallthru
      _
    %p164 = scmp.le.s32.totalorder 1, %s11
    %p165 = scmp.lt.s32.totalorder %s11, 3
    %p166 = pnand %p164, %p165
    %p167 = pneg %p166
    // Predicated region
    $region29: #{contractive_block.6} parent=5 // pred_check
      _
    $region30: #{contractive_block.6} parent=5 // pred_check_branch
      %169 = sbr.rel (%p166) target = $region32
    $region31: #{contractive_block.6} parent=5 // pred_region
      %s170 = ssub.s32 %s11, 1
      %p171 = scmp.lt.s32.totalorder %s16, 1
      %s172 = scalar_select %p171, %s16, 1
      %s173 = smul.addr %s172, 32
      %s174 = smul.addr %s173, 8
      %s175 = scalar_lea.vmem %s0, %s174
      %p176 = pneg %p37
      %p177 = pneg %p34
      %p178 = pneg %p58
      %p179 = pneg %p55
      %p180 = pneg %p79
      %p181 = pneg %p76
      %p182 = pneg %p105
      %p183 = pneg %p102
      %p184 = scmp.lt.s32.totalorder %s16, 1
      %s185 = scalar_select %p184, %s16, 1
      %s186 = smul.addr %s185, 32
      %s187 = smul.addr %s186, 8
      %s188 = scalar_lea.vmem %s3, %s187
      %p189 = pneg %p131
      %p190 = pneg %p128
      %p191 = scmp.lt.s32.totalorder %s16, 1
      %s192 = scalar_select %p191, %s16, 1
      %s193 = smul.addr %s192, 2
      %s194 = scalar_lea.vmem %s4, %s193
      %p195 = scmp.lt.s32.totalorder %s16, 1
      %s196 = scalar_select %p195, %s16, 1
      %s197 = smul.addr %s196, 32
      %s198 = smul.addr %s197, 8
      %s199 = scalar_lea.vmem %s0, %s198
      %p200 = scmp.lt.s32.totalorder %s16, 1
      %s201 = scalar_select %p200, %s16, 1
      %s202 = smul.addr %s201, 32
      %s203 = smul.addr %s202, 8
      %s204 = scalar_lea.vmem %s3, %s203
      %p205 = scmp.lt.s32.totalorder %s16, 1
      %s206 = scalar_select %p205, %s16, 1
      %s207 = smul.addr %s206, 2
      %s208 = scalar_lea.vmem %s4, %s207
      %v210 = vld [vmem:[%s199] sm:$0xff]
      %v211 = vld [vmem:[%s199 + $0x8] sm:$0xff]
      %v212 = vld [vmem:[%s199 + $0x10] sm:$0xff]
      %v213 = vld [vmem:[%s199 + $0x18] sm:$0xff]
      %v214 = vld [vmem:[%s199 + $0x20] sm:$0xff]
      %v215 = vld [vmem:[%s199 + $0x28] sm:$0xff]
      %v216 = vld [vmem:[%s199 + $0x30] sm:$0xff]
      %v217 = vld [vmem:[%s199 + $0x38] sm:$0xff]
      %v218 = vld [vmem:[%s199 + $0x40] sm:$0xff]
      %v219 = vld [vmem:[%s199 + $0x48] sm:$0xff]
      %v220 = vld [vmem:[%s199 + $0x50] sm:$0xff]
      %v221 = vld [vmem:[%s199 + $0x58] sm:$0xff]
      %v222 = vld [vmem:[%s199 + $0x60] sm:$0xff]
      %v223 = vld [vmem:[%s199 + $0x68] sm:$0xff]
      %v224 = vld [vmem:[%s199 + $0x70] sm:$0xff]
      %v225 = vld [vmem:[%s199 + $0x78] sm:$0xff]
      %v226 = vld [vmem:[%s199 + $0x80] sm:$0xff]
      %v227 = vld [vmem:[%s199 + $0x88] sm:$0xff]
      %v228 = vld [vmem:[%s199 + $0x90] sm:$0xff]
      %v229 = vld [vmem:[%s199 + $0x98] sm:$0xff]
      %v230 = vld [vmem:[%s199 + $0xa0] sm:$0xff]
      %v231 = vld [vmem:[%s199 + $0xa8] sm:$0xff]
      %v232 = vld [vmem:[%s199 + $0xb0] sm:$0xff]
      %v233 = vld [vmem:[%s199 + $0xb8] sm:$0xff]
      %v234 = vld [vmem:[%s199 + $0xc0] sm:$0xff]
      %v235 = vld [vmem:[%s199 + $0xc8] sm:$0xff]
      %v236 = vld [vmem:[%s199 + $0xd0] sm:$0xff]
      %v237 = vld [vmem:[%s199 + $0xd8] sm:$0xff]
      %v238 = vld [vmem:[%s199 + $0xe0] sm:$0xff]
      %v239 = vld [vmem:[%s199 + $0xe8] sm:$0xff]
      %v240 = vld [vmem:[%s199 + $0xf0] sm:$0xff]
      %v241 = vld [vmem:[%s199 + $0xf8] sm:$0xff]
      %v242 = vpack.c.bf16 %v210, %v210
      %v243 = vpack.c.bf16 %v211, %v211
      %v244 = vpack.c.bf16 %v212, %v212
      %v245 = vpack.c.bf16 %v213, %v213
      %v246 = vpack.c.bf16 %v214, %v214
      %v247 = vpack.c.bf16 %v215, %v215
      %v248 = vpack.c.bf16 %v216, %v216
      %v249 = vpack.c.bf16 %v217, %v217
      %v250 = vpack.c.bf16 %v218, %v218
      %v251 = vpack.c.bf16 %v219, %v219
      %v252 = vpack.c.bf16 %v220, %v220
      %v253 = vpack.c.bf16 %v221, %v221
      %v254 = vpack.c.bf16 %v222, %v222
      %v255 = vpack.c.bf16 %v223, %v223
      %v256 = vpack.c.bf16 %v224, %v224
      %v257 = vpack.c.bf16 %v225, %v225
      %v258 = vpack.c.bf16 %v226, %v226
      %v259 = vpack.c.bf16 %v227, %v227
      %v260 = vpack.c.bf16 %v228, %v228
      %v261 = vpack.c.bf16 %v229, %v229
      %v262 = vpack.c.bf16 %v230, %v230
      %v263 = vpack.c.bf16 %v231, %v231
      %v264 = vpack.c.bf16 %v232, %v232
      %v265 = vpack.c.bf16 %v233, %v233
      %v266 = vpack.c.bf16 %v234, %v234
      %v267 = vpack.c.bf16 %v235, %v235
      %v268 = vpack.c.bf16 %v236, %v236
      %v269 = vpack.c.bf16 %v237, %v237
      %v270 = vpack.c.bf16 %v238, %v238
      %v271 = vpack.c.bf16 %v239, %v239
      %v272 = vpack.c.bf16 %v240, %v240
      %v273 = vpack.c.bf16 %v241, %v241
      %v306 = vunpack.c.l.b16 %v242
      %v307 = vunpack.c.l.b16 %v243
      %v308 = vunpack.c.l.b16 %v244
      %v309 = vunpack.c.l.b16 %v245
      %v310 = vunpack.c.l.b16 %v246
      %v311 = vunpack.c.l.b16 %v247
      %v312 = vunpack.c.l.b16 %v248
      %v313 = vunpack.c.l.b16 %v249
      %v314 = vunpack.c.l.b16 %v250
      %v315 = vunpack.c.l.b16 %v251
      %v316 = vunpack.c.l.b16 %v252
      %v317 = vunpack.c.l.b16 %v253
      %v318 = vunpack.c.l.b16 %v254
      %v319 = vunpack.c.l.b16 %v255
      %v320 = vunpack.c.l.b16 %v256
      %v321 = vunpack.c.l.b16 %v257
      %v322 = vunpack.c.l.b16 %v258
      %v323 = vunpack.c.l.b16 %v259
      %v324 = vunpack.c.l.b16 %v260
      %v325 = vunpack.c.l.b16 %v261
      %v326 = vunpack.c.l.b16 %v262
      %v327 = vunpack.c.l.b16 %v263
      %v328 = vunpack.c.l.b16 %v264
      %v329 = vunpack.c.l.b16 %v265
      %v330 = vunpack.c.l.b16 %v266
      %v331 = vunpack.c.l.b16 %v267
      %v332 = vunpack.c.l.b16 %v268
      %v333 = vunpack.c.l.b16 %v269
      %v334 = vunpack.c.l.b16 %v270
      %v335 = vunpack.c.l.b16 %v271
      %v336 = vunpack.c.l.b16 %v272
      %v337 = vunpack.c.l.b16 %v273
      %v338 = vpack.c.b16 %v307, %v306
      %v339 = vpack.c.b16 %v309, %v308
      %v340 = vpack.c.b16 %v311, %v310
      %v341 = vpack.c.b16 %v313, %v312
      %v342 = vpack.c.b16 %v315, %v314
      %v343 = vpack.c.b16 %v317, %v316
      %v344 = vpack.c.b16 %v319, %v318
      %v345 = vpack.c.b16 %v321, %v320
      %v346 = vpack.c.b16 %v323, %v322
      %v347 = vpack.c.b16 %v325, %v324
      %v348 = vpack.c.b16 %v327, %v326
      %v349 = vpack.c.b16 %v329, %v328
      %v350 = vpack.c.b16 %v331, %v330
      %v351 = vpack.c.b16 %v333, %v332
      %v352 = vpack.c.b16 %v335, %v334
      %v353 = vpack.c.b16 %v337, %v336
      %v355 = vshrl.u32 %v338, 16
      %v357 = vrot.slane %v355, 7
      %v358 = vshll.u32 %v338, 16
      %v360 = vor.u32 %v357, %v358
      %v362 = vshrl.u32 %v339, 16
      %v364 = vrot.slane %v362, 7
      %v365 = vshll.u32 %v339, 16
      %v367 = vor.u32 %v364, %v365
      %v369 = vshrl.u32 %v340, 16
      %v371 = vrot.slane %v369, 7
      %v372 = vshll.u32 %v340, 16
      %v374 = vor.u32 %v371, %v372
      %v376 = vshrl.u32 %v341, 16
      %v378 = vrot.slane %v376, 7
      %v379 = vshll.u32 %v341, 16
      %v381 = vor.u32 %v378, %v379
      %v383 = vshrl.u32 %v342, 16
      %v385 = vrot.slane %v383, 7
      %v386 = vshll.u32 %v342, 16
      %v388 = vor.u32 %v385, %v386
      %v390 = vshrl.u32 %v343, 16
      %v392 = vrot.slane %v390, 7
      %v393 = vshll.u32 %v343, 16
      %v395 = vor.u32 %v392, %v393
      %v397 = vshrl.u32 %v344, 16
      %v399 = vrot.slane %v397, 7
      %v400 = vshll.u32 %v344, 16
      %v402 = vor.u32 %v399, %v400
      %v404 = vshrl.u32 %v345, 16
      %v406 = vrot.slane %v404, 7
      %v407 = vshll.u32 %v345, 16
      %v409 = vor.u32 %v406, %v407
      %v411 = vshrl.u32 %v346, 16
      %v413 = vrot.slane %v411, 7
      %v414 = vshll.u32 %v346, 16
      %v416 = vor.u32 %v413, %v414
      %v418 = vshrl.u32 %v347, 16
      %v420 = vrot.slane %v418, 7
      %v421 = vshll.u32 %v347, 16
      %v423 = vor.u32 %v420, %v421
      %v425 = vshrl.u32 %v348, 16
      %v427 = vrot.slane %v425, 7
      %v428 = vshll.u32 %v348, 16
      %v430 = vor.u32 %v427, %v428
      %v432 = vshrl.u32 %v349, 16
      %v434 = vrot.slane %v432, 7
      %v435 = vshll.u32 %v349, 16
      %v437 = vor.u32 %v434, %v435
      %v439 = vshrl.u32 %v350, 16
      %v441 = vrot.slane %v439, 7
      %v442 = vshll.u32 %v350, 16
      %v444 = vor.u32 %v441, %v442
      %v446 = vshrl.u32 %v351, 16
      %v448 = vrot.slane %v446, 7
      %v449 = vshll.u32 %v351, 16
      %v451 = vor.u32 %v448, %v449
      %v453 = vshrl.u32 %v352, 16
      %v455 = vrot.slane %v453, 7
      %v456 = vshll.u32 %v352, 16
      %v458 = vor.u32 %v455, %v456
      %v460 = vshrl.u32 %v353, 16
      %v462 = vrot.slane %v460, 7
      %v463 = vshll.u32 %v353, 16
      %v465 = vor.u32 %v462, %v463
      %vm482 = vcmask 1040384
      %vm483 = vsmask.f32 256
      %vm484 = vmand %vm482, %vm483
      %v485 = vsel %vm484, 0, %v360
      %v486 = vsel %vm484, 0, %v367
      %v487 = vsel %vm484, 0, %v374
      %v488 = vsel %vm484, 0, %v381
      %v489 = vsel %vm484, 0, %v388
      %v490 = vsel %vm484, 0, %v395
      %v491 = vsel %vm484, 0, %v402
      %v492 = vsel %vm484, 0, %v409
      %v493 = vsel %vm484, 0, %v416
      %v494 = vsel %vm484, 0, %v423
      %v495 = vsel %vm484, 0, %v430
      %v496 = vsel %vm484, 0, %v437
      %v497 = vsel %vm484, 0, %v444
      %v498 = vsel %vm484, 0, %v451
      %v499 = vsel %vm484, 0, %v458
      %v500 = vsel %vm484, 0, %v465
      %v501 = vrot.slane %v358, 1
      %v502 = vor.u32 %v355, %v501
      %v503 = vrot.slane %v365, 1
      %v504 = vor.u32 %v362, %v503
      %v505 = vrot.slane %v372, 1
      %v506 = vor.u32 %v369, %v505
      %v507 = vrot.slane %v379, 1
      %v508 = vor.u32 %v376, %v507
      %v509 = vrot.slane %v386, 1
      %v510 = vor.u32 %v383, %v509
      %v511 = vrot.slane %v393, 1
      %v512 = vor.u32 %v390, %v511
      %v513 = vrot.slane %v400, 1
      %v514 = vor.u32 %v397, %v513
      %v515 = vrot.slane %v407, 1
      %v516 = vor.u32 %v404, %v515
      %v517 = vrot.slane %v414, 1
      %v518 = vor.u32 %v411, %v517
      %v519 = vrot.slane %v421, 1
      %v520 = vor.u32 %v418, %v519
      %v521 = vrot.slane %v428, 1
      %v522 = vor.u32 %v425, %v521
      %v523 = vrot.slane %v435, 1
      %v524 = vor.u32 %v432, %v523
      %v525 = vrot.slane %v442, 1
      %v526 = vor.u32 %v439, %v525
      %v527 = vrot.slane %v449, 1
      %v528 = vor.u32 %v446, %v527
      %v529 = vrot.slane %v456, 1
      %v530 = vor.u32 %v453, %v529
      %v531 = vrot.slane %v463, 1
      %v532 = vor.u32 %v460, %v531
      %vm549 = vcmask 1047552
      %vm550 = vsmask.f32 7424
      %vm551 = vmand %vm549, %vm550
      %v552 = vsel %vm551, %v502, 0
      %v553 = vsel %vm551, %v504, 0
      %v554 = vsel %vm551, %v506, 0
      %v555 = vsel %vm551, %v508, 0
      %v556 = vsel %vm551, %v510, 0
      %v557 = vsel %vm551, %v512, 0
      %v558 = vsel %vm551, %v514, 0
      %v559 = vsel %vm551, %v516, 0
      %v560 = vsel %vm551, %v518, 0
      %v561 = vsel %vm551, %v520, 0
      %v562 = vsel %vm551, %v522, 0
      %v563 = vsel %vm551, %v524, 0
      %v564 = vsel %vm551, %v526, 0
      %v565 = vsel %vm551, %v528, 0
      %v566 = vsel %vm551, %v530, 0
      %v567 = vsel %vm551, %v532, 0
      %568 = vrot.lane.b32.xlu0 %v338, 4
      %v569 = vpop.permute.xlu0 %568
      %570 = vrot.lane.b32.xlu0 %v339, 4
      %v571 = vpop.permute.xlu0 %570
      %572 = vrot.lane.b32.xlu0 %v340, 4
      %v573 = vpop.permute.xlu0 %572
      %574 = vrot.lane.b32.xlu0 %v341, 4
      %v575 = vpop.permute.xlu0 %574
      %576 = vrot.lane.b32.xlu0 %v342, 4
      %v577 = vpop.permute.xlu0 %576
      %578 = vrot.lane.b32.xlu0 %v343, 4
      %v579 = vpop.permute.xlu0 %578
      %580 = vrot.lane.b32.xlu0 %v344, 4
      %v581 = vpop.permute.xlu0 %580
      %582 = vrot.lane.b32.xlu0 %v345, 4
      %v583 = vpop.permute.xlu0 %582
      %584 = vrot.lane.b32.xlu0 %v346, 4
      %v585 = vpop.permute.xlu0 %584
      %586 = vrot.lane.b32.xlu0 %v347, 4
      %v587 = vpop.permute.xlu0 %586
      %588 = vrot.lane.b32.xlu0 %v348, 4
      %v589 = vpop.permute.xlu0 %588
      %590 = vrot.lane.b32.xlu0 %v349, 4
      %v591 = vpop.permute.xlu0 %590
      %592 = vrot.lane.b32.xlu0 %v350, 4
      %v593 = vpop.permute.xlu0 %592
      %594 = vrot.lane.b32.xlu0 %v351, 4
      %v595 = vpop.permute.xlu0 %594
      %596 = vrot.lane.b32.xlu0 %v352, 4
      %v597 = vpop.permute.xlu0 %596
      %598 = vrot.lane.b32.xlu0 %v353, 4
      %v599 = vpop.permute.xlu0 %598
      %616 = vrot.lane.b32.xlu0 %v552, 8
      %v617 = vpop.permute.xlu0 %616
      %618 = vrot.lane.b32.xlu0 %v553, 8
      %v619 = vpop.permute.xlu0 %618
      %620 = vrot.lane.b32.xlu0 %v554, 8
      %v621 = vpop.permute.xlu0 %620
      %622 = vrot.lane.b32.xlu0 %v555, 8
      %v623 = vpop.permute.xlu0 %622
      %624 = vrot.lane.b32.xlu0 %v556, 8
      %v625 = vpop.permute.xlu0 %624
      %626 = vrot.lane.b32.xlu0 %v557, 8
      %v627 = vpop.permute.xlu0 %626
      %628 = vrot.lane.b32.xlu0 %v558, 8
      %v629 = vpop.permute.xlu0 %628
      %630 = vrot.lane.b32.xlu0 %v559, 8
      %v631 = vpop.permute.xlu0 %630
      %632 = vrot.lane.b32.xlu0 %v560, 8
      %v633 = vpop.permute.xlu0 %632
      %634 = vrot.lane.b32.xlu0 %v561, 8
      %v635 = vpop.permute.xlu0 %634
      %636 = vrot.lane.b32.xlu0 %v562, 8
      %v637 = vpop.permute.xlu0 %636
      %638 = vrot.lane.b32.xlu0 %v563, 8
      %v639 = vpop.permute.xlu0 %638
      %640 = vrot.lane.b32.xlu0 %v564, 8
      %v641 = vpop.permute.xlu0 %640
      %642 = vrot.lane.b32.xlu0 %v565, 8
      %v643 = vpop.permute.xlu0 %642
      %644 = vrot.lane.b32.xlu0 %v566, 8
      %v645 = vpop.permute.xlu0 %644
      %646 = vrot.lane.b32.xlu0 %v567, 8
      %v647 = vpop.permute.xlu0 %646
      %vm648 = vcmask 31744
      %v651 = vsel %vm648, %v485, %v569
      %v654 = vsel %vm648, %v486, %v571
      %v657 = vsel %vm648, %v487, %v573
      %v660 = vsel %vm648, %v488, %v575
      %v663 = vsel %vm648, %v489, %v577
      %v666 = vsel %vm648, %v490, %v579
      %v669 = vsel %vm648, %v491, %v581
      %v672 = vsel %vm648, %v492, %v583
      %v675 = vsel %vm648, %v493, %v585
      %v678 = vsel %vm648, %v494, %v587
      %v681 = vsel %vm648, %v495, %v589
      %v684 = vsel %vm648, %v496, %v591
      %v687 = vsel %vm648, %v497, %v593
      %v690 = vsel %vm648, %v498, %v595
      %v693 = vsel %vm648, %v499, %v597
      %v696 = vsel %vm648, %v500, %v599
      %vm697 = vcmask 64512
      %v699 = vsel %vm697, %v651, %v617
      %v701 = vsel %vm697, %v654, %v619
      %v703 = vsel %vm697, %v657, %v621
      %v705 = vsel %vm697, %v660, %v623
      %v707 = vsel %vm697, %v663, %v625
      %v709 = vsel %vm697, %v666, %v627
      %v711 = vsel %vm697, %v669, %v629
      %v713 = vsel %vm697, %v672, %v631
      %v715 = vsel %vm697, %v675, %v633
      %v717 = vsel %vm697, %v678, %v635
      %v719 = vsel %vm697, %v681, %v637
      %v721 = vsel %vm697, %v684, %v639
      %v723 = vsel %vm697, %v687, %v641
      %v725 = vsel %vm697, %v690, %v643
      %v727 = vsel %vm697, %v693, %v645
      %v729 = vsel %vm697, %v696, %v647
      %746 = vrot.lane.b32.xlu0 %v699, 12
      %v747 = vpop.permute.xlu0 %746
      %748 = vrot.lane.b32.xlu0 %v701, 12
      %v749 = vpop.permute.xlu0 %748
      %750 = vrot.lane.b32.xlu0 %v703, 12
      %v751 = vpop.permute.xlu0 %750
      %752 = vrot.lane.b32.xlu0 %v705, 12
      %v753 = vpop.permute.xlu0 %752
      %754 = vrot.lane.b32.xlu0 %v707, 12
      %v755 = vpop.permute.xlu0 %754
      %756 = vrot.lane.b32.xlu0 %v709, 12
      %v757 = vpop.permute.xlu0 %756
      %758 = vrot.lane.b32.xlu0 %v711, 12
      %v759 = vpop.permute.xlu0 %758
      %760 = vrot.lane.b32.xlu0 %v713, 12
      %v761 = vpop.permute.xlu0 %760
      %762 = vrot.lane.b32.xlu0 %v715, 12
      %v763 = vpop.permute.xlu0 %762
      %764 = vrot.lane.b32.xlu0 %v717, 12
      %v765 = vpop.permute.xlu0 %764
      %766 = vrot.lane.b32.xlu0 %v719, 12
      %v767 = vpop.permute.xlu0 %766
      %768 = vrot.lane.b32.xlu0 %v721, 12
      %v769 = vpop.permute.xlu0 %768
      %770 = vrot.lane.b32.xlu0 %v723, 12
      %v771 = vpop.permute.xlu0 %770
      %772 = vrot.lane.b32.xlu0 %v725, 12
      %v773 = vpop.permute.xlu0 %772
      %774 = vrot.lane.b32.xlu0 %v727, 12
      %v775 = vpop.permute.xlu0 %774
      %776 = vrot.lane.b32.xlu0 %v729, 12
      %v777 = vpop.permute.xlu0 %776
      %779 = vrot.lane.b32.xlu0 %v701, 24
      %v780 = vpop.permute.xlu0 %779
      %781 = vrot.lane.b32.xlu0 %v703, 24
      %v782 = vpop.permute.xlu0 %781
      %783 = vrot.lane.b32.xlu0 %v705, 24
      %v784 = vpop.permute.xlu0 %783
      %785 = vrot.lane.b32.xlu0 %v707, 24
      %v786 = vpop.permute.xlu0 %785
      %787 = vrot.lane.b32.xlu0 %v709, 24
      %v788 = vpop.permute.xlu0 %787
      %789 = vrot.lane.b32.xlu0 %v711, 24
      %v790 = vpop.permute.xlu0 %789
      %791 = vrot.lane.b32.xlu0 %v713, 24
      %v792 = vpop.permute.xlu0 %791
      %793 = vrot.lane.b32.xlu0 %v715, 24
      %v794 = vpop.permute.xlu0 %793
      %795 = vrot.lane.b32.xlu0 %v717, 24
      %v796 = vpop.permute.xlu0 %795
      %797 = vrot.lane.b32.xlu0 %v719, 24
      %v798 = vpop.permute.xlu0 %797
      %799 = vrot.lane.b32.xlu0 %v721, 24
      %v800 = vpop.permute.xlu0 %799
      %801 = vrot.lane.b32.xlu0 %v723, 24
      %v802 = vpop.permute.xlu0 %801
      %803 = vrot.lane.b32.xlu0 %v725, 24
      %v804 = vpop.permute.xlu0 %803
      %805 = vrot.lane.b32.xlu0 %v727, 24
      %v806 = vpop.permute.xlu0 %805
      %807 = vrot.lane.b32.xlu0 %v729, 24
      %v808 = vpop.permute.xlu0 %807
      %809 = vrot.lane.b32.xlu0 0, 24
      %v810 = vpop.permute.xlu0 %809
      %vm811 = vcmask 97280
      %v814 = vsel %vm811, 0, %v747
      %v816 = vsel %vm811, %v699, %v749
      %v818 = vsel %vm811, %v701, %v751
      %v820 = vsel %vm811, %v703, %v753
      %v822 = vsel %vm811, %v705, %v755
      %v824 = vsel %vm811, %v707, %v757
      %v826 = vsel %vm811, %v709, %v759
      %v828 = vsel %vm811, %v711, %v761
      %v830 = vsel %vm811, %v713, %v763
      %v832 = vsel %vm811, %v715, %v765
      %v834 = vsel %vm811, %v717, %v767
      %v836 = vsel %vm811, %v719, %v769
      %v838 = vsel %vm811, %v721, %v771
      %v840 = vsel %vm811, %v723, %v773
      %v842 = vsel %vm811, %v725, %v775
      %v844 = vsel %vm811, %v727, %v777
      %vm845 = vcmask 195584
      %v847 = vsel %vm845, %v814, %v780
      %v849 = vsel %vm845, %v816, %v782
      %v851 = vsel %vm845, %v818, %v784
      %v853 = vsel %vm845, %v820, %v786
      %v855 = vsel %vm845, %v822, %v788
      %v857 = vsel %vm845, %v824, %v790
      %v859 = vsel %vm845, %v826, %v792
      %v861 = vsel %vm845, %v828, %v794
      %v863 = vsel %vm845, %v830, %v796
      %v865 = vsel %vm845, %v832, %v798
      %v867 = vsel %vm845, %v834, %v800
      %v869 = vsel %vm845, %v836, %v802
      %v871 = vsel %vm845, %v838, %v804
      %v873 = vsel %vm845, %v840, %v806
      %v875 = vsel %vm845, %v842, %v808
      %v877 = vsel %vm845, %v844, %v810
      %v878 = vld [vmem:[%s1] sm:$0xf]
      %v879 = vld [vmem:[%s1 + $0x4] sm:$0xf]
      %v880 = vld [vmem:[%s1 + $0x8] sm:$0xf]
      %v881 = vld [vmem:[%s1 + $0xc] sm:$0xf]
      %v882 = vld [vmem:[%s1 + $0x10] sm:$0x3]
      %v883 = vld [vmem:[%s2] sm:$0x1]
      %v885 = vperm.slane %v883, 0
      %v892 = vunpack.c.l.b16 %v878
      %v893 = vunpack.c.l.b16 %v879
      %v894 = vunpack.c.l.b16 %v880
      %v895 = vunpack.c.l.b16 %v881
      %v896 = vunpack.c.l.b16 %v882
      %v897 = vpack.c.b16 %v893, %v892
      %v898 = vpack.c.b16 %v895, %v894
      %v899 = vpack.c.b16 %v896, %v896
      %vm902 = vcmask 293888
      %v903 = vsel %vm902, %v847, 0
      %v905 = vsel %vm902, %v849, 0
      %v907 = vsel %vm902, %v851, 0
      %v909 = vsel %vm902, %v853, 0
      %v911 = vsel %vm902, %v855, 0
      %v913 = vsel %vm902, %v857, 0
      %v915 = vsel %vm902, %v859, 0
      %v917 = vsel %vm902, %v861, 0
      %v919 = vsel %vm902, %v863, 0
      %v921 = vsel %vm902, %v865, 0
      %v923 = vsel %vm902, %v867, 0
      %v925 = vsel %vm902, %v869, 0
      %v927 = vsel %vm902, %v871, 0
      %v929 = vsel %vm902, %v873, 0
      %v931 = vsel %vm902, %v875, 0
      %v933 = vsel %vm902, %v877, 0
      %vm935 = vcmask 1041408
      %v937 = vsel %vm935, %v899, 0
      %939 = vmatpush.bf16.msra.mxu0 0
      %940 = vmatpush.bf16.msra.mxu0 0
      %941 = vmatpush.bf16.msra.mxu0 0
      %942 = vmatpush.bf16.msra.mxu0 0
      %943 = vmatpush.bf16.msra.mxu0 0
      %944 = vmatpush.bf16.msra.mxu0 %v937
      %945 = vmatpush.bf16.msra.mxu0 %v898
      %946 = vmatpush.bf16.msra.mxu0 %v897
      %947 = vmatmul.bf16.gmra.mxu0 %v903
      %v948 = vpop.f32.mrf.mxu0
      %v949 = vadd.f32 %v885, %v948
      %v950 = vpop.f32.mrf.mxu0
      %v951 = vadd.f32 %v885, %v950
      %952 = vmatmul.bf16.gmra.mxu0 %v905
      %v953 = vpop.f32.mrf.mxu0
      %v954 = vadd.f32 %v885, %v953
      %v955 = vpop.f32.mrf.mxu0
      %v956 = vadd.f32 %v885, %v955
      %957 = vmatmul.bf16.gmra.mxu0 %v907
      %v958 = vpop.f32.mrf.mxu0
      %v959 = vadd.f32 %v885, %v958
      %v960 = vpop.f32.mrf.mxu0
      %v961 = vadd.f32 %v885, %v960
      %962 = vmatmul.bf16.gmra.mxu0 %v909
      %v963 = vpop.f32.mrf.mxu0
      %v964 = vadd.f32 %v885, %v963
      %v965 = vpop.f32.mrf.mxu0
      %v966 = vadd.f32 %v885, %v965
      %967 = vmatmul.bf16.gmra.mxu0 %v911
      %v968 = vpop.f32.mrf.mxu0
      %v969 = vadd.f32 %v885, %v968
      %v970 = vpop.f32.mrf.mxu0
      %v971 = vadd.f32 %v885, %v970
      %972 = vmatmul.bf16.gmra.mxu0 %v913
      %v973 = vpop.f32.mrf.mxu0
      %v974 = vadd.f32 %v885, %v973
      %v975 = vpop.f32.mrf.mxu0
      %v976 = vadd.f32 %v885, %v975
      %977 = vmatmul.bf16.gmra.mxu0 %v915
      %v978 = vpop.f32.mrf.mxu0
      %v979 = vadd.f32 %v885, %v978
      %v980 = vpop.f32.mrf.mxu0
      %v981 = vadd.f32 %v885, %v980
      %982 = vmatmul.bf16.gmra.mxu0 %v917
      %v983 = vpop.f32.mrf.mxu0
      %v984 = vadd.f32 %v885, %v983
      %v985 = vpop.f32.mrf.mxu0
      %v986 = vadd.f32 %v885, %v985
      %987 = vmatmul.bf16.gmra.mxu0 %v919
      %v988 = vpop.f32.mrf.mxu0
      %v989 = vadd.f32 %v885, %v988
      %v990 = vpop.f32.mrf.mxu0
      %v991 = vadd.f32 %v885, %v990
      %992 = vmatmul.bf16.gmra.mxu0 %v921
      %v993 = vpop.f32.mrf.mxu0
      %v994 = vadd.f32 %v885, %v993
      %v995 = vpop.f32.mrf.mxu0
      %v996 = vadd.f32 %v885, %v995
      %997 = vmatmul.bf16.gmra.mxu0 %v923
      %v998 = vpop.f32.mrf.mxu0
      %v999 = vadd.f32 %v885, %v998
      %v1000 = vpop.f32.mrf.mxu0
      %v1001 = vadd.f32 %v885, %v1000
      %1002 = vmatmul.bf16.gmra.mxu0 %v925
      %v1003 = vpop.f32.mrf.mxu0
      %v1004 = vadd.f32 %v885, %v1003
      %v1005 = vpop.f32.mrf.mxu0
      %v1006 = vadd.f32 %v885, %v1005
      %1007 = vmatmul.bf16.gmra.mxu0 %v927
      %v1008 = vpop.f32.mrf.mxu0
      %v1009 = vadd.f32 %v885, %v1008
      %v1010 = vpop.f32.mrf.mxu0
      %v1011 = vadd.f32 %v885, %v1010
      %1012 = vmatmul.bf16.gmra.mxu0 %v929
      %v1013 = vpop.f32.mrf.mxu0
      %v1014 = vadd.f32 %v885, %v1013
      %v1015 = vpop.f32.mrf.mxu0
      %v1016 = vadd.f32 %v885, %v1015
      %1017 = vmatmul.bf16.gmra.mxu0 %v931
      %v1018 = vpop.f32.mrf.mxu0
      %v1019 = vadd.f32 %v885, %v1018
      %v1020 = vpop.f32.mrf.mxu0
      %v1021 = vadd.f32 %v885, %v1020
      %1022 = vmatmul.bf16.gmra.mxu0 %v933
      %v1023 = vpop.f32.mrf.mxu0
      %v1024 = vadd.f32 %v885, %v1023
      %v1025 = vpop.f32.mrf.mxu0
      %v1026 = vadd.f32 %v885, %v1025
      %1027 = vdwg.mxu0
      %1028 = vst.msk [vmem:[%s204] sm:$0xff] %vm697, %v949
      %1029 = vst.msk [vmem:[%s204 + $0x8] sm:$0xff] %vm697, %v951
      %1030 = vst.msk [vmem:[%s204 + $0x10] sm:$0xff] %vm697, %v954
      %1031 = vst.msk [vmem:[%s204 + $0x18] sm:$0xff] %vm697, %v956
      %1032 = vst.msk [vmem:[%s204 + $0x20] sm:$0xff] %vm697, %v959
      %1033 = vst.msk [vmem:[%s204 + $0x28] sm:$0xff] %vm697, %v961
      %1034 = vst.msk [vmem:[%s204 + $0x30] sm:$0xff] %vm697, %v964
      %1035 = vst.msk [vmem:[%s204 + $0x38] sm:$0xff] %vm697, %v966
      %1036 = vst.msk [vmem:[%s204 + $0x40] sm:$0xff] %vm697, %v969
      %1037 = vst.msk [vmem:[%s204 + $0x48] sm:$0xff] %vm697, %v971
      %1038 = vst.msk [vmem:[%s204 + $0x50] sm:$0xff] %vm697, %v974
      %1039 = vst.msk [vmem:[%s204 + $0x58] sm:$0xff] %vm697, %v976
      %1040 = vst.msk [vmem:[%s204 + $0x60] sm:$0xff] %vm697, %v979
      %1041 = vst.msk [vmem:[%s204 + $0x68] sm:$0xff] %vm697, %v981
      %1042 = vst.msk [vmem:[%s204 + $0x70] sm:$0xff] %vm697, %v984
      %1043 = vst.msk [vmem:[%s204 + $0x78] sm:$0xff] %vm697, %v986
      %1044 = vst.msk [vmem:[%s204 + $0x80] sm:$0xff] %vm697, %v989
      %1045 = vst.msk [vmem:[%s204 + $0x88] sm:$0xff] %vm697, %v991
      %1046 = vst.msk [vmem:[%s204 + $0x90] sm:$0xff] %vm697, %v994
      %1047 = vst.msk [vmem:[%s204 + $0x98] sm:$0xff] %vm697, %v996
      %1048 = vst.msk [vmem:[%s204 + $0xa0] sm:$0xff] %vm697, %v999
      %1049 = vst.msk [vmem:[%s204 + $0xa8] sm:$0xff] %vm697, %v1001
      %1050 = vst.msk [vmem:[%s204 + $0xb0] sm:$0xff] %vm697, %v1004
      %1051 = vst.msk [vmem:[%s204 + $0xb8] sm:$0xff] %vm697, %v1006
      %1052 = vst.msk [vmem:[%s204 + $0xc0] sm:$0xff] %vm697, %v1009
      %1053 = vst.msk [vmem:[%s204 + $0xc8] sm:$0xff] %vm697, %v1011
      %1054 = vst.msk [vmem:[%s204 + $0xd0] sm:$0xff] %vm697, %v1014
      %1055 = vst.msk [vmem:[%s204 + $0xd8] sm:$0xff] %vm697, %v1016
      %1056 = vst.msk [vmem:[%s204 + $0xe0] sm:$0xff] %vm697, %v1019
      %1057 = vst.msk [vmem:[%s204 + $0xe8] sm:$0xff] %vm697, %v1021
      %1058 = vst.msk [vmem:[%s204 + $0xf0] sm:$0xff] %vm697, %v1024
      %1059 = vst.msk [vmem:[%s204 + $0xf8] sm:$0xff] %vm697, %v1026
      %v1060 = vsel %vm697, %v949, 0.0
      %v1061 = vsel %vm697, %v951, 0.0
      %v1062 = vadd.f32 %v1060, %v1061
      %v1063 = vsel %vm697, %v954, 0.0
      %v1064 = vadd.f32 %v1062, %v1063
      %v1065 = vsel %vm697, %v956, 0.0
      %v1066 = vadd.f32 %v1064, %v1065
      %v1067 = vsel %vm697, %v959, 0.0
      %v1068 = vadd.f32 %v1066, %v1067
      %v1069 = vsel %vm697, %v961, 0.0
      %v1070 = vadd.f32 %v1068, %v1069
      %v1071 = vsel %vm697, %v964, 0.0
      %v1072 = vadd.f32 %v1070, %v1071
      %v1073 = vsel %vm697, %v966, 0.0
      %v1074 = vadd.f32 %v1072, %v1073
      %v1075 = vsel %vm697, %v969, 0.0
      %v1076 = vadd.f32 %v1074, %v1075
      %v1077 = vsel %vm697, %v971, 0.0
      %v1078 = vadd.f32 %v1076, %v1077
      %v1079 = vsel %vm697, %v974, 0.0
      %v1080 = vadd.f32 %v1078, %v1079
      %v1081 = vsel %vm697, %v976, 0.0
      %v1082 = vadd.f32 %v1080, %v1081
      %v1083 = vsel %vm697, %v979, 0.0
      %v1084 = vadd.f32 %v1082, %v1083
      %v1085 = vsel %vm697, %v981, 0.0
      %v1086 = vadd.f32 %v1084, %v1085
      %v1087 = vsel %vm697, %v984, 0.0
      %v1088 = vadd.f32 %v1086, %v1087
      %v1089 = vsel %vm697, %v986, 0.0
      %v1090 = vadd.f32 %v1088, %v1089
      %v1091 = vsel %vm697, %v989, 0.0
      %v1092 = vadd.f32 %v1090, %v1091
      %v1093 = vsel %vm697, %v991, 0.0
      %v1094 = vadd.f32 %v1092, %v1093
      %v1095 = vsel %vm697, %v994, 0.0
      %v1096 = vadd.f32 %v1094, %v1095
      %v1097 = vsel %vm697, %v996, 0.0
      %v1098 = vadd.f32 %v1096, %v1097
      %v1099 = vsel %vm697, %v999, 0.0
      %v1100 = vadd.f32 %v1098, %v1099
      %v1101 = vsel %vm697, %v1001, 0.0
      %v1102 = vadd.f32 %v1100, %v1101
      %v1103 = vsel %vm697, %v1004, 0.0
      %v1104 = vadd.f32 %v1102, %v1103
      %v1105 = vsel %vm697, %v1006, 0.0
      %v1106 = vadd.f32 %v1104, %v1105
      %v1107 = vsel %vm697, %v1009, 0.0
      %v1108 = vadd.f32 %v1106, %v1107
      %v1109 = vsel %vm697, %v1011, 0.0
      %v1110 = vadd.f32 %v1108, %v1109
      %v1111 = vsel %vm697, %v1014, 0.0
      %v1112 = vadd.f32 %v1110, %v1111
      %v1113 = vsel %vm697, %v1016, 0.0
      %v1114 = vadd.f32 %v1112, %v1113
      %v1115 = vsel %vm697, %v1019, 0.0
      %v1116 = vadd.f32 %v1114, %v1115
      %v1117 = vsel %vm697, %v1021, 0.0
      %v1118 = vadd.f32 %v1116, %v1117
      %v1119 = vsel %vm697, %v1024, 0.0
      %v1120 = vadd.f32 %v1118, %v1119
      %v1121 = vsel %vm697, %v1026, 0.0
      %v1122 = vadd.f32 %v1120, %v1121
      %v1123 = vrot.slane %v1122, 4
      %v1124 = vadd.f32 %v1122, %v1123
      %v1125 = vrot.slane %v1124, 2
      %v1126 = vadd.f32 %v1124, %v1125
      %v1127 = vrot.slane %v1126, 1
      %v1128 = vadd.f32 %v1126, %v1127
      %v1129 = vmul.f32 %v949, %v949
      %v1130 = vmul.f32 %v951, %v951
      %v1131 = vmul.f32 %v954, %v954
      %v1132 = vmul.f32 %v956, %v956
      %v1133 = vmul.f32 %v959, %v959
      %v1134 = vmul.f32 %v961, %v961
      %v1135 = vmul.f32 %v964, %v964
      %v1136 = vmul.f32 %v966, %v966
      %v1137 = vmul.f32 %v969, %v969
      %v1138 = vmul.f32 %v971, %v971
      %v1139 = vmul.f32 %v974, %v974
      %v1140 = vmul.f32 %v976, %v976
      %v1141 = vmul.f32 %v979, %v979
      %v1142 = vmul.f32 %v981, %v981
      %v1143 = vmul.f32 %v984, %v984
      %v1144 = vmul.f32 %v986, %v986
      %v1145 = vmul.f32 %v989, %v989
      %v1146 = vmul.f32 %v991, %v991
      %v1147 = vmul.f32 %v994, %v994
      %v1148 = vmul.f32 %v996, %v996
      %v1149 = vmul.f32 %v999, %v999
      %v1150 = vmul.f32 %v1001, %v1001
      %v1151 = vmul.f32 %v1004, %v1004
      %v1152 = vmul.f32 %v1006, %v1006
      %v1153 = vmul.f32 %v1009, %v1009
      %v1154 = vmul.f32 %v1011, %v1011
      %v1155 = vmul.f32 %v1014, %v1014
      %v1156 = vmul.f32 %v1016, %v1016
      %v1157 = vmul.f32 %v1019, %v1019
      %v1158 = vmul.f32 %v1021, %v1021
      %v1159 = vmul.f32 %v1024, %v1024
      %v1160 = vmul.f32 %v1026, %v1026
      %v1161 = vsel %vm697, %v1129, 0.0
      %v1162 = vsel %vm697, %v1130, 0.0
      %v1163 = vadd.f32 %v1161, %v1162
      %v1164 = vsel %vm697, %v1131, 0.0
      %v1165 = vadd.f32 %v1163, %v1164
      %v1166 = vsel %vm697, %v1132, 0.0
      %v1167 = vadd.f32 %v1165, %v1166
      %v1168 = vsel %vm697, %v1133, 0.0
      %v1169 = vadd.f32 %v1167, %v1168
      %v1170 = vsel %vm697, %v1134, 0.0
      %v1171 = vadd.f32 %v1169, %v1170
      %v1172 = vsel %vm697, %v1135, 0.0
      %v1173 = vadd.f32 %v1171, %v1172
      %v1174 = vsel %vm697, %v1136, 0.0
      %v1175 = vadd.f32 %v1173, %v1174
      %v1176 = vsel %vm697, %v1137, 0.0
      %v1177 = vadd.f32 %v1175, %v1176
      %v1178 = vsel %vm697, %v1138, 0.0
      %v1179 = vadd.f32 %v1177, %v1178
      %v1180 = vsel %vm697, %v1139, 0.0
      %v1181 = vadd.f32 %v1179, %v1180
      %v1182 = vsel %vm697, %v1140, 0.0
      %v1183 = vadd.f32 %v1181, %v1182
      %v1184 = vsel %vm697, %v1141, 0.0
      %v1185 = vadd.f32 %v1183, %v1184
      %v1186 = vsel %vm697, %v1142, 0.0
      %v1187 = vadd.f32 %v1185, %v1186
      %v1188 = vsel %vm697, %v1143, 0.0
      %v1189 = vadd.f32 %v1187, %v1188
      %v1190 = vsel %vm697, %v1144, 0.0
      %v1191 = vadd.f32 %v1189, %v1190
      %v1192 = vsel %vm697, %v1145, 0.0
      %v1193 = vadd.f32 %v1191, %v1192
      %v1194 = vsel %vm697, %v1146, 0.0
      %v1195 = vadd.f32 %v1193, %v1194
      %v1196 = vsel %vm697, %v1147, 0.0
      %v1197 = vadd.f32 %v1195, %v1196
      %v1198 = vsel %vm697, %v1148, 0.0
      %v1199 = vadd.f32 %v1197, %v1198
      %v1200 = vsel %vm697, %v1149, 0.0
      %v1201 = vadd.f32 %v1199, %v1200
      %v1202 = vsel %vm697, %v1150, 0.0
      %v1203 = vadd.f32 %v1201, %v1202
      %v1204 = vsel %vm697, %v1151, 0.0
      %v1205 = vadd.f32 %v1203, %v1204
      %v1206 = vsel %vm697, %v1152, 0.0
      %v1207 = vadd.f32 %v1205, %v1206
      %v1208 = vsel %vm697, %v1153, 0.0
      %v1209 = vadd.f32 %v1207, %v1208
      %v1210 = vsel %vm697, %v1154, 0.0
      %v1211 = vadd.f32 %v1209, %v1210
      %v1212 = vsel %vm697, %v1155, 0.0
      %v1213 = vadd.f32 %v1211, %v1212
      %v1214 = vsel %vm697, %v1156, 0.0
      %v1215 = vadd.f32 %v1213, %v1214
      %v1216 = vsel %vm697, %v1157, 0.0
      %v1217 = vadd.f32 %v1215, %v1216
      %v1218 = vsel %vm697, %v1158, 0.0
      %v1219 = vadd.f32 %v1217, %v1218
      %v1220 = vsel %vm697, %v1159, 0.0
      %v1221 = vadd.f32 %v1219, %v1220
      %v1222 = vsel %vm697, %v1160, 0.0
      %v1223 = vadd.f32 %v1221, %v1222
      %v1224 = vrot.slane %v1223, 4
      %v1225 = vadd.f32 %v1223, %v1224
      %v1226 = vrot.slane %v1225, 2
      %v1227 = vadd.f32 %v1225, %v1226
      %v1228 = vrot.slane %v1227, 1
      %v1229 = vadd.f32 %v1227, %v1228
      %vm1230 = vcmask 1040384
      %v1231 = vsel %vm1230, %v1128, %v1229
      %vm1232 = vcmask 58368
      %1233 = vst.msk [vmem:[%s208] sm:$0x3] %vm1232, %v1231
      %p1234 = scmp.lt.s32.totalorder %s16, 1
      %s1235 = scalar_select %p1234, %s16, 1
      %s1236 = smul.addr %s1235, 32
      %s1237 = smul.addr %s1236, 8
      %s1238 = scalar_lea.vmem %s3, %s1237
      %p1239 = scmp.lt.s32.totalorder %s16, 1
      %s1240 = scalar_select %p1239, %s16, 1
      %s1241 = smul.addr %s1240, 2
      %s1242 = scalar_lea.vmem %s4, %s1241
      // Predicated region
      $region33: #{contractive_block.6} parent=31 // pred_check
        %p1243 = pneg %p102
      $region34: #{contractive_block.6} parent=31 // pred_check_branch
        %1245 = sbr.rel (%p1243) target = $region36
      $region35: #{contractive_block.6} parent=31 // pred_region
        _
      $region36: #{contractive_block.6} parent=31 // pred_fallthru
        _
      // Predicated region
      $region37: #{contractive_block.6} parent=31 // pred_check
        %p1246 = pneg %p128
      $region38: #{contractive_block.6} parent=31 // pred_check_branch
        %1248 = sbr.rel (%p1246) target = $region40
      $region39: #{contractive_block.6} parent=31 // pred_region
        _
      $region40: #{contractive_block.6} parent=31 // pred_fallthru
        _
    $region32: #{contractive_block.6} parent=5 // pred_fallthru
      _
    %p1249 = scmp.le.s32.totalorder 2, %s11
    // Predicated region
    $region41: #{contractive_block.6} parent=5 // pred_check
      %p1250 = pneg %p1249
    $region42: #{contractive_block.6} parent=5 // pred_check_branch
      %1252 = sbr.rel (%p1250) target = $region44
    $region43: #{contractive_block.6} parent=5 // pred_region
      %s1253 = ssub.s32 %s11, 2
      // Predicated region
      $region45: #{contractive_block.6} parent=43 // pred_check
        %p1254 = pneg %p108
      $region46: #{contractive_block.6} parent=43 // pred_check_branch
        %1256 = sbr.rel (%p1254) target = $region48
      $region47: #{contractive_block.6} parent=43 // pred_region
        %p1257 = scmp.lt.s32.totalorder %s17, 1
        %s1258 = scalar_select %p1257, %s17, 1
        %s1259 = smul.addr %s1258, 32
        %s1260 = smul.addr %s1259, 8
        %s1261 = scalar_lea.vmem %s3, %s1260
      $region48: #{contractive_block.6} parent=43 // pred_fallthru
        _
      // Predicated region
      $region49: #{contractive_block.6} parent=43 // pred_check
        %p1262 = pneg %p134
      $region50: #{contractive_block.6} parent=43 // pred_check_branch
        %1264 = sbr.rel (%p1262) target = $region52
      $region51: #{contractive_block.6} parent=43 // pred_region
        %p1265 = scmp.lt.s32.totalorder %s17, 1
        %s1266 = scalar_select %p1265, %s17, 1
        %s1267 = smul.addr %s1266, 2
        %s1268 = scalar_lea.vmem %s4, %s1267
      $region52: #{contractive_block.6} parent=43 // pred_fallthru
        _
    $region44: #{contractive_block.6} parent=5 // pred_fallthru
      _
  $region6: #{contractive_block.6} parent=0 // loop_footer
    %s15 = sadd.s32 1, %s11
  $region7: #{contractive_block.6} parent=0 // loop_footer_branch
    %10 = sbr.rel target = $region3
  $region8: #{contractive_block.6} parent=0 // loop_exit
    _

// kernel: contractive_block.8
$region0: #{contractive_block.8}
  #allocation0 [shape = 'u32[]', space=smem, size = 0x4, offset = 0x4, fixed_abs, tag = 'smem constant byte address 0x4 - core index']
  #allocation1 [shape = 'u32[72,128]{1,0:T(1,128)}', space=vmem, size = 0x9000, scoped, tag = 'internal scratch']
  %s0 = inlined_call_operand.vmem [shape: f32[2,16,16,8], index: 0, kind: input, shape index: {}]
  %s1 = inlined_call_operand.vmem [shape: f32[1,8], index: 1, kind: input, shape index: {}]
  %s2 = inlined_call_operand.vmem [shape: f32[1,8], index: 2, kind: input, shape index: {}]
  %s3 = inlined_call_operand.vmem [shape: f32[2,16,16,8], index: 3, kind: output, shape index: {0}]
  %s4 = inlined_call_operand.vmem [shape: f32[2,8,8,8], index: 4, kind: output, shape index: {1}]
  %5 = xla_tuple %s3, %s4
  %s6 = sld [smem:[#allocation0]]
  $region53: #{contractive_block.8} parent=0
    _
  %s8 = ssub.s32 1, %s6
  %s9 = scalar_select 0, %s8, %s6
  loop: start=0, step=1, limit=4
  $region2: #{contractive_block.8} parent=0 // loop_pre_header
    _
  $region3: #{contractive_block.8} parent=0 // loop_header
    %s11 = sphi 0, %s15
    %p12 = scmp.ge.s32.totalorder %s11, 4
    %s21 = sphi 0, %s23
    %s24 = sphi 0, %s21
    %s25 = sphi 0, %s24
    %s41 = sphi 0, %s25
    %s45 = sphi 0, %s45
    %s47 = sphi 0, %s45
    %s48 = sphi 0, %s47
    %s62 = sphi 0, %s48
    %s66 = sphi 0, %s66
    %s68 = sphi 0, %s66
    %s69 = sphi 0, %s68
    %s83 = sphi 0, %s69
    %s89 = sphi 0, %s91
    %s92 = sphi 0, %s89
    %s93 = sphi 0, %s92
    %s109 = sphi 0, %s93
    %s115 = sphi 0, %s117
    %s118 = sphi 0, %s115
    %s119 = sphi 0, %s118
    %s135 = sphi 0, %s119
  $region4: #{contractive_block.8} parent=0 // loop_header_branch
    %14 = sbr.rel (%p12) target = $region8
  $region5: #{contractive_block.8} parent=0 // loop_body
    %s16 = ssub.s32 %s11, 1
    %s17 = ssub.s32 %s11, 2
    %s18 = sadd.s32 %s11, 1
    %s19 = ssub.s32 %s11, %s18
    %p20 = scmp.eq.s32.totalorder %s19, 0
    %s22 = sadd.s32 %s21, 1
    %s23 = scalar_select %p20, %s21, %s22
    %p26 = pneg %p20
    %p27 = scmp.eq.s32.totalorder %s11, 1
    %p28 = por %p26, %p27
    %p29 = scmp.ne.s32.totalorder %s21, %s24
    %p30 = scmp.eq.s32.totalorder %s11, 0
    %p31 = por %p29, %p30
    %p32 = scmp.ne.s32.totalorder %s21, %s24
    %p33 = scmp.eq.s32.totalorder %s16, 1
    %p34 = por %p32, %p33
    %p35 = scmp.ne.s32.totalorder %s24, %s25
    %p36 = scmp.eq.s32.totalorder %s16, 0
    %p37 = por %p35, %p36
    %p38 = scmp.ne.s32.totalorder %s24, %s25
    %p39 = scmp.eq.s32.totalorder %s17, 1
    %p40 = por %p38, %p39
    %p42 = scmp.ne.s32.totalorder %s25, %s41
    %p43 = scmp.eq.s32.totalorder %s17, 0
    %p44 = por %p42, %p43
    %s46 = sadd.s32 %s45, 1
    %p49 = scmp.eq.s32.totalorder %s11, 1
    %p50 = scmp.ne.s32.totalorder %s45, %s47
    %p51 = scmp.eq.s32.totalorder %s11, 0
    %p52 = por %p50, %p51
    %p53 = scmp.ne.s32.totalorder %s45, %s47
    %p54 = scmp.eq.s32.totalorder %s16, 1
    %p55 = por %p53, %p54
    %p56 = scmp.ne.s32.totalorder %s47, %s48
    %p57 = scmp.eq.s32.totalorder %s16, 0
    %p58 = por %p56, %p57
    %p59 = scmp.ne.s32.totalorder %s47, %s48
    %p60 = scmp.eq.s32.totalorder %s17, 1
    %p61 = por %p59, %p60
    %p63 = scmp.ne.s32.totalorder %s48, %s62
    %p64 = scmp.eq.s32.totalorder %s17, 0
    %p65 = por %p63, %p64
    %s67 = sadd.s32 %s66, 1
    %p70 = scmp.eq.s32.totalorder %s11, 1
    %p71 = scmp.ne.s32.totalorder %s66, %s68
    %p72 = scmp.eq.s32.totalorder %s11, 0
    %p73 = por %p71, %p72
    %p74 = scmp.ne.s32.totalorder %s66, %s68
    %p75 = scmp.eq.s32.totalorder %s16, 1
    %p76 = por %p74, %p75
    %p77 = scmp.ne.s32.totalorder %s68, %s69
    %p78 = scmp.eq.s32.totalorder %s16, 0
    %p79 = por %p77, %p78
    %p80 = scmp.ne.s32.totalorder %s68, %s69
    %p81 = scmp.eq.s32.totalorder %s17, 1
    %p82 = por %p80, %p81
    %p84 = scmp.ne.s32.totalorder %s69, %s83
    %p85 = scmp.eq.s32.totalorder %s17, 0
    %p86 = por %p84, %p85
    %s87 = ssub.s32 %s11, %s18
    %p88 = scmp.eq.s32.totalorder %s87, 0
    %s90 = sadd.s32 %s89, 1
    %s91 = scalar_select %p88, %s89, %s90
    %p94 = pneg %p88
    %p95 = scmp.eq.s32.totalorder %s11, 1
    %p96 = por %p94, %p95
    %p97 = scmp.ne.s32.totalorder %s89, %s92
    %p98 = scmp.eq.s32.totalorder %s11, 0
    %p99 = por %p97, %p98
    %p100 = scmp.ne.s32.totalorder %s89, %s92
    %p101 = scmp.eq.s32.totalorder %s16, 1
    %p102 = por %p100, %p101
    %p103 = scmp.ne.s32.totalorder %s92, %s93
    %p104 = scmp.eq.s32.totalorder %s16, 0
    %p105 = por %p103, %p104
    %p106 = scmp.ne.s32.totalorder %s92, %s93
    %p107 = scmp.eq.s32.totalorder %s17, 1
    %p108 = por %p106, %p107
    %p110 = scmp.ne.s32.totalorder %s93, %s109
    %p111 = scmp.eq.s32.totalorder %s17, 0
    %p112 = por %p110, %p111
    %s113 = ssub.s32 %s11, %s18
    %p114 = scmp.eq.s32.totalorder %s113, 0
    %s116 = sadd.s32 %s115, 1
    %s117 = scalar_select %p114, %s115, %s116
    %p120 = pneg %p114
    %p121 = scmp.eq.s32.totalorder %s11, 1
    %p122 = por %p120, %p121
    %p123 = scmp.ne.s32.totalorder %s115, %s118
    %p124 = scmp.eq.s32.totalorder %s11, 0
    %p125 = por %p123, %p124
    %p126 = scmp.ne.s32.totalorder %s115, %s118
    %p127 = scmp.eq.s32.totalorder %s16, 1
    %p128 = por %p126, %p127
    %p129 = scmp.ne.s32.totalorder %s118, %s119
    %p130 = scmp.eq.s32.totalorder %s16, 0
    %p131 = por %p129, %p130
    %p132 = scmp.ne.s32.totalorder %s118, %s119
    %p133 = scmp.eq.s32.totalorder %s17, 1
    %p134 = por %p132, %p133
    %p136 = scmp.ne.s32.totalorder %s119, %s135
    %p137 = scmp.eq.s32.totalorder %s17, 0
    %p138 = por %p136, %p137
    %p139 = scmp.le.s32.totalorder 1, %s11
    %p140 = scmp.lt.s32.totalorder %s11, 3
    %p141 = pnand %p139, %p140
    %p142 = pneg %p141
    // Predicated region
    $region9: #{contractive_block.8} parent=5 // pred_check
      _
    $region10: #{contractive_block.8} parent=5 // pred_check_branch
      %144 = sbr.rel (%p141) target = $region12
    $region11: #{contractive_block.8} parent=5 // pred_region
      %s145 = ssub.s32 %s11, 1
      // Predicated region
      $region13: #{contractive_block.8} parent=11 // pred_check
        %p146 = pneg %p58
      $region14: #{contractive_block.8} parent=11 // pred_check_branch
        %148 = sbr.rel (%p146) target = $region16
      $region15: #{contractive_block.8} parent=11 // pred_region
        _
      $region16: #{contractive_block.8} parent=11 // pred_fallthru
        _
      // Predicated region
      $region17: #{contractive_block.8} parent=11 // pred_check
        %p149 = pneg %p79
      $region18: #{contractive_block.8} parent=11 // pred_check_branch
        %151 = sbr.rel (%p149) target = $region20
      $region19: #{contractive_block.8} parent=11 // pred_region
        _
      $region20: #{contractive_block.8} parent=11 // pred_fallthru
        _
    $region12: #{contractive_block.8} parent=5 // pred_fallthru
      _
    %p152 = scmp.lt.s32.totalorder %s11, 2
    // Predicated region
    $region21: #{contractive_block.8} parent=5 // pred_check
      %p153 = pneg %p152
    $region22: #{contractive_block.8} parent=5 // pred_check_branch
      %155 = sbr.rel (%p153) target = $region24
    $region23: #{contractive_block.8} parent=5 // pred_region
      // Predicated region
      $region25: #{contractive_block.8} parent=23 // pred_check
        %p156 = pneg %p31
      $region26: #{contractive_block.8} parent=23 // pred_check_branch
        %158 = sbr.rel (%p156) target = $region28
      $region27: #{contractive_block.8} parent=23 // pred_region
        %p159 = scmp.lt.s32.totalorder %s11, 1
        %s160 = scalar_select %p159, %s11, 1
        %s161 = smul.addr %s160, 32
        %s162 = smul.addr %s161, 8
        %s163 = scalar_lea.vmem %s0, %s162
      $region28: #{contractive_block.8} parent=23 // pred_fallthru
        _
    $region24: #{contractive_block.8} parent=5 // pred_fallthru
      _
    %p164 = scmp.le.s32.totalorder 1, %s11
    %p165 = scmp.lt.s32.totalorder %s11, 3
    %p166 = pnand %p164, %p165
    %p167 = pneg %p166
    // Predicated region
    $region29: #{contractive_block.8} parent=5 // pred_check
      _
    $region30: #{contractive_block.8} parent=5 // pred_check_branch
      %169 = sbr.rel (%p166) target = $region32
    $region31: #{contractive_block.8} parent=5 // pred_region
      %s170 = ssub.s32 %s11, 1
      %p171 = scmp.lt.s32.totalorder %s16, 1
      %s172 = scalar_select %p171, %s16, 1
      %s173 = smul.addr %s172, 32
      %s174 = smul.addr %s173, 8
      %s175 = scalar_lea.vmem %s0, %s174
      %p176 = pneg %p37
      %p177 = pneg %p34
      %p178 = pneg %p58
      %p179 = pneg %p55
      %p180 = pneg %p79
      %p181 = pneg %p76
      %p182 = pneg %p105
      %p183 = pneg %p102
      %p184 = scmp.lt.s32.totalorder %s16, 1
      %s185 = scalar_select %p184, %s16, 1
      %s186 = smul.addr %s185, 32
      %s187 = smul.addr %s186, 8
      %s188 = scalar_lea.vmem %s3, %s187
      %p189 = pneg %p131
      %p190 = pneg %p128
      %p191 = scmp.lt.s32.totalorder %s16, 1
      %s192 = scalar_select %p191, %s16, 1
      %s193 = smul.addr %s192, 8
      %s194 = smul.addr %s193, 8
      %s195 = scalar_lea.vmem %s4, %s194
      %p196 = scmp.lt.s32.totalorder %s16, 1
      %s197 = scalar_select %p196, %s16, 1
      %s198 = smul.addr %s197, 32
      %s199 = smul.addr %s198, 8
      %s200 = scalar_lea.vmem %s0, %s199
      %p201 = scmp.lt.s32.totalorder %s16, 1
      %s202 = scalar_select %p201, %s16, 1
      %s203 = smul.addr %s202, 32
      %s204 = smul.addr %s203, 8
      %s205 = scalar_lea.vmem %s3, %s204
      %p206 = scmp.lt.s32.totalorder %s16, 1
      %s207 = scalar_select %p206, %s16, 1
      %s208 = smul.addr %s207, 8
      %s209 = smul.addr %s208, 8
      %s210 = scalar_lea.vmem %s4, %s209
      %v211 = vld [vmem:[%s200] sm:$0xff]
      %v212 = vld [vmem:[%s200 + $0x8] sm:$0xff]
      %v213 = vld [vmem:[%s200 + $0x10] sm:$0xff]
      %v214 = vld [vmem:[%s200 + $0x18] sm:$0xff]
      %v215 = vld [vmem:[%s200 + $0x20] sm:$0xff]
      %v216 = vld [vmem:[%s200 + $0x28] sm:$0xff]
      %v217 = vld [vmem:[%s200 + $0x30] sm:$0xff]
      %v218 = vld [vmem:[%s200 + $0x38] sm:$0xff]
      %v219 = vld [vmem:[%s200 + $0x40] sm:$0xff]
      %v220 = vld [vmem:[%s200 + $0x48] sm:$0xff]
      %v221 = vld [vmem:[%s200 + $0x50] sm:$0xff]
      %v222 = vld [vmem:[%s200 + $0x58] sm:$0xff]
      %v223 = vld [vmem:[%s200 + $0x60] sm:$0xff]
      %v224 = vld [vmem:[%s200 + $0x68] sm:$0xff]
      %v225 = vld [vmem:[%s200 + $0x70] sm:$0xff]
      %v226 = vld [vmem:[%s200 + $0x78] sm:$0xff]
      %v227 = vld [vmem:[%s200 + $0x80] sm:$0xff]
      %v228 = vld [vmem:[%s200 + $0x88] sm:$0xff]
      %v229 = vld [vmem:[%s200 + $0x90] sm:$0xff]
      %v230 = vld [vmem:[%s200 + $0x98] sm:$0xff]
      %v231 = vld [vmem:[%s200 + $0xa0] sm:$0xff]
      %v232 = vld [vmem:[%s200 + $0xa8] sm:$0xff]
      %v233 = vld [vmem:[%s200 + $0xb0] sm:$0xff]
      %v234 = vld [vmem:[%s200 + $0xb8] sm:$0xff]
      %v235 = vld [vmem:[%s200 + $0xc0] sm:$0xff]
      %v236 = vld [vmem:[%s200 + $0xc8] sm:$0xff]
      %v237 = vld [vmem:[%s200 + $0xd0] sm:$0xff]
      %v238 = vld [vmem:[%s200 + $0xd8] sm:$0xff]
      %v239 = vld [vmem:[%s200 + $0xe0] sm:$0xff]
      %v240 = vld [vmem:[%s200 + $0xe8] sm:$0xff]
      %v241 = vld [vmem:[%s200 + $0xf0] sm:$0xff]
      %v242 = vld [vmem:[%s200 + $0xf8] sm:$0xff]
      %v243 = vld [vmem:[%s1] sm:$0x1]
      %v245 = vperm.slane %v243, 0
      %v247 = vmul.f32 %v211, %v245
      %v248 = vmul.f32 %v212, %v245
      %v249 = vmul.f32 %v213, %v245
      %v250 = vmul.f32 %v214, %v245
      %v251 = vmul.f32 %v215, %v245
      %v252 = vmul.f32 %v216, %v245
      %v253 = vmul.f32 %v217, %v245
      %v254 = vmul.f32 %v218, %v245
      %v255 = vmul.f32 %v219, %v245
      %v256 = vmul.f32 %v220, %v245
      %v257 = vmul.f32 %v221, %v245
      %v258 = vmul.f32 %v222, %v245
      %v259 = vmul.f32 %v223, %v245
      %v260 = vmul.f32 %v224, %v245
      %v261 = vmul.f32 %v225, %v245
      %v262 = vmul.f32 %v226, %v245
      %v263 = vmul.f32 %v227, %v245
      %v264 = vmul.f32 %v228, %v245
      %v265 = vmul.f32 %v229, %v245
      %v266 = vmul.f32 %v230, %v245
      %v267 = vmul.f32 %v231, %v245
      %v268 = vmul.f32 %v232, %v245
      %v269 = vmul.f32 %v233, %v245
      %v270 = vmul.f32 %v234, %v245
      %v271 = vmul.f32 %v235, %v245
      %v272 = vmul.f32 %v236, %v245
      %v273 = vmul.f32 %v237, %v245
      %v274 = vmul.f32 %v238, %v245
      %v275 = vmul.f32 %v239, %v245
      %v276 = vmul.f32 %v240, %v245
      %v277 = vmul.f32 %v241, %v245
      %v278 = vmul.f32 %v242, %v245
      %v279 = vld [vmem:[%s2] sm:$0x1]
      %v281 = vperm.slane %v279, 0
      %v283 = vadd.f32 %v247, %v281
      %v284 = vadd.f32 %v248, %v281
      %v285 = vadd.f32 %v249, %v281
      %v286 = vadd.f32 %v250, %v281
      %v287 = vadd.f32 %v251, %v281
      %v288 = vadd.f32 %v252, %v281
      %v289 = vadd.f32 %v253, %v281
      %v290 = vadd.f32 %v254, %v281
      %v291 = vadd.f32 %v255, %v281
      %v292 = vadd.f32 %v256, %v281
      %v293 = vadd.f32 %v257, %v281
      %v294 = vadd.f32 %v258, %v281
      %v295 = vadd.f32 %v259, %v281
      %v296 = vadd.f32 %v260, %v281
      %v297 = vadd.f32 %v261, %v281
      %v298 = vadd.f32 %v262, %v281
      %v299 = vadd.f32 %v263, %v281
      %v300 = vadd.f32 %v264, %v281
      %v301 = vadd.f32 %v265, %v281
      %v302 = vadd.f32 %v266, %v281
      %v303 = vadd.f32 %v267, %v281
      %v304 = vadd.f32 %v268, %v281
      %v305 = vadd.f32 %v269, %v281
      %v306 = vadd.f32 %v270, %v281
      %v307 = vadd.f32 %v271, %v281
      %v308 = vadd.f32 %v272, %v281
      %v309 = vadd.f32 %v273, %v281
      %v310 = vadd.f32 %v274, %v281
      %v311 = vadd.f32 %v275, %v281
      %v312 = vadd.f32 %v276, %v281
      %v313 = vadd.f32 %v277, %v281
      %v314 = vadd.f32 %v278, %v281
      %v315 = vmax.f32 %v283, 0.0
      %v316 = vmax.f32 %v284, 0.0
      %v317 = vmax.f32 %v285, 0.0
      %v318 = vmax.f32 %v286, 0.0
      %v319 = vmax.f32 %v287, 0.0
      %v320 = vmax.f32 %v288, 0.0
      %v321 = vmax.f32 %v289, 0.0
      %v322 = vmax.f32 %v290, 0.0
      %v323 = vmax.f32 %v291, 0.0
      %v324 = vmax.f32 %v292, 0.0
      %v325 = vmax.f32 %v293, 0.0
      %v326 = vmax.f32 %v294, 0.0
      %v327 = vmax.f32 %v295, 0.0
      %v328 = vmax.f32 %v296, 0.0
      %v329 = vmax.f32 %v297, 0.0
      %v330 = vmax.f32 %v298, 0.0
      %v331 = vmax.f32 %v299, 0.0
      %v332 = vmax.f32 %v300, 0.0
      %v333 = vmax.f32 %v301, 0.0
      %v334 = vmax.f32 %v302, 0.0
      %v335 = vmax.f32 %v303, 0.0
      %v336 = vmax.f32 %v304, 0.0
      %v337 = vmax.f32 %v305, 0.0
      %v338 = vmax.f32 %v306, 0.0
      %v339 = vmax.f32 %v307, 0.0
      %v340 = vmax.f32 %v308, 0.0
      %v341 = vmax.f32 %v309, 0.0
      %v342 = vmax.f32 %v310, 0.0
      %v343 = vmax.f32 %v311, 0.0
      %v344 = vmax.f32 %v312, 0.0
      %v345 = vmax.f32 %v313, 0.0
      %v346 = vmax.f32 %v314, 0.0
      %vm347 = vcmask 64512
      %348 = vst.msk [vmem:[%s205] sm:$0xff] %vm347, %v315
      %349 = vst.msk [vmem:[%s205 + $0x8] sm:$0xff] %vm347, %v316
      %350 = vst.msk [vmem:[%s205 + $0x10] sm:$0xff] %vm347, %v317
      %351 = vst.msk [vmem:[%s205 + $0x18] sm:$0xff] %vm347, %v318
      %352 = vst.msk [vmem:[%s205 + $0x20] sm:$0xff] %vm347, %v319
      %353 = vst.msk [vmem:[%s205 + $0x28] sm:$0xff] %vm347, %v320
      %354 = vst.msk [vmem:[%s205 + $0x30] sm:$0xff] %vm347, %v321
      %355 = vst.msk [vmem:[%s205 + $0x38] sm:$0xff] %vm347, %v322
      %356 = vst.msk [vmem:[%s205 + $0x40] sm:$0xff] %vm347, %v323
      %357 = vst.msk [vmem:[%s205 + $0x48] sm:$0xff] %vm347, %v324
      %358 = vst.msk [vmem:[%s205 + $0x50] sm:$0xff] %vm347, %v325
      %359 = vst.msk [vmem:[%s205 + $0x58] sm:$0xff] %vm347, %v326
      %360 = vst.msk [vmem:[%s205 + $0x60] sm:$0xff] %vm347, %v327
      %361 = vst.msk [vmem:[%s205 + $0x68] sm:$0xff] %vm347, %v328
      %362 = vst.msk [vmem:[%s205 + $0x70] sm:$0xff] %vm347, %v329
      %363 = vst.msk [vmem:[%s205 + $0x78] sm:$0xff] %vm347, %v330
      %364 = vst.msk [vmem:[%s205 + $0x80] sm:$0xff] %vm347, %v331
      %365 = vst.msk [vmem:[%s205 + $0x88] sm:$0xff] %vm347, %v332
      %366 = vst.msk [vmem:[%s205 + $0x90] sm:$0xff] %vm347, %v333
      %367 = vst.msk [vmem:[%s205 + $0x98] sm:$0xff] %vm347, %v334
      %368 = vst.msk [vmem:[%s205 + $0xa0] sm:$0xff] %vm347, %v335
      %369 = vst.msk [vmem:[%s205 + $0xa8] sm:$0xff] %vm347, %v336
      %370 = vst.msk [vmem:[%s205 + $0xb0] sm:$0xff] %vm347, %v337
      %371 = vst.msk [vmem:[%s205 + $0xb8] sm:$0xff] %vm347, %v338
      %372 = vst.msk [vmem:[%s205 + $0xc0] sm:$0xff] %vm347, %v339
      %373 = vst.msk [vmem:[%s205 + $0xc8] sm:$0xff] %vm347, %v340
      %374 = vst.msk [vmem:[%s205 + $0xd0] sm:$0xff] %vm347, %v341
      %375 = vst.msk [vmem:[%s205 + $0xd8] sm:$0xff] %vm347, %v342
      %376 = vst.msk [vmem:[%s205 + $0xe0] sm:$0xff] %vm347, %v343
      %377 = vst.msk [vmem:[%s205 + $0xe8] sm:$0xff] %vm347, %v344
      %378 = vst.msk [vmem:[%s205 + $0xf0] sm:$0xff] %vm347, %v345
      %379 = vst.msk [vmem:[%s205 + $0xf8] sm:$0xff] %vm347, %v346
      %v380 = vsel %vm347, %v315, -inf
      %v381 = vsel %vm347, %v317, -inf
      %v382 = vmax.f32 %v380, %v381
      %v383 = vsel %vm347, %v316, -inf
      %v384 = vsel %vm347, %v318, -inf
      %v385 = vmax.f32 %v383, %v384
      %v386 = vsel %vm347, %v319, -inf
      %v387 = vsel %vm347, %v321, -inf
      %v388 = vmax.f32 %v386, %v387
      %v389 = vsel %vm347, %v320, -inf
      %v390 = vsel %vm347, %v322, -inf
      %v391 = vmax.f32 %v389, %v390
      %v392 = vsel %vm347, %v323, -inf
      %v393 = vsel %vm347, %v325, -inf
      %v394 = vmax.f32 %v392, %v393
      %v395 = vsel %vm347, %v324, -inf
      %v396 = vsel %vm347, %v326, -inf
      %v397 = vmax.f32 %v395, %v396
      %v398 = vsel %vm347, %v327, -inf
      %v399 = vsel %vm347, %v329, -inf
      %v400 = vmax.f32 %v398, %v399
      %v401 = vsel %vm347, %v328, -inf
      %v402 = vsel %vm347, %v330, -inf
      %v403 = vmax.f32 %v401, %v402
      %v404 = vsel %vm347, %v331, -inf
      %v405 = vsel %vm347, %v333, -inf
      %v406 = vmax.f32 %v404, %v405
      %v407 = vsel %vm347, %v332, -inf
      %v408 = vsel %vm347, %v334, -inf
      %v409 = vmax.f32 %v407, %v408
      %v410 = vsel %vm347, %v335, -inf
      %v411 = vsel %vm347, %v337, -inf
      %v412 = vmax.f32 %v410, %v411
      %v413 = vsel %vm347, %v336, -inf
      %v414 = vsel %vm347, %v338, -inf
      %v415 = vmax.f32 %v413, %v414
      %v416 = vsel %vm347, %v339, -inf
      %v417 = vsel %vm347, %v341, -inf
      %v418 = vmax.f32 %v416, %v417
      %v419 = vsel %vm347, %v340, -inf
      %v420 = vsel %vm347, %v342, -inf
      %v421 = vmax.f32 %v419, %v420
      %v422 = vsel %vm347, %v343, -inf
      %v423 = vsel %vm347, %v345, -inf
      %v424 = vmax.f32 %v422, %v423
      %v425 = vsel %vm347, %v344, -inf
      %v426 = vsel %vm347, %v346, -inf
      %v427 = vmax.f32 %v425, %v426
      %v444 = vrot.slane %v382, 2
      %v445 = vrot.slane %v382, 4
      %v446 = vrot.slane %v382, 6
      %v447 = vrot.slane %v385, 2
      %v448 = vrot.slane %v385, 4
      %v449 = vrot.slane %v385, 6
      %v450 = vrot.slane %v388, 2
      %v451 = vrot.slane %v388, 4
      %v452 = vrot.slane %v388, 6
      %v453 = vrot.slane %v391, 2
      %v454 = vrot.slane %v391, 4
      %v455 = vrot.slane %v391, 6
      %v456 = vrot.slane %v394, 2
      %v457 = vrot.slane %v394, 4
      %v458 = vrot.slane %v394, 6
      %v459 = vrot.slane %v397, 2
      %v460 = vrot.slane %v397, 4
      %v461 = vrot.slane %v397, 6
      %v462 = vrot.slane %v400, 2
      %v463 = vrot.slane %v400, 4
      %v464 = vrot.slane %v400, 6
      %v465 = vrot.slane %v403, 2
      %v466 = vrot.slane %v403, 4
      %v467 = vrot.slane %v403, 6
      %v468 = vrot.slane %v406, 2
      %v469 = vrot.slane %v406, 4
      %v470 = vrot.slane %v406, 6
      %v471 = vrot.slane %v409, 2
      %v472 = vrot.slane %v409, 4
      %v473 = vrot.slane %v409, 6
      %v474 = vrot.slane %v412, 2
      %v475 = vrot.slane %v412, 4
      %v476 = vrot.slane %v412, 6
      %v477 = vrot.slane %v415, 2
      %v478 = vrot.slane %v415, 4
      %v479 = vrot.slane %v415, 6
      %v480 = vrot.slane %v418, 2
      %v481 = vrot.slane %v418, 4
      %v482 = vrot.slane %v418, 6
      %v483 = vrot.slane %v421, 2
      %v484 = vrot.slane %v421, 4
      %v485 = vrot.slane %v421, 6
      %v486 = vrot.slane %v424, 2
      %v487 = vrot.slane %v424, 4
      %v488 = vrot.slane %v424, 6
      %v489 = vrot.slane %v427, 2
      %v490 = vrot.slane %v427, 4
      %v491 = vrot.slane %v427, 6
      %vm540 = vcmask 58368
      %v541 = vsel %vm540, %v382, -inf
      %v542 = vrot.slane %v541, 4
      %v543 = vmax.f32 %v541, %v542
      %v544 = vrot.slane %v543, 2
      %v545 = vmax.f32 %v543, %v544
      %v546 = vrot.slane %v545, 1
      %v547 = vmax.f32 %v545, %v546
      %v548 = vsel %vm540, %v444, -inf
      %v549 = vrot.slane %v548, 4
      %v550 = vmax.f32 %v548, %v549
      %v551 = vrot.slane %v550, 2
      %v552 = vmax.f32 %v550, %v551
      %v553 = vrot.slane %v552, 1
      %v554 = vmax.f32 %v552, %v553
      %v555 = vsel %vm540, %v445, -inf
      %v556 = vrot.slane %v555, 4
      %v557 = vmax.f32 %v555, %v556
      %v558 = vrot.slane %v557, 2
      %v559 = vmax.f32 %v557, %v558
      %v560 = vrot.slane %v559, 1
      %v561 = vmax.f32 %v559, %v560
      %v562 = vsel %vm540, %v446, -inf
      %v563 = vrot.slane %v562, 4
      %v564 = vmax.f32 %v562, %v563
      %v565 = vrot.slane %v564, 2
      %v566 = vmax.f32 %v564, %v565
      %v567 = vrot.slane %v566, 1
      %v568 = vmax.f32 %v566, %v567
      %v569 = vsel %vm540, %v385, -inf
      %v570 = vrot.slane %v569, 4
      %v571 = vmax.f32 %v569, %v570
      %v572 = vrot.slane %v571, 2
      %v573 = vmax.f32 %v571, %v572
      %v574 = vrot.slane %v573, 1
      %v575 = vmax.f32 %v573, %v574
      %v576 = vsel %vm540, %v447, -inf
      %v577 = vrot.slane %v576, 4
      %v578 = vmax.f32 %v576, %v577
      %v579 = vrot.slane %v578, 2
      %v580 = vmax.f32 %v578, %v579
      %v581 = vrot.slane %v580, 1
      %v582 = vmax.f32 %v580, %v581
      %v583 = vsel %vm540, %v448, -inf
      %v584 = vrot.slane %v583, 4
      %v585 = vmax.f32 %v583, %v584
      %v586 = vrot.slane %v585, 2
      %v587 = vmax.f32 %v585, %v586
      %v588 = vrot.slane %v587, 1
      %v589 = vmax.f32 %v587, %v588
      %v590 = vsel %vm540, %v449, -inf
      %v591 = vrot.slane %v590, 4
      %v592 = vmax.f32 %v590, %v591
      %v593 = vrot.slane %v592, 2
      %v594 = vmax.f32 %v592, %v593
      %v595 = vrot.slane %v594, 1
      %v596 = vmax.f32 %v594, %v595
      %v597 = vsel %vm540, %v388, -inf
      %v598 = vrot.slane %v597, 4
      %v599 = vmax.f32 %v597, %v598
      %v600 = vrot.slane %v599, 2
      %v601 = vmax.f32 %v599, %v600
      %v602 = vrot.slane %v601, 1
      %v603 = vmax.f32 %v601, %v602
      %v604 = vsel %vm540, %v450, -inf
      %v605 = vrot.slane %v604, 4
      %v606 = vmax.f32 %v604, %v605
      %v607 = vrot.slane %v606, 2
      %v608 = vmax.f32 %v606, %v607
      %v609 = vrot.slane %v608, 1
      %v610 = vmax.f32 %v608, %v609
      %v611 = vsel %vm540, %v451, -inf
      %v612 = vrot.slane %v611, 4
      %v613 = vmax.f32 %v611, %v612
      %v614 = vrot.slane %v613, 2
      %v615 = vmax.f32 %v613, %v614
      %v616 = vrot.slane %v615, 1
      %v617 = vmax.f32 %v615, %v616
      %v618 = vsel %vm540, %v452, -inf
      %v619 = vrot.slane %v618, 4
      %v620 = vmax.f32 %v618, %v619
      %v621 = vrot.slane %v620, 2
      %v622 = vmax.f32 %v620, %v621
      %v623 = vrot.slane %v622, 1
      %v624 = vmax.f32 %v622, %v623
      %v625 = vsel %vm540, %v391, -inf
      %v626 = vrot.slane %v625, 4
      %v627 = vmax.f32 %v625, %v626
      %v628 = vrot.slane %v627, 2
      %v629 = vmax.f32 %v627, %v628
      %v630 = vrot.slane %v629, 1
      %v631 = vmax.f32 %v629, %v630
      %v632 = vsel %vm540, %v453, -inf
      %v633 = vrot.slane %v632, 4
      %v634 = vmax.f32 %v632, %v633
      %v635 = vrot.slane %v634, 2
      %v636 = vmax.f32 %v634, %v635
      %v637 = vrot.slane %v636, 1
      %v638 = vmax.f32 %v636, %v637
      %v639 = vsel %vm540, %v454, -inf
      %v640 = vrot.slane %v639, 4
      %v641 = vmax.f32 %v639, %v640
      %v642 = vrot.slane %v641, 2
      %v643 = vmax.f32 %v641, %v642
      %v644 = vrot.slane %v643, 1
      %v645 = vmax.f32 %v643, %v644
      %v646 = vsel %vm540, %v455, -inf
      %v647 = vrot.slane %v646, 4
      %v648 = vmax.f32 %v646, %v647
      %v649 = vrot.slane %v648, 2
      %v650 = vmax.f32 %v648, %v649
      %v651 = vrot.slane %v650, 1
      %v652 = vmax.f32 %v650, %v651
      %v653 = vsel %vm540, %v394, -inf
      %v654 = vrot.slane %v653, 4
      %v655 = vmax.f32 %v653, %v654
      %v656 = vrot.slane %v655, 2
      %v657 = vmax.f32 %v655, %v656
      %v658 = vrot.slane %v657, 1
      %v659 = vmax.f32 %v657, %v658
      %v660 = vsel %vm540, %v456, -inf
      %v661 = vrot.slane %v660, 4
      %v662 = vmax.f32 %v660, %v661
      %v663 = vrot.slane %v662, 2
      %v664 = vmax.f32 %v662, %v663
      %v665 = vrot.slane %v664, 1
      %v666 = vmax.f32 %v664, %v665
      %v667 = vsel %vm540, %v457, -inf
      %v668 = vrot.slane %v667, 4
      %v669 = vmax.f32 %v667, %v668
      %v670 = vrot.slane %v669, 2
      %v671 = vmax.f32 %v669, %v670
      %v672 = vrot.slane %v671, 1
      %v673 = vmax.f32 %v671, %v672
      %v674 = vsel %vm540, %v458, -inf
      %v675 = vrot.slane %v674, 4
      %v676 = vmax.f32 %v674, %v675
      %v677 = vrot.slane %v676, 2
      %v678 = vmax.f32 %v676, %v677
      %v679 = vrot.slane %v678, 1
      %v680 = vmax.f32 %v678, %v679
      %v681 = vsel %vm540, %v397, -inf
      %v682 = vrot.slane %v681, 4
      %v683 = vmax.f32 %v681, %v682
      %v684 = vrot.slane %v683, 2
      %v685 = vmax.f32 %v683, %v684
      %v686 = vrot.slane %v685, 1
      %v687 = vmax.f32 %v685, %v686
      %v688 = vsel %vm540, %v459, -inf
      %v689 = vrot.slane %v688, 4
      %v690 = vmax.f32 %v688, %v689
      %v691 = vrot.slane %v690, 2
      %v692 = vmax.f32 %v690, %v691
      %v693 = vrot.slane %v692, 1
      %v694 = vmax.f32 %v692, %v693
      %v695 = vsel %vm540, %v460, -inf
      %v696 = vrot.slane %v695, 4
      %v697 = vmax.f32 %v695, %v696
      %v698 = vrot.slane %v697, 2
      %v699 = vmax.f32 %v697, %v698
      %v700 = vrot.slane %v699, 1
      %v701 = vmax.f32 %v699, %v700
      %v702 = vsel %vm540, %v461, -inf
      %v703 = vrot.slane %v702, 4
      %v704 = vmax.f32 %v702, %v703
      %v705 = vrot.slane %v704, 2
      %v706 = vmax.f32 %v704, %v705
      %v707 = vrot.slane %v706, 1
      %v708 = vmax.f32 %v706, %v707
      %v709 = vsel %vm540, %v400, -inf
      %v710 = vrot.slane %v709, 4
      %v711 = vmax.f32 %v709, %v710
      %v712 = vrot.slane %v711, 2
      %v713 = vmax.f32 %v711, %v712
      %v714 = vrot.slane %v713, 1
      %v715 = vmax.f32 %v713, %v714
      %v716 = vsel %vm540, %v462, -inf
      %v717 = vrot.slane %v716, 4
      %v718 = vmax.f32 %v716, %v717
      %v719 = vrot.slane %v718, 2
      %v720 = vmax.f32 %v718, %v719
      %v721 = vrot.slane %v720, 1
      %v722 = vmax.f32 %v720, %v721
      %v723 = vsel %vm540, %v463, -inf
      %v724 = vrot.slane %v723, 4
      %v725 = vmax.f32 %v723, %v724
      %v726 = vrot.slane %v725, 2
      %v727 = vmax.f32 %v725, %v726
      %v728 = vrot.slane %v727, 1
      %v729 = vmax.f32 %v727, %v728
      %v730 = vsel %vm540, %v464, -inf
      %v731 = vrot.slane %v730, 4
      %v732 = vmax.f32 %v730, %v731
      %v733 = vrot.slane %v732, 2
      %v734 = vmax.f32 %v732, %v733
      %v735 = vrot.slane %v734, 1
      %v736 = vmax.f32 %v734, %v735
      %v737 = vsel %vm540, %v403, -inf
      %v738 = vrot.slane %v737, 4
      %v739 = vmax.f32 %v737, %v738
      %v740 = vrot.slane %v739, 2
      %v741 = vmax.f32 %v739, %v740
      %v742 = vrot.slane %v741, 1
      %v743 = vmax.f32 %v741, %v742
      %v744 = vsel %vm540, %v465, -inf
      %v745 = vrot.slane %v744, 4
      %v746 = vmax.f32 %v744, %v745
      %v747 = vrot.slane %v746, 2
      %v748 = vmax.f32 %v746, %v747
      %v749 = vrot.slane %v748, 1
      %v750 = vmax.f32 %v748, %v749
      %v751 = vsel %vm540, %v466, -inf
      %v752 = vrot.slane %v751, 4
      %v753 = vmax.f32 %v751, %v752
      %v754 = vrot.slane %v753, 2
      %v755 = vmax.f32 %v753, %v754
      %v756 = vrot.slane %v755, 1
      %v757 = vmax.f32 %v755, %v756
      %v758 = vsel %vm540, %v467, -inf
      %v759 = vrot.slane %v758, 4
      %v760 = vmax.f32 %v758, %v759
      %v761 = vrot.slane %v760, 2
      %v762 = vmax.f32 %v760, %v761
      %v763 = vrot.slane %v762, 1
      %v764 = vmax.f32 %v762, %v763
      %v765 = vsel %vm540, %v406, -inf
      %v766 = vrot.slane %v765, 4
      %v767 = vmax.f32 %v765, %v766
      %v768 = vrot.slane %v767, 2
      %v769 = vmax.f32 %v767, %v768
      %v770 = vrot.slane %v769, 1
      %v771 = vmax.f32 %v769, %v770
      %v772 = vsel %vm540, %v468, -inf
      %v773 = vrot.slane %v772, 4
      %v774 = vmax.f32 %v772, %v773
      %v775 = vrot.slane %v774, 2
      %v776 = vmax.f32 %v774, %v775
      %v777 = vrot.slane %v776, 1
      %v778 = vmax.f32 %v776, %v777
      %v779 = vsel %vm540, %v469, -inf
      %v780 = vrot.slane %v779, 4
      %v781 = vmax.f32 %v779, %v780
      %v782 = vrot.slane %v781, 2
      %v783 = vmax.f32 %v781, %v782
      %v784 = vrot.slane %v783, 1
      %v785 = vmax.f32 %v783, %v784
      %v786 = vsel %vm540, %v470, -inf
      %v787 = vrot.slane %v786, 4
      %v788 = vmax.f32 %v786, %v787
      %v789 = vrot.slane %v788, 2
      %v790 = vmax.f32 %v788, %v789
      %v791 = vrot.slane %v790, 1
      %v792 = vmax.f32 %v790, %v791
      %v793 = vsel %vm540, %v409, -inf
      %v794 = vrot.slane %v793, 4
      %v795 = vmax.f32 %v793, %v794
      %v796 = vrot.slane %v795, 2
      %v797 = vmax.f32 %v795, %v796
      %v798 = vrot.slane %v797, 1
      %v799 = vmax.f32 %v797, %v798
      %v800 = vsel %vm540, %v471, -inf
      %v801 = vrot.slane %v800, 4
      %v802 = vmax.f32 %v800, %v801
      %v803 = vrot.slane %v802, 2
      %v804 = vmax.f32 %v802, %v803
      %v805 = vrot.slane %v804, 1
      %v806 = vmax.f32 %v804, %v805
      %v807 = vsel %vm540, %v472, -inf
      %v808 = vrot.slane %v807, 4
      %v809 = vmax.f32 %v807, %v808
      %v810 = vrot.slane %v809, 2
      %v811 = vmax.f32 %v809, %v810
      %v812 = vrot.slane %v811, 1
      %v813 = vmax.f32 %v811, %v812
      %v814 = vsel %vm540, %v473, -inf
      %v815 = vrot.slane %v814, 4
      %v816 = vmax.f32 %v814, %v815
      %v817 = vrot.slane %v816, 2
      %v818 = vmax.f32 %v816, %v817
      %v819 = vrot.slane %v818, 1
      %v820 = vmax.f32 %v818, %v819
      %v821 = vsel %vm540, %v412, -inf
      %v822 = vrot.slane %v821, 4
      %v823 = vmax.f32 %v821, %v822
      %v824 = vrot.slane %v823, 2
      %v825 = vmax.f32 %v823, %v824
      %v826 = vrot.slane %v825, 1
      %v827 = vmax.f32 %v825, %v826
      %v828 = vsel %vm540, %v474, -inf
      %v829 = vrot.slane %v828, 4
      %v830 = vmax.f32 %v828, %v829
      %v831 = vrot.slane %v830, 2
      %v832 = vmax.f32 %v830, %v831
      %v833 = vrot.slane %v832, 1
      %v834 = vmax.f32 %v832, %v833
      %v835 = vsel %vm540, %v475, -inf
      %v836 = vrot.slane %v835, 4
      %v837 = vmax.f32 %v835, %v836
      %v838 = vrot.slane %v837, 2
      %v839 = vmax.f32 %v837, %v838
      %v840 = vrot.slane %v839, 1
      %v841 = vmax.f32 %v839, %v840
      %v842 = vsel %vm540, %v476, -inf
      %v843 = vrot.slane %v842, 4
      %v844 = vmax.f32 %v842, %v843
      %v845 = vrot.slane %v844, 2
      %v846 = vmax.f32 %v844, %v845
      %v847 = vrot.slane %v846, 1
      %v848 = vmax.f32 %v846, %v847
      %v849 = vsel %vm540, %v415, -inf
      %v850 = vrot.slane %v849, 4
      %v851 = vmax.f32 %v849, %v850
      %v852 = vrot.slane %v851, 2
      %v853 = vmax.f32 %v851, %v852
      %v854 = vrot.slane %v853, 1
      %v855 = vmax.f32 %v853, %v854
      %v856 = vsel %vm540, %v477, -inf
      %v857 = vrot.slane %v856, 4
      %v858 = vmax.f32 %v856, %v857
      %v859 = vrot.slane %v858, 2
      %v860 = vmax.f32 %v858, %v859
      %v861 = vrot.slane %v860, 1
      %v862 = vmax.f32 %v860, %v861
      %v863 = vsel %vm540, %v478, -inf
      %v864 = vrot.slane %v863, 4
      %v865 = vmax.f32 %v863, %v864
      %v866 = vrot.slane %v865, 2
      %v867 = vmax.f32 %v865, %v866
      %v868 = vrot.slane %v867, 1
      %v869 = vmax.f32 %v867, %v868
      %v870 = vsel %vm540, %v479, -inf
      %v871 = vrot.slane %v870, 4
      %v872 = vmax.f32 %v870, %v871
      %v873 = vrot.slane %v872, 2
      %v874 = vmax.f32 %v872, %v873
      %v875 = vrot.slane %v874, 1
      %v876 = vmax.f32 %v874, %v875
      %v877 = vsel %vm540, %v418, -inf
      %v878 = vrot.slane %v877, 4
      %v879 = vmax.f32 %v877, %v878
      %v880 = vrot.slane %v879, 2
      %v881 = vmax.f32 %v879, %v880
      %v882 = vrot.slane %v881, 1
      %v883 = vmax.f32 %v881, %v882
      %v884 = vsel %vm540, %v480, -inf
      %v885 = vrot.slane %v884, 4
      %v886 = vmax.f32 %v884, %v885
      %v887 = vrot.slane %v886, 2
      %v888 = vmax.f32 %v886, %v887
      %v889 = vrot.slane %v888, 1
      %v890 = vmax.f32 %v888, %v889
      %v891 = vsel %vm540, %v481, -inf
      %v892 = vrot.slane %v891, 4
      %v893 = vmax.f32 %v891, %v892
      %v894 = vrot.slane %v893, 2
      %v895 = vmax.f32 %v893, %v894
      %v896 = vrot.slane %v895, 1
      %v897 = vmax.f32 %v895, %v896
      %v898 = vsel %vm540, %v482, -inf
      %v899 = vrot.slane %v898, 4
      %v900 = vmax.f32 %v898, %v899
      %v901 = vrot.slane %v900, 2
      %v902 = vmax.f32 %v900, %v901
      %v903 = vrot.slane %v902, 1
      %v904 = vmax.f32 %v902, %v903
      %v905 = vsel %vm540, %v421, -inf
      %v906 = vrot.slane %v905, 4
      %v907 = vmax.f32 %v905, %v906
      %v908 = vrot.slane %v907, 2
      %v909 = vmax.f32 %v907, %v908
      %v910 = vrot.slane %v909, 1
      %v911 = vmax.f32 %v909, %v910
      %v912 = vsel %vm540, %v483, -inf
      %v913 = vrot.slane %v912, 4
      %v914 = vmax.f32 %v912, %v913
      %v915 = vrot.slane %v914, 2
      %v916 = vmax.f32 %v914, %v915
      %v917 = vrot.slane %v916, 1
      %v918 = vmax.f32 %v916, %v917
      %v919 = vsel %vm540, %v484, -inf
      %v920 = vrot.slane %v919, 4
      %v921 = vmax.f32 %v919, %v920
      %v922 = vrot.slane %v921, 2
      %v923 = vmax.f32 %v921, %v922
      %v924 = vrot.slane %v923, 1
      %v925 = vmax.f32 %v923, %v924
      %v926 = vsel %vm540, %v485, -inf
      %v927 = vrot.slane %v926, 4
      %v928 = vmax.f32 %v926, %v927
      %v929 = vrot.slane %v928, 2
      %v930 = vmax.f32 %v928, %v929
      %v931 = vrot.slane %v930, 1
      %v932 = vmax.f32 %v930, %v931
      %v933 = vsel %vm540, %v424, -inf
      %v934 = vrot.slane %v933, 4
      %v935 = vmax.f32 %v933, %v934
      %v936 = vrot.slane %v935, 2
      %v937 = vmax.f32 %v935, %v936
      %v938 = vrot.slane %v937, 1
      %v939 = vmax.f32 %v937, %v938
      %v940 = vsel %vm540, %v486, -inf
      %v941 = vrot.slane %v940, 4
      %v942 = vmax.f32 %v940, %v941
      %v943 = vrot.slane %v942, 2
      %v944 = vmax.f32 %v942, %v943
      %v945 = vrot.slane %v944, 1
      %v946 = vmax.f32 %v944, %v945
      %v947 = vsel %vm540, %v487, -inf
      %v948 = vrot.slane %v947, 4
      %v949 = vmax.f32 %v947, %v948
      %v950 = vrot.slane %v949, 2
      %v951 = vmax.f32 %v949, %v950
      %v952 = vrot.slane %v951, 1
      %v953 = vmax.f32 %v951, %v952
      %v954 = vsel %vm540, %v488, -inf
      %v955 = vrot.slane %v954, 4
      %v956 = vmax.f32 %v954, %v955
      %v957 = vrot.slane %v956, 2
      %v958 = vmax.f32 %v956, %v957
      %v959 = vrot.slane %v958, 1
      %v960 = vmax.f32 %v958, %v959
      %v961 = vsel %vm540, %v427, -inf
      %v962 = vrot.slane %v961, 4
      %v963 = vmax.f32 %v961, %v962
      %v964 = vrot.slane %v963, 2
      %v965 = vmax.f32 %v963, %v964
      %v966 = vrot.slane %v965, 1
      %v967 = vmax.f32 %v965, %v966
      %v968 = vsel %vm540, %v489, -inf
      %v969 = vrot.slane %v968, 4
      %v970 = vmax.f32 %v968, %v969
      %v971 = vrot.slane %v970, 2
      %v972 = vmax.f32 %v970, %v971
      %v973 = vrot.slane %v972, 1
      %v974 = vmax.f32 %v972, %v973
      %v975 = vsel %vm540, %v490, -inf
      %v976 = vrot.slane %v975, 4
      %v977 = vmax.f32 %v975, %v976
      %v978 = vrot.slane %v977, 2
      %v979 = vmax.f32 %v977, %v978
      %v980 = vrot.slane %v979, 1
      %v981 = vmax.f32 %v979, %v980
      %v982 = vsel %vm540, %v491, -inf
      %v983 = vrot.slane %v982, 4
      %v984 = vmax.f32 %v982, %v983
      %v985 = vrot.slane %v984, 2
      %v986 = vmax.f32 %v984, %v985
      %v987 = vrot.slane %v986, 1
      %v988 = vmax.f32 %v986, %v987
      %vm1053 = vcmask 1041409
      %v1054 = vsel %vm1053, %v554, %v547
      %vm1055 = vcmask 1042434
      %v1056 = vsel %vm1055, %v561, %v1054
      %vm1057 = vcmask 1043459
      %v1058 = vsel %vm1057, %v568, %v1056
      %vm1059 = vcmask 1044484
      %v1060 = vsel %vm1059, %v575, %v1058
      %vm1061 = vcmask 1045509
      %v1062 = vsel %vm1061, %v582, %v1060
      %vm1063 = vcmask 1046534
      %v1064 = vsel %vm1063, %v589, %v1062
      %vm1065 = vcmask 1047559
      %v1066 = vsel %vm1065, %v596, %v1064
      %v1067 = vsel %vm1053, %v610, %v603
      %v1068 = vsel %vm1055, %v617, %v1067
      %v1069 = vsel %vm1057, %v624, %v1068
      %v1070 = vsel %vm1059, %v631, %v1069
      %v1071 = vsel %vm1061, %v638, %v1070
      %v1072 = vsel %vm1063, %v645, %v1071
      %v1073 = vsel %vm1065, %v652, %v1072
      %v1074 = vsel %vm1053, %v666, %v659
      %v1075 = vsel %vm1055, %v673, %v1074
      %v1076 = vsel %vm1057, %v680, %v1075
      %v1077 = vsel %vm1059, %v687, %v1076
      %v1078 = vsel %vm1061, %v694, %v1077
      %v1079 = vsel %vm1063, %v701, %v1078
      %v1080 = vsel %vm1065, %v708, %v1079
      %v1081 = vsel %vm1053, %v722, %v715
      %v1082 = vsel %vm1055, %v729, %v1081
      %v1083 = vsel %vm1057, %v736, %v1082
      %v1084 = vsel %vm1059, %v743, %v1083
      %v1085 = vsel %vm1061, %v750, %v1084
      %v1086 = vsel %vm1063, %v757, %v1085
      %v1087 = vsel %vm1065, %v764, %v1086
      %v1088 = vsel %vm1053, %v778, %v771
      %v1089 = vsel %vm1055, %v785, %v1088
      %v1090 = vsel %vm1057, %v792, %v1089
      %v1091 = vsel %vm1059, %v799, %v1090
      %v1092 = vsel %vm1061, %v806, %v1091
      %v1093 = vsel %vm1063, %v813, %v1092
      %v1094 = vsel %vm1065, %v820, %v1093
      %v1095 = vsel %vm1053, %v834, %v827
      %v1096 = vsel %vm1055, %v841, %v1095
      %v1097 = vsel %vm1057, %v848, %v1096
      %v1098 = vsel %vm1059, %v855, %v1097
      %v1099 = vsel %vm1061, %v862, %v1098
      %v1100 = vsel %vm1063, %v869, %v1099
      %v1101 = vsel %vm1065, %v876, %v1100
      %v1102 = vsel %vm1053, %v890, %v883
      %v1103 = vsel %vm1055, %v897, %v1102
      %v1104 = vsel %vm1057, %v904, %v1103
      %v1105 = vsel %vm1059, %v911, %v1104
      %v1106 = vsel %vm1061, %v918, %v1105
      %v1107 = vsel %vm1063, %v925, %v1106
      %v1108 = vsel %vm1065, %v932, %v1107
      %v1109 = vsel %vm1053, %v946, %v939
      %v1110 = vsel %vm1055, %v953, %v1109
      %v1111 = vsel %vm1057, %v960, %v1110
      %v1112 = vsel %vm1059, %v967, %v1111
      %v1113 = vsel %vm1061, %v974, %v1112
      %v1114 = vsel %vm1063, %v981, %v1113
      %v1115 = vsel %vm1065, %v988, %v1114
      %1124 = vst.msk [vmem:[%s210] sm:$0xff] %vm347, %v1066
      %1125 = vst.msk [vmem:[%s210 + $0x8] sm:$0xff] %vm347, %v1073
      %1126 = vst.msk [vmem:[%s210 + $0x10] sm:$0xff] %vm347, %v1080
      %1127 = vst.msk [vmem:[%s210 + $0x18] sm:$0xff] %vm347, %v1087
      %1128 = vst.msk [vmem:[%s210 + $0x20] sm:$0xff] %vm347, %v1094
      %1129 = vst.msk [vmem:[%s210 + $0x28] sm:$0xff] %vm347, %v1101
      %1130 = vst.msk [vmem:[%s210 + $0x30] sm:$0xff] %vm347, %v1108
      %1131 = vst.msk [vmem:[%s210 + $0x38] sm:$0xff] %vm347, %v1115
      %p1132 = scmp.lt.s32.totalorder %s16, 1
      %s1133 = scalar_select %p1132, %s16, 1
      %s1134 = smul.addr %s1133, 32
      %s1135 = smul.addr %s1134, 8
      %s1136 = scalar_lea.vmem %s3, %s1135
      %p1137 = scmp.lt.s32.totalorder %s16, 1
      %s1138 = scalar_select %p1137, %s16, 1
      %s1139 = smul.addr %s1138, 8
      %s1140 = smul.addr %s1139, 8
      %s1141 = scalar_lea.vmem %s4, %s1140
      // Predicated region
      $region33: #{contractive_block.8} parent=31 // pred_check
        %p1142 = pneg %p102
      $region34: #{contractive_block.8} parent=31 // pred_check_branch
        %1144 = sbr.rel (%p1142) target = $region36
      $region35: #{contractive_block.8} parent=31 // pred_region
        _
      $region36: #{contractive_block.8} parent=31 // pred_fallthru
        _
      // Predicated region
      $region37: #{contractive_block.8} parent=31 // pred_check
        %p1145 = pneg %p128
      $region38: #{contractive_block.8} parent=31 // pred_check_branch
        %1147 = sbr.rel (%p1145) target = $region40
      $region39: #{contractive_block.8} parent=31 // pred_region
        _
      $region40: #{contractive_block.8} parent=31 // pred_fallthru
        _
    $region32: #{contractive_block.8} parent=5 // pred_fallthru
      _
    %p1148 = scmp.le.s32.totalorder 2, %s11
    // Predicated region
    $region41: #{contractive_block.8} parent=5 // pred_check
      %p1149 = pneg %p1148
    $region42: #{contractive_block.8} parent=5 // pred_check_branch
      %1151 = sbr.rel (%p1149) target = $region44
    $region43: #{contractive_block.8} parent=5 // pred_region
      %s1152 = ssub.s32 %s11, 2
      // Predicated region
      $region45: #{contractive_block.8} parent=43 // pred_check
        %p1153 = pneg %p108
      $region46: #{contractive_block.8} parent=43 // pred_check_branch
        %1155 = sbr.rel (%p1153) target = $region48
      $region47: #{contractive_block.8} parent=43 // pred_region
        %p1156 = scmp.lt.s32.totalorder %s17, 1
        %s1157 = scalar_select %p1156, %s17, 1
        %s1158 = smul.addr %s1157, 32
        %s1159 = smul.addr %s1158, 8
        %s1160 = scalar_lea.vmem %s3, %s1159
      $region48: #{contractive_block.8} parent=43 // pred_fallthru
        _
      // Predicated region
      $region49: #{contractive_block.8} parent=43 // pred_check
        %p1161 = pneg %p134
      $region50: #{contractive_block.8} parent=43 // pred_check_branch
        %1163 = sbr.rel (%p1161) target = $region52
      $region51: #{contractive_block.8} parent=43 // pred_region
        %p1164 = scmp.lt.s32.totalorder %s17, 1
        %s1165 = scalar_select %p1164, %s17, 1
        %s1166 = smul.addr %s1165, 8
        %s1167 = smul.addr %s1166, 8
        %s1168 = scalar_lea.vmem %s4, %s1167
      $region52: #{contractive_block.8} parent=43 // pred_fallthru
        _
    $region44: #{contractive_block.8} parent=5 // pred_fallthru
      _
  $region6: #{contractive_block.8} parent=0 // loop_footer
    %s15 = sadd.s32 1, %s11
  $region7: #{contractive_block.8} parent=0 // loop_footer_branch
    %10 = sbr.rel target = $region3
  $region8: #{contractive_block.8} parent=0 // loop_exit
    _

// kernel: contractive_block.9
$region0: #{contractive_block.9}
  #allocation0 [shape = 'u32[]', space=smem, size = 0x4, offset = 0x4, fixed_abs, tag = 'smem constant byte address 0x4 - core index']
  #allocation1 [shape = 'u32[72,128]{1,0:T(1,128)}', space=vmem, size = 0x9000, scoped, tag = 'internal scratch']
  %s0 = inlined_call_operand.vmem [shape: f32[2,8,8,8], index: 0, kind: input, shape index: {}]
  %s1 = inlined_call_operand.vmem [shape: bf16[72,16], index: 1, kind: input, shape index: {}]
  %s2 = inlined_call_operand.vmem [shape: f32[1,16], index: 2, kind: input, shape index: {}]
  %s3 = inlined_call_operand.vmem [shape: f32[2,8,8,16], index: 3, kind: output, shape index: {0}]
  %s4 = inlined_call_operand.vmem [shape: f32[2,2,16], index: 4, kind: output, shape index: {1}]
  %5 = xla_tuple %s3, %s4
  %s6 = sld [smem:[#allocation0]]
  $region53: #{contractive_block.9} parent=0
    _
  %s8 = ssub.s32 1, %s6
  %s9 = scalar_select 0, %s8, %s6
  loop: start=0, step=1, limit=4
  $region2: #{contractive_block.9} parent=0 // loop_pre_header
    _
  $region3: #{contractive_block.9} parent=0 // loop_header
    %s11 = sphi 0, %s15
    %p12 = scmp.ge.s32.totalorder %s11, 4
    %s21 = sphi 0, %s23
    %s24 = sphi 0, %s21
    %s25 = sphi 0, %s24
    %s41 = sphi 0, %s25
    %s45 = sphi 0, %s45
    %s47 = sphi 0, %s45
    %s48 = sphi 0, %s47
    %s62 = sphi 0, %s48
    %s66 = sphi 0, %s66
    %s68 = sphi 0, %s66
    %s69 = sphi 0, %s68
    %s83 = sphi 0, %s69
    %s89 = sphi 0, %s91
    %s92 = sphi 0, %s89
    %s93 = sphi 0, %s92
    %s109 = sphi 0, %s93
    %s115 = sphi 0, %s117
    %s118 = sphi 0, %s115
    %s119 = sphi 0, %s118
    %s135 = sphi 0, %s119
  $region4: #{contractive_block.9} parent=0 // loop_header_branch
    %14 = sbr.rel (%p12) target = $region8
  $region5: #{contractive_block.9} parent=0 // loop_body
    %s16 = ssub.s32 %s11, 1
    %s17 = ssub.s32 %s11, 2
    %s18 = sadd.s32 %s11, 1
    %s19 = ssub.s32 %s11, %s18
    %p20 = scmp.eq.s32.totalorder %s19, 0
    %s22 = sadd.s32 %s21, 1
    %s23 = scalar_select %p20, %s21, %s22
    %p26 = pneg %p20
    %p27 = scmp.eq.s32.totalorder %s11, 1
    %p28 = por %p26, %p27
    %p29 = scmp.ne.s32.totalorder %s21, %s24
    %p30 = scmp.eq.s32.totalorder %s11, 0
    %p31 = por %p29, %p30
    %p32 = scmp.ne.s32.totalorder %s21, %s24
    %p33 = scmp.eq.s32.totalorder %s16, 1
    %p34 = por %p32, %p33
    %p35 = scmp.ne.s32.totalorder %s24, %s25
    %p36 = scmp.eq.s32.totalorder %s16, 0
    %p37 = por %p35, %p36
    %p38 = scmp.ne.s32.totalorder %s24, %s25
    %p39 = scmp.eq.s32.totalorder %s17, 1
    %p40 = por %p38, %p39
    %p42 = scmp.ne.s32.totalorder %s25, %s41
    %p43 = scmp.eq.s32.totalorder %s17, 0
    %p44 = por %p42, %p43
    %s46 = sadd.s32 %s45, 1
    %p49 = scmp.eq.s32.totalorder %s11, 1
    %p50 = scmp.ne.s32.totalorder %s45, %s47
    %p51 = scmp.eq.s32.totalorder %s11, 0
    %p52 = por %p50, %p51
    %p53 = scmp.ne.s32.totalorder %s45, %s47
    %p54 = scmp.eq.s32.totalorder %s16, 1
    %p55 = por %p53, %p54
    %p56 = scmp.ne.s32.totalorder %s47, %s48
    %p57 = scmp.eq.s32.totalorder %s16, 0
    %p58 = por %p56, %p57
    %p59 = scmp.ne.s32.totalorder %s47, %s48
    %p60 = scmp.eq.s32.totalorder %s17, 1
    %p61 = por %p59, %p60
    %p63 = scmp.ne.s32.totalorder %s48, %s62
    %p64 = scmp.eq.s32.totalorder %s17, 0
    %p65 = por %p63, %p64
    %s67 = sadd.s32 %s66, 1
    %p70 = scmp.eq.s32.totalorder %s11, 1
    %p71 = scmp.ne.s32.totalorder %s66, %s68
    %p72 = scmp.eq.s32.totalorder %s11, 0
    %p73 = por %p71, %p72
    %p74 = scmp.ne.s32.totalorder %s66, %s68
    %p75 = scmp.eq.s32.totalorder %s16, 1
    %p76 = por %p74, %p75
    %p77 = scmp.ne.s32.totalorder %s68, %s69
    %p78 = scmp.eq.s32.totalorder %s16, 0
    %p79 = por %p77, %p78
    %p80 = scmp.ne.s32.totalorder %s68, %s69
    %p81 = scmp.eq.s32.totalorder %s17, 1
    %p82 = por %p80, %p81
    %p84 = scmp.ne.s32.totalorder %s69, %s83
    %p85 = scmp.eq.s32.totalorder %s17, 0
    %p86 = por %p84, %p85
    %s87 = ssub.s32 %s11, %s18
    %p88 = scmp.eq.s32.totalorder %s87, 0
    %s90 = sadd.s32 %s89, 1
    %s91 = scalar_select %p88, %s89, %s90
    %p94 = pneg %p88
    %p95 = scmp.eq.s32.totalorder %s11, 1
    %p96 = por %p94, %p95
    %p97 = scmp.ne.s32.totalorder %s89, %s92
    %p98 = scmp.eq.s32.totalorder %s11, 0
    %p99 = por %p97, %p98
    %p100 = scmp.ne.s32.totalorder %s89, %s92
    %p101 = scmp.eq.s32.totalorder %s16, 1
    %p102 = por %p100, %p101
    %p103 = scmp.ne.s32.totalorder %s92, %s93
    %p104 = scmp.eq.s32.totalorder %s16, 0
    %p105 = por %p103, %p104
    %p106 = scmp.ne.s32.totalorder %s92, %s93
    %p107 = scmp.eq.s32.totalorder %s17, 1
    %p108 = por %p106, %p107
    %p110 = scmp.ne.s32.totalorder %s93, %s109
    %p111 = scmp.eq.s32.totalorder %s17, 0
    %p112 = por %p110, %p111
    %s113 = ssub.s32 %s11, %s18
    %p114 = scmp.eq.s32.totalorder %s113, 0
    %s116 = sadd.s32 %s115, 1
    %s117 = scalar_select %p114, %s115, %s116
    %p120 = pneg %p114
    %p121 = scmp.eq.s32.totalorder %s11, 1
    %p122 = por %p120, %p121
    %p123 = scmp.ne.s32.totalorder %s115, %s118
    %p124 = scmp.eq.s32.totalorder %s11, 0
    %p125 = por %p123, %p124
    %p126 = scmp.ne.s32.totalorder %s115, %s118
    %p127 = scmp.eq.s32.totalorder %s16, 1
    %p128 = por %p126, %p127
    %p129 = scmp.ne.s32.totalorder %s118, %s119
    %p130 = scmp.eq.s32.totalorder %s16, 0
    %p131 = por %p129, %p130
    %p132 = scmp.ne.s32.totalorder %s118, %s119
    %p133 = scmp.eq.s32.totalorder %s17, 1
    %p134 = por %p132, %p133
    %p136 = scmp.ne.s32.totalorder %s119, %s135
    %p137 = scmp.eq.s32.totalorder %s17, 0
    %p138 = por %p136, %p137
    %p139 = scmp.le.s32.totalorder 1, %s11
    %p140 = scmp.lt.s32.totalorder %s11, 3
    %p141 = pnand %p139, %p140
    %p142 = pneg %p141
    // Predicated region
    $region9: #{contractive_block.9} parent=5 // pred_check
      _
    $region10: #{contractive_block.9} parent=5 // pred_check_branch
      %144 = sbr.rel (%p141) target = $region12
    $region11: #{contractive_block.9} parent=5 // pred_region
      %s145 = ssub.s32 %s11, 1
      // Predicated region
      $region13: #{contractive_block.9} parent=11 // pred_check
        %p146 = pneg %p58
      $region14: #{contractive_block.9} parent=11 // pred_check_branch
        %148 = sbr.rel (%p146) target = $region16
      $region15: #{contractive_block.9} parent=11 // pred_region
        _
      $region16: #{contractive_block.9} parent=11 // pred_fallthru
        _
      // Predicated region
      $region17: #{contractive_block.9} parent=11 // pred_check
        %p149 = pneg %p79
      $region18: #{contractive_block.9} parent=11 // pred_check_branch
        %151 = sbr.rel (%p149) target = $region20
      $region19: #{contractive_block.9} parent=11 // pred_region
        _
      $region20: #{contractive_block.9} parent=11 // pred_fallthru
        _
    $region12: #{contractive_block.9} parent=5 // pred_fallthru
      _
    %p152 = scmp.lt.s32.totalorder %s11, 2
    // Predicated region
    $region21: #{contractive_block.9} parent=5 // pred_check
      %p153 = pneg %p152
    $region22: #{contractive_block.9} parent=5 // pred_check_branch
      %155 = sbr.rel (%p153) target = $region24
    $region23: #{contractive_block.9} parent=5 // pred_region
      // Predicated region
      $region25: #{contractive_block.9} parent=23 // pred_check
        %p156 = pneg %p31
      $region26: #{contractive_block.9} parent=23 // pred_check_branch
        %158 = sbr.rel (%p156) target = $region28
      $region27: #{contractive_block.9} parent=23 // pred_region
        %p159 = scmp.lt.s32.totalorder %s11, 1
        %s160 = scalar_select %p159, %s11, 1
        %s161 = smul.addr %s160, 8
        %s162 = smul.addr %s161, 8
        %s163 = scalar_lea.vmem %s0, %s162
      $region28: #{contractive_block.9} parent=23 // pred_fallthru
        _
    $region24: #{contractive_block.9} parent=5 // pred_fallthru
      _
    %p164 = scmp.le.s32.totalorder 1, %s11
    %p165 = scmp.lt.s32.totalorder %s11, 3
    %p166 = pnand %p164, %p165
    %p167 = pneg %p166
    // Predicated region
    $region29: #{contractive_block.9} parent=5 // pred_check
      _
    $region30: #{contractive_block.9} parent=5 // pred_check_branch
      %169 = sbr.rel (%p166) target = $region32
    $region31: #{contractive_block.9} parent=5 // pred_region
      %s170 = ssub.s32 %s11, 1
      %p171 = scmp.lt.s32.totalorder %s16, 1
      %s172 = scalar_select %p171, %s16, 1
      %s173 = smul.addr %s172, 8
      %s174 = smul.addr %s173, 8
      %s175 = scalar_lea.vmem %s0, %s174
      %p176 = pneg %p37
      %p177 = pneg %p34
      %p178 = pneg %p58
      %p179 = pneg %p55
      %p180 = pneg %p79
      %p181 = pneg %p76
      %p182 = pneg %p105
      %p183 = pneg %p102
      %p184 = scmp.lt.s32.totalorder %s16, 1
      %s185 = scalar_select %p184, %s16, 1
      %s186 = smul.addr %s185, 8
      %s187 = smul.addr %s186, 8
      %s188 = scalar_lea.vmem %s3, %s187
      %p189 = pneg %p131
      %p190 = pneg %p128
      %p191 = scmp.lt.s32.totalorder %s16, 1
      %s192 = scalar_select %p191, %s16, 1
      %s193 = smul.addr %s192, 2
      %s194 = scalar_lea.vmem %s4, %s193
      %p195 = scmp.lt.s32.totalorder %s16, 1
      %s196 = scalar_select %p195, %s16, 1
      %s197 = smul.addr %s196, 8
      %s198 = smul.addr %s197, 8
      %s199 = scalar_lea.vmem %s0, %s198
      %p200 = scmp.lt.s32.totalorder %s16, 1
      %s201 = scalar_select %p200, %s16, 1
      %s202 = smul.addr %s201, 8
      %s203 = smul.addr %s202, 8
      %s204 = scalar_lea.vmem %s3, %s203
      %p205 = scmp.lt.s32.totalorder %s16, 1
      %s206 = scalar_select %p205, %s16, 1
      %s207 = smul.addr %s206, 2
      %s208 = scalar_lea.vmem %s4, %s207
      %v210 = vld [vmem:[%s199] sm:$0xff]
      %v211 = vld [vmem:[%s199 + $0x8] sm:$0xff]
      %v212 = vld [vmem:[%s199 + $0x10] sm:$0xff]
      %v213 = vld [vmem:[%s199 + $0x18] sm:$0xff]
      %v214 = vld [vmem:[%s199 + $0x20] sm:$0xff]
      %v215 = vld [vmem:[%s199 + $0x28] sm:$0xff]
      %v216 = vld [vmem:[%s199 + $0x30] sm:$0xff]
      %v217 = vld [vmem:[%s199 + $0x38] sm:$0xff]
      %v218 = vpack.c.bf16 %v210, %v210
      %v219 = vpack.c.bf16 %v211, %v211
      %v220 = vpack.c.bf16 %v212, %v212
      %v221 = vpack.c.bf16 %v213, %v213
      %v222 = vpack.c.bf16 %v214, %v214
      %v223 = vpack.c.bf16 %v215, %v215
      %v224 = vpack.c.bf16 %v216, %v216
      %v225 = vpack.c.bf16 %v217, %v217
      %v234 = vunpack.c.l.b16 %v218
      %v235 = vunpack.c.l.b16 %v219
      %v236 = vunpack.c.l.b16 %v220
      %v237 = vunpack.c.l.b16 %v221
      %v238 = vunpack.c.l.b16 %v222
      %v239 = vunpack.c.l.b16 %v223
      %v240 = vunpack.c.l.b16 %v224
      %v241 = vunpack.c.l.b16 %v225
      %v242 = vpack.c.b16 %v234, %v234
      %v243 = vpack.c.b16 %v235, %v235
      %v244 = vpack.c.b16 %v236, %v236
      %v245 = vpack.c.b16 %v237, %v237
      %v246 = vpack.c.b16 %v238, %v238
      %v247 = vpack.c.b16 %v239, %v239
      %v248 = vpack.c.b16 %v240, %v240
      %v249 = vpack.c.b16 %v241, %v241
      %v251 = vshrl.u32 %v242, 16
      %v253 = vrot.slane %v251, 7
      %v254 = vshll.u32 %v242, 16
      %v256 = vor.u32 %v253, %v254
      %v258 = vshrl.u32 %v243, 16
      %v260 = vrot.slane %v258, 7
      %v261 = vshll.u32 %v243, 16
      %v263 = vor.u32 %v260, %v261
      %v265 = vshrl.u32 %v244, 16
      %v267 = vrot.slane %v265, 7
      %v268 = vshll.u32 %v244, 16
      %v270 = vor.u32 %v267, %v268
      %v272 = vshrl.u32 %v245, 16
      %v274 = vrot.slane %v272, 7
      %v275 = vshll.u32 %v245, 16
      %v277 = vor.u32 %v274, %v275
      %v279 = vshrl.u32 %v246, 16
      %v281 = vrot.slane %v279, 7
      %v282 = vshll.u32 %v246, 16
      %v284 = vor.u32 %v281, %v282
      %v286 = vshrl.u32 %v247, 16
      %v288 = vrot.slane %v286, 7
      %v289 = vshll.u32 %v247, 16
      %v291 = vor.u32 %v288, %v289
      %v293 = vshrl.u32 %v248, 16
      %v295 = vrot.slane %v293, 7
      %v296 = vshll.u32 %v248, 16
      %v298 = vor.u32 %v295, %v296
      %v300 = vshrl.u32 %v249, 16
      %v302 = vrot.slane %v300, 7
      %v303 = vshll.u32 %v249, 16
      %v305 = vor.u32 %v302, %v303
      %vm314 = vcmask 1040384
      %vm315 = vsmask.f32 256
      %vm316 = vmand %vm314, %vm315
      %v317 = vsel %vm316, 0, %v256
      %v318 = vsel %vm316, 0, %v263
      %v319 = vsel %vm316, 0, %v270
      %v320 = vsel %vm316, 0, %v277
      %v321 = vsel %vm316, 0, %v284
      %v322 = vsel %vm316, 0, %v291
      %v323 = vsel %vm316, 0, %v298
      %v324 = vsel %vm316, 0, %v305
      %v325 = vrot.slane %v254, 1
      %v326 = vor.u32 %v251, %v325
      %v327 = vrot.slane %v261, 1
      %v328 = vor.u32 %v258, %v327
      %v329 = vrot.slane %v268, 1
      %v330 = vor.u32 %v265, %v329
      %v331 = vrot.slane %v275, 1
      %v332 = vor.u32 %v272, %v331
      %v333 = vrot.slane %v282, 1
      %v334 = vor.u32 %v279, %v333
      %v335 = vrot.slane %v289, 1
      %v336 = vor.u32 %v286, %v335
      %v337 = vrot.slane %v296, 1
      %v338 = vor.u32 %v293, %v337
      %v339 = vrot.slane %v303, 1
      %v340 = vor.u32 %v300, %v339
      %vm349 = vcmask 1043456
      %vm350 = vsmask.f32 3328
      %vm351 = vmand %vm349, %vm350
      %v352 = vsel %vm351, %v326, 0
      %v353 = vsel %vm351, %v328, 0
      %v354 = vsel %vm351, %v330, 0
      %v355 = vsel %vm351, %v332, 0
      %v356 = vsel %vm351, %v334, 0
      %v357 = vsel %vm351, %v336, 0
      %v358 = vsel %vm351, %v338, 0
      %v359 = vsel %vm351, %v340, 0
      %360 = vrot.lane.b32.xlu0 %v242, 8
      %v361 = vpop.permute.xlu0 %360
      %362 = vrot.lane.b32.xlu0 %v243, 8
      %v363 = vpop.permute.xlu0 %362
      %364 = vrot.lane.b32.xlu0 %v244, 8
      %v365 = vpop.permute.xlu0 %364
      %366 = vrot.lane.b32.xlu0 %v245, 8
      %v367 = vpop.permute.xlu0 %366
      %368 = vrot.lane.b32.xlu0 %v246, 8
      %v369 = vpop.permute.xlu0 %368
      %370 = vrot.lane.b32.xlu0 %v247, 8
      %v371 = vpop.permute.xlu0 %370
      %372 = vrot.lane.b32.xlu0 %v248, 8
      %v373 = vpop.permute.xlu0 %372
      %374 = vrot.lane.b32.xlu0 %v249, 8
      %v375 = vpop.permute.xlu0 %374
      %384 = vrot.lane.b32.xlu0 %v352, 16
      %v385 = vpop.permute.xlu0 %384
      %386 = vrot.lane.b32.xlu0 %v353, 16
      %v387 = vpop.permute.xlu0 %386
      %388 = vrot.lane.b32.xlu0 %v354, 16
      %v389 = vpop.permute.xlu0 %388
      %390 = vrot.lane.b32.xlu0 %v355, 16
      %v391 = vpop.permute.xlu0 %390
      %392 = vrot.lane.b32.xlu0 %v356, 16
      %v393 = vpop.permute.xlu0 %392
      %394 = vrot.lane.b32.xlu0 %v357, 16
      %v395 = vpop.permute.xlu0 %394
      %396 = vrot.lane.b32.xlu0 %v358, 16
      %v397 = vpop.permute.xlu0 %396
      %398 = vrot.lane.b32.xlu0 %v359, 16
      %v399 = vpop.permute.xlu0 %398
      %vm400 = vcmask 64512
      %v403 = vsel %vm400, %v317, %v361
      %v406 = vsel %vm400, %v318, %v363
      %v409 = vsel %vm400, %v319, %v365
      %v412 = vsel %vm400, %v320, %v367
      %v415 = vsel %vm400, %v321, %v369
      %v418 = vsel %vm400, %v322, %v371
      %v421 = vsel %vm400, %v323, %v373
      %v424 = vsel %vm400, %v324, %v375
      %vm425 = vcmask 130048
      %v427 = vsel %vm425, %v403, %v385
      %v429 = vsel %vm425, %v406, %v387
      %v431 = vsel %vm425, %v409, %v389
      %v433 = vsel %vm425, %v412, %v391
      %v435 = vsel %vm425, %v415, %v393
      %v437 = vsel %vm425, %v418, %v395
      %v439 = vsel %vm425, %v421, %v397
      %v441 = vsel %vm425, %v424, %v399
      %450 = vrot.lane.b32.xlu0 %v427, 24
      %v451 = vpop.permute.xlu0 %450
      %452 = vrot.lane.b32.xlu0 %v429, 24
      %v453 = vpop.permute.xlu0 %452
      %454 = vrot.lane.b32.xlu0 %v431, 24
      %v455 = vpop.permute.xlu0 %454
      %456 = vrot.lane.b32.xlu0 %v433, 24
      %v457 = vpop.permute.xlu0 %456
      %458 = vrot.lane.b32.xlu0 %v435, 24
      %v459 = vpop.permute.xlu0 %458
      %460 = vrot.lane.b32.xlu0 %v437, 24
      %v461 = vpop.permute.xlu0 %460
      %462 = vrot.lane.b32.xlu0 %v439, 24
      %v463 = vpop.permute.xlu0 %462
      %464 = vrot.lane.b32.xlu0 %v441, 24
      %v465 = vpop.permute.xlu0 %464
      %467 = vrot.lane.b32.xlu0 %v429, 48
      %v468 = vpop.permute.xlu0 %467
      %469 = vrot.lane.b32.xlu0 %v431, 48
      %v470 = vpop.permute.xlu0 %469
      %471 = vrot.lane.b32.xlu0 %v433, 48
      %v472 = vpop.permute.xlu0 %471
      %473 = vrot.lane.b32.xlu0 %v435, 48
      %v474 = vpop.permute.xlu0 %473
      %475 = vrot.lane.b32.xlu0 %v437, 48
      %v476 = vpop.permute.xlu0 %475
      %477 = vrot.lane.b32.xlu0 %v439, 48
      %v478 = vpop.permute.xlu0 %477
      %479 = vrot.lane.b32.xlu0 %v441, 48
      %v480 = vpop.permute.xlu0 %479
      %481 = vrot.lane.b32.xlu0 0, 48
      %v482 = vpop.permute.xlu0 %481
      %vm483 = vcmask 195584
      %v486 = vsel %vm483, 0, %v451
      %v488 = vsel %vm483, %v427, %v453
      %v490 = vsel %vm483, %v429, %v455
      %v492 = vsel %vm483, %v431, %v457
      %v494 = vsel %vm483, %v433, %v459
      %v496 = vsel %vm483, %v435, %v461
      %v498 = vsel %vm483, %v437, %v463
      %v500 = vsel %vm483, %v439, %v465
      %vm501 = vcmask 392192
      %v503 = vsel %vm501, %v486, %v468
      %v505 = vsel %vm501, %v488, %v470
      %v507 = vsel %vm501, %v490, %v472
      %v509 = vsel %vm501, %v492, %v474
      %v511 = vsel %vm501, %v494, %v476
      %v513 = vsel %vm501, %v496, %v478
      %v515 = vsel %vm501, %v498, %v480
      %v517 = vsel %vm501, %v500, %v482
      %v518 = vld [vmem:[%s1] sm:$0xf]
      %v519 = vld [vmem:[%s1 + $0x4] sm:$0xf]
      %v520 = vld [vmem:[%s1 + $0x8] sm:$0xf]
      %v521 = vld [vmem:[%s1 + $0xc] sm:$0xf]
      %v522 = vld [vmem:[%s1 + $0x10] sm:$0xf]
      %v523 = vld [vmem:[%s1 + $0x14] sm:$0xf]
      %v524 = vld [vmem:[%s1 + $0x18] sm:$0xf]
      %v525 = vld [vmem:[%s1 + $0x1c] sm:$0xf]
      %v526 = vld [vmem:[%s1 + $0x20] sm:$0xf]
      %v527 = vld [vmem:[%s2] sm:$0x1]
      %v529 = vperm.slane %v527, 0
      %v539 = vunpack.c.l.b16 %v503
      %v540 = vunpack.c.l.b16 %v505
      %v541 = vunpack.c.l.b16 %v507
      %v542 = vunpack.c.l.b16 %v509
      %v543 = vunpack.c.l.b16 %v511
      %v544 = vunpack.c.l.b16 %v513
      %v545 = vunpack.c.l.b16 %v515
      %v546 = vunpack.c.l.b16 %v517
      %v547 = vpack.c.b16 %v540, %v539
      %v548 = vpack.c.b16 %v542, %v541
      %v549 = vpack.c.b16 %v544, %v543
      %v550 = vpack.c.b16 %v546, %v545
      %v560 = vunpack.c.l.b16 %v518
      %v561 = vunpack.c.l.b16 %v519
      %v562 = vunpack.c.l.b16 %v520
      %v563 = vunpack.c.l.b16 %v521
      %v564 = vunpack.c.l.b16 %v522
      %v565 = vunpack.c.l.b16 %v523
      %v566 = vunpack.c.l.b16 %v524
      %v567 = vunpack.c.l.b16 %v525
      %v568 = vunpack.c.l.b16 %v526
      %v569 = vpack.c.b16 %v561, %v560
      %v570 = vpack.c.b16 %v563, %v562
      %v571 = vpack.c.b16 %v565, %v564
      %v572 = vpack.c.b16 %v567, %v566
      %v573 = vpack.c.b16 %v568, %v568
      %vm578 = vcmask 588800
      %v580 = vsel %vm578, %v547, 0
      %v583 = vsel %vm578, %v548, 0
      %v586 = vsel %vm578, %v549, 0
      %v589 = vsel %vm578, %v550, 0
      %vm591 = vcmask 1043456
      %v593 = vsel %vm591, %v573, 0
      %595 = vmatpush.bf16.msra.mxu0 0
      %596 = vmatpush.bf16.msra.mxu0 0
      %597 = vmatpush.bf16.msra.mxu0 0
      %598 = vmatpush.bf16.msra.mxu0 %v593
      %599 = vmatpush.bf16.msra.mxu0 %v572
      %600 = vmatpush.bf16.msra.mxu0 %v571
      %601 = vmatpush.bf16.msra.mxu0 %v570
      %602 = vmatpush.bf16.msra.mxu0 %v569
      %603 = vmatmul.bf16.gmra.mxu0 %v580
      %v604 = vpop.f32.mrf.mxu0
      %v605 = vadd.f32 %v529, %v604
      %v606 = vpop.f32.mrf.mxu0
      %v607 = vadd.f32 %v529, %v606
      %608 = vmatmul.bf16.gmra.mxu0 %v583
      %v609 = vpop.f32.mrf.mxu0
      %v610 = vadd.f32 %v529, %v609
      %v611 = vpop.f32.mrf.mxu0
      %v612 = vadd.f32 %v529, %v611
      %613 = vmatmul.bf16.gmra.mxu0 %v586
      %v614 = vpop.f32.mrf.mxu0
      %v615 = vadd.f32 %v529, %v614
      %v616 = vpop.f32.mrf.mxu0
      %v617 = vadd.f32 %v529, %v616
      %618 = vmatmul.bf16.gmra.mxu0 %v589
      %v619 = vpop.f32.mrf.mxu0
      %v620 = vadd.f32 %v529, %v619
      %v621 = vpop.f32.mrf.mxu0
      %v622 = vadd.f32 %v529, %v621
      %623 = vdwg.mxu0
      %624 = vst.msk [vmem:[%s204] sm:$0xff] %vm425, %v605
      %625 = vst.msk [vmem:[%s204 + $0x8] sm:$0xff] %vm425, %v607
      %626 = vst.msk [vmem:[%s204 + $0x10] sm:$0xff] %vm425, %v610
      %627 = vst.msk [vmem:[%s204 + $0x18] sm:$0xff] %vm425, %v612
      %628 = vst.msk [vmem:[%s204 + $0x20] sm:$0xff] %vm425, %v615
      %629 = vst.msk [vmem:[%s204 + $0x28] sm:$0xff] %vm425, %v617
      %630 = vst.msk [vmem:[%s204 + $0x30] sm:$0xff] %vm425, %v620
      %631 = vst.msk [vmem:[%s204 + $0x38] sm:$0xff] %vm425, %v622
      %v632 = vsel %vm425, %v605, 0.0
      %v633 = vsel %vm425, %v607, 0.0
      %v634 = vadd.f32 %v632, %v633
      %v635 = vsel %vm425, %v610, 0.0
      %v636 = vadd.f32 %v634, %v635
      %v637 = vsel %vm425, %v612, 0.0
      %v638 = vadd.f32 %v636, %v637
      %v639 = vsel %vm425, %v615, 0.0
      %v640 = vadd.f32 %v638, %v639
      %v641 = vsel %vm425, %v617, 0.0
      %v642 = vadd.f32 %v640, %v641
      %v643 = vsel %vm425, %v620, 0.0
      %v644 = vadd.f32 %v642, %v643
      %v645 = vsel %vm425, %v622, 0.0
      %v646 = vadd.f32 %v644, %v645
      %v647 = vrot.slane %v646, 4
      %v648 = vadd.f32 %v646, %v647
      %v649 = vrot.slane %v648, 2
      %v650 = vadd.f32 %v648, %v649
      %v651 = vrot.slane %v650, 1
      %v652 = vadd.f32 %v650, %v651
      %v653 = vmul.f32 %v605, %v605
      %v654 = vmul.f32 %v607, %v607
      %v655 = vmul.f32 %v610, %v610
      %v656 = vmul.f32 %v612, %v612
      %v657 = vmul.f32 %v615, %v615
      %v658 = vmul.f32 %v617, %v617
      %v659 = vmul.f32 %v620, %v620
      %v660 = vmul.f32 %v622, %v622
      %v661 = vsel %vm425, %v653, 0.0
      %v662 = vsel %vm425, %v654, 0.0
      %v663 = vadd.f32 %v661, %v662
      %v664 = vsel %vm425, %v655, 0.0
      %v665 = vadd.f32 %v663, %v664
      %v666 = vsel %vm425, %v656, 0.0
      %v667 = vadd.f32 %v665, %v666
      %v668 = vsel %vm425, %v657, 0.0
      %v669 = vadd.f32 %v667, %v668
      %v670 = vsel %vm425, %v658, 0.0
      %v671 = vadd.f32 %v669, %v670
      %v672 = vsel %vm425, %v659, 0.0
      %v673 = vadd.f32 %v671, %v672
      %v674 = vsel %vm425, %v660, 0.0
      %v675 = vadd.f32 %v673, %v674
      %v676 = vrot.slane %v675, 4
      %v677 = vadd.f32 %v675, %v676
      %v678 = vrot.slane %v677, 2
      %v679 = vadd.f32 %v677, %v678
      %v680 = vrot.slane %v679, 1
      %v681 = vadd.f32 %v679, %v680
      %vm682 = vcmask 1040384
      %v683 = vsel %vm682, %v652, %v681
      %vm684 = vcmask 123904
      %685 = vst.msk [vmem:[%s208] sm:$0x3] %vm684, %v683
      %p686 = scmp.lt.s32.totalorder %s16, 1
      %s687 = scalar_select %p686, %s16, 1
      %s688 = smul.addr %s687, 8
      %s689 = smul.addr %s688, 8
      %s690 = scalar_lea.vmem %s3, %s689
      %p691 = scmp.lt.s32.totalorder %s16, 1
      %s692 = scalar_select %p691, %s16, 1
      %s693 = smul.addr %s692, 2
      %s694 = scalar_lea.vmem %s4, %s693
      // Predicated region
      $region33: #{contractive_block.9} parent=31 // pred_check
        %p695 = pneg %p102
      $region34: #{contractive_block.9} parent=31 // pred_check_branch
        %697 = sbr.rel (%p695) target = $region36
      $region35: #{contractive_block.9} parent=31 // pred_region
        _
      $region36: #{contractive_block.9} parent=31 // pred_fallthru
        _
      // Predicated region
      $region37: #{contractive_block.9} parent=31 // pred_check
        %p698 = pneg %p128
      $region38: #{contractive_block.9} parent=31 // pred_check_branch
        %700 = sbr.rel (%p698) target = $region40
      $region39: #{contractive_block.9} parent=31 // pred_region
        _
      $region40: #{contractive_block.9} parent=31 // pred_fallthru
        _
    $region32: #{contractive_block.9} parent=5 // pred_fallthru
      _
    %p701 = scmp.le.s32.totalorder 2, %s11
    // Predicated region
    $region41: #{contractive_block.9} parent=5 // pred_check
      %p702 = pneg %p701
    $region42: #{contractive_block.9} parent=5 // pred_check_branch
      %704 = sbr.rel (%p702) target = $region44
    $region43: #{contractive_block.9} parent=5 // pred_region
      %s705 = ssub.s32 %s11, 2
      // Predicated region
      $region45: #{contractive_block.9} parent=43 // pred_check
        %p706 = pneg %p108
      $region46: #{contractive_block.9} parent=43 // pred_check_branch
        %708 = sbr.rel (%p706) target = $region48
      $region47: #{contractive_block.9} parent=43 // pred_region
        %p709 = scmp.lt.s32.totalorder %s17, 1
        %s710 = scalar_select %p709, %s17, 1
        %s711 = smul.addr %s710, 8
        %s712 = smul.addr %s711, 8
        %s713 = scalar_lea.vmem %s3, %s712
      $region48: #{contractive_block.9} parent=43 // pred_fallthru
        _
      // Predicated region
      $region49: #{contractive_block.9} parent=43 // pred_check
        %p714 = pneg %p134
      $region50: #{contractive_block.9} parent=43 // pred_check_branch
        %716 = sbr.rel (%p714) target = $region52
      $region51: #{contractive_block.9} parent=43 // pred_region
        %p717 = scmp.lt.s32.totalorder %s17, 1
        %s718 = scalar_select %p717, %s17, 1
        %s719 = smul.addr %s718, 2
        %s720 = scalar_lea.vmem %s4, %s719
      $region52: #{contractive_block.9} parent=43 // pred_fallthru
        _
    $region44: #{contractive_block.9} parent=5 // pred_fallthru
      _
  $region6: #{contractive_block.9} parent=0 // loop_footer
    %s15 = sadd.s32 1, %s11
  $region7: #{contractive_block.9} parent=0 // loop_footer_branch
    %10 = sbr.rel target = $region3
  $region8: #{contractive_block.9} parent=0 // loop_exit
    _

// kernel: contractive_block.7
$region0: #{contractive_block.7}
  #allocation0 [shape = 'u32[]', space=smem, size = 0x4, offset = 0x4, fixed_abs, tag = 'smem constant byte address 0x4 - core index']
  #allocation1 [shape = 'u32[72,128]{1,0:T(1,128)}', space=vmem, size = 0x9000, scoped, tag = 'internal scratch']
  %s0 = inlined_call_operand.vmem [shape: f32[2,16,16,8], index: 0, kind: input, shape index: {}]
  %s1 = inlined_call_operand.vmem [shape: bf16[72,8], index: 1, kind: input, shape index: {}]
  %s2 = inlined_call_operand.vmem [shape: f32[1,8], index: 2, kind: input, shape index: {}]
  %s3 = inlined_call_operand.vmem [shape: f32[1,8], index: 3, kind: input, shape index: {}]
  %s4 = inlined_call_operand.vmem [shape: f32[1,8], index: 4, kind: input, shape index: {}]
  %s5 = inlined_call_operand.vmem [shape: f32[2,16,16,8], index: 5, kind: output, shape index: {0}]
  %s6 = inlined_call_operand.vmem [shape: f32[2,2,8], index: 6, kind: output, shape index: {1}]
  %7 = xla_tuple %s5, %s6
  %s8 = sld [smem:[#allocation0]]
  $region61: #{contractive_block.7} parent=0
    _
  %s10 = ssub.s32 1, %s8
  %s11 = scalar_select 0, %s10, %s8
  loop: start=0, step=1, limit=4
  $region2: #{contractive_block.7} parent=0 // loop_pre_header
    _
  $region3: #{contractive_block.7} parent=0 // loop_header
    %s13 = sphi 0, %s17
    %p14 = scmp.ge.s32.totalorder %s13, 4
    %s23 = sphi 0, %s25
    %s26 = sphi 0, %s23
    %s27 = sphi 0, %s26
    %s43 = sphi 0, %s27
    %s47 = sphi 0, %s47
    %s49 = sphi 0, %s47
    %s50 = sphi 0, %s49
    %s64 = sphi 0, %s50
    %s68 = sphi 0, %s68
    %s70 = sphi 0, %s68
    %s71 = sphi 0, %s70
    %s85 = sphi 0, %s71
    %s89 = sphi 0, %s89
    %s91 = sphi 0, %s89
    %s92 = sphi 0, %s91
    %s106 = sphi 0, %s92
    %s110 = sphi 0, %s110
    %s112 = sphi 0, %s110
    %s113 = sphi 0, %s112
    %s127 = sphi 0, %s113
    %s133 = sphi 0, %s135
    %s136 = sphi 0, %s133
    %s137 = sphi 0, %s136
    %s153 = sphi 0, %s137
    %s159 = sphi 0, %s161
    %s162 = sphi 0, %s159
    %s163 = sphi 0, %s162
    %s179 = sphi 0, %s163
  $region4: #{contractive_block.7} parent=0 // loop_header_branch
    %16 = sbr.rel (%p14) target = $region8
  $region5: #{contractive_block.7} parent=0 // loop_body
    %s18 = ssub.s32 %s13, 1
    %s19 = ssub.s32 %s13, 2
    %s20 = sadd.s32 %s13, 1
    %s21 = ssub.s32 %s13, %s20
    %p22 = scmp.eq.s32.totalorder %s21, 0
    %s24 = sadd.s32 %s23, 1
    %s25 = scalar_select %p22, %s23, %s24
    %p28 = pneg %p22
    %p29 = scmp.eq.s32.totalorder %s13, 1
    %p30 = por %p28, %p29
    %p31 = scmp.ne.s32.totalorder %s23, %s26
    %p32 = scmp.eq.s32.totalorder %s13, 0
    %p33 = por %p31, %p32
    %p34 = scmp.ne.s32.totalorder %s23, %s26
    %p35 = scmp.eq.s32.totalorder %s18, 1
    %p36 = por %p34, %p35
    %p37 = scmp.ne.s32.totalorder %s26, %s27
    %p38 = scmp.eq.s32.totalorder %s18, 0
    %p39 = por %p37, %p38
    %p40 = scmp.ne.s32.totalorder %s26, %s27
    %p41 = scmp.eq.s32.totalorder %s19, 1
    %p42 = por %p40, %p41
    %p44 = scmp.ne.s32.totalorder %s27, %s43
    %p45 = scmp.eq.s32.totalorder %s19, 0
    %p46 = por %p44, %p45
    %s48 = sadd.s32 %s47, 1
    %p51 = scmp.eq.s32.totalorder %s13, 1
    %p52 = scmp.ne.s32.totalorder %s47, %s49
    %p53 = scmp.eq.s32.totalorder %s13, 0
    %p54 = por %p52, %p53
    %p55 = scmp.ne.s32.totalorder %s47, %s49
    %p56 = scmp.eq.s32.totalorder %s18, 1
    %p57 = por %p55, %p56
    %p58 = scmp.ne.s32.totalorder %s49, %s50
    %p59 = scmp.eq.s32.totalorder %s18, 0
    %p60 = por %p58, %p59
    %p61 = scmp.ne.s32.totalorder %s49, %s50
    %p62 = scmp.eq.s32.totalorder %s19, 1
    %p63 = por %p61, %p62
    %p65 = scmp.ne.s32.totalorder %s50, %s64
    %p66 = scmp.eq.s32.totalorder %s19, 0
    %p67 = por %p65, %p66
    %s69 = sadd.s32 %s68, 1
    %p72 = scmp.eq.s32.totalorder %s13, 1
    %p73 = scmp.ne.s32.totalorder %s68, %s70
    %p74 = scmp.eq.s32.totalorder %s13, 0
    %p75 = por %p73, %p74
    %p76 = scmp.ne.s32.totalorder %s68, %s70
    %p77 = scmp.eq.s32.totalorder %s18, 1
    %p78 = por %p76, %p77
    %p79 = scmp.ne.s32.totalorder %s70, %s71
    %p80 = scmp.eq.s32.totalorder %s18, 0
    %p81 = por %p79, %p80
    %p82 = scmp.ne.s32.totalorder %s70, %s71
    %p83 = scmp.eq.s32.totalorder %s19, 1
    %p84 = por %p82, %p83
    %p86 = scmp.ne.s32.totalorder %s71, %s85
    %p87 = scmp.eq.s32.totalorder %s19, 0
    %p88 = por %p86, %p87
    %s90 = sadd.s32 %s89, 1
    %p93 = scmp.eq.s32.totalorder %s13, 1
    %p94 = scmp.ne.s32.totalorder %s89, %s91
    %p95 = scmp.eq.s32.totalorder %s13, 0
    %p96 = por %p94, %p95
    %p97 = scmp.ne.s32.totalorder %s89, %s91
    %p98 = scmp.eq.s32.totalorder %s18, 1
    %p99 = por %p97, %p98
    %p100 = scmp.ne.s32.totalorder %s91, %s92
    %p101 = scmp.eq.s32.totalorder %s18, 0
    %p102 = por %p100, %p101
    %p103 = scmp.ne.s32.totalorder %s91, %s92
    %p104 = scmp.eq.s32.totalorder %s19, 1
    %p105 = por %p103, %p104
    %p107 = scmp.ne.s32.totalorder %s92, %s106
    %p108 = scmp.eq.s32.totalorder %s19, 0
    %p109 = por %p107, %p108
    %s111 = sadd.s32 %s110, 1
    %p114 = scmp.eq.s32.totalorder %s13, 1
    %p115 = scmp.ne.s32.totalorder %s110, %s112
    %p116 = scmp.eq.s32.totalorder %s13, 0
    %p117 = por %p115, %p116
    %p118 = scmp.ne.s32.totalorder %s110, %s112
    %p119 = scmp.eq.s32.totalorder %s18, 1
    %p120 = por %p118, %p119
    %p121 = scmp.ne.s32.totalorder %s112, %s113
    %p122 = scmp.eq.s32.totalorder %s18, 0
    %p123 = por %p121, %p122
    %p124 = scmp.ne.s32.totalorder %s112, %s113
    %p125 = scmp.eq.s32.totalorder %s19, 1
    %p126 = por %p124, %p125
    %p128 = scmp.ne.s32.totalorder %s113, %s127
    %p129 = scmp.eq.s32.totalorder %s19, 0
    %p130 = por %p128, %p129
    %s131 = ssub.s32 %s13, %s20
    %p132 = scmp.eq.s32.totalorder %s131, 0
    %s134 = sadd.s32 %s133, 1
    %s135 = scalar_select %p132, %s133, %s134
    %p138 = pneg %p132
    %p139 = scmp.eq.s32.totalorder %s13, 1
    %p140 = por %p138, %p139
    %p141 = scmp.ne.s32.totalorder %s133, %s136
    %p142 = scmp.eq.s32.totalorder %s13, 0
    %p143 = por %p141, %p142
    %p144 = scmp.ne.s32.totalorder %s133, %s136
    %p145 = scmp.eq.s32.totalorder %s18, 1
    %p146 = por %p144, %p145
    %p147 = scmp.ne.s32.totalorder %s136, %s137
    %p148 = scmp.eq.s32.totalorder %s18, 0
    %p149 = por %p147, %p148
    %p150 = scmp.ne.s32.totalorder %s136, %s137
    %p151 = scmp.eq.s32.totalorder %s19, 1
    %p152 = por %p150, %p151
    %p154 = scmp.ne.s32.totalorder %s137, %s153
    %p155 = scmp.eq.s32.totalorder %s19, 0
    %p156 = por %p154, %p155
    %s157 = ssub.s32 %s13, %s20
    %p158 = scmp.eq.s32.totalorder %s157, 0
    %s160 = sadd.s32 %s159, 1
    %s161 = scalar_select %p158, %s159, %s160
    %p164 = pneg %p158
    %p165 = scmp.eq.s32.totalorder %s13, 1
    %p166 = por %p164, %p165
    %p167 = scmp.ne.s32.totalorder %s159, %s162
    %p168 = scmp.eq.s32.totalorder %s13, 0
    %p169 = por %p167, %p168
    %p170 = scmp.ne.s32.totalorder %s159, %s162
    %p171 = scmp.eq.s32.totalorder %s18, 1
    %p172 = por %p170, %p171
    %p173 = scmp.ne.s32.totalorder %s162, %s163
    %p174 = scmp.eq.s32.totalorder %s18, 0
    %p175 = por %p173, %p174
    %p176 = scmp.ne.s32.totalorder %s162, %s163
    %p177 = scmp.eq.s32.totalorder %s19, 1
    %p178 = por %p176, %p177
    %p180 = scmp.ne.s32.totalorder %s163, %s179
    %p181 = scmp.eq.s32.totalorder %s19, 0
    %p182 = por %p180, %p181
    %p183 = scmp.le.s32.totalorder 1, %s13
    %p184 = scmp.lt.s32.totalorder %s13, 3
    %p185 = pnand %p183, %p184
    %p186 = pneg %p185
    // Predicated region
    $region9: #{contractive_block.7} parent=5 // pred_check
      _
    $region10: #{contractive_block.7} parent=5 // pred_check_branch
      %188 = sbr.rel (%p185) target = $region12
    $region11: #{contractive_block.7} parent=5 // pred_region
      %s189 = ssub.s32 %s13, 1
      // Predicated region
      $region13: #{contractive_block.7} parent=11 // pred_check
        %p190 = pneg %p60
      $region14: #{contractive_block.7} parent=11 // pred_check_branch
        %192 = sbr.rel (%p190) target = $region16
      $region15: #{contractive_block.7} parent=11 // pred_region
        _
      $region16: #{contractive_block.7} parent=11 // pred_fallthru
        _
      // Predicated region
      $region17: #{contractive_block.7} parent=11 // pred_check
        %p193 = pneg %p81
      $region18: #{contractive_block.7} parent=11 // pred_check_branch
        %195 = sbr.rel (%p193) target = $region20
      $region19: #{contractive_block.7} parent=11 // pred_region
        _
      $region20: #{contractive_block.7} parent=11 // pred_fallthru
        _
      // Predicated region
      $region21: #{contractive_block.7} parent=11 // pred_check
        %p196 = pneg %p102
      $region22: #{contractive_block.7} parent=11 // pred_check_branch
        %198 = sbr.rel (%p196) target = $region24
      $region23: #{contractive_block.7} parent=11 // pred_region
        _
      $region24: #{contractive_block.7} parent=11 // pred_fallthru
        _
      // Predicated region
      $region25: #{contractive_block.7} parent=11 // pred_check
        %p199 = pneg %p123
      $region26: #{contractive_block.7} parent=11 // pred_check_branch
        %201 = sbr.rel (%p199) target = $region28
      $region27: #{contractive_block.7} parent=11 // pred_region
        _
      $region28: #{contractive_block.7} parent=11 // pred_fallthru
        _
    $region12: #{contractive_block.7} parent=5 // pred_fallthru
      _
    %p202 = scmp.lt.s32.totalorder %s13, 2
    // Predicated region
    $region29: #{contractive_block.7} parent=5 // pred_check
      %p203 = pneg %p202
    $region30: #{contractive_block.7} parent=5 // pred_check_branch
      %205 = sbr.rel (%p203) target = $region32
    $region31: #{contractive_block.7} parent=5 // pred_region
      // Predicated region
      $region33: #{contractive_block.7} parent=31 // pred_check
        %p206 = pneg %p33
      $region34: #{contractive_block.7} parent=31 // pred_check_branch
        %208 = sbr.rel (%p206) target = $region36
      $region35: #{contractive_block.7} parent=31 // pred_region
        %p209 = scmp.lt.s32.totalorder %s13, 1
        %s210 = scalar_select %p209, %s13, 1
        %s211 = smul.addr %s210, 32
        %s212 = smul.addr %s211, 8
        %s213 = scalar_lea.vmem %s0, %s212
      $region36: #{contractive_block.7} parent=31 // pred_fallthru
        _
    $region32: #{contractive_block.7} parent=5 // pred_fallthru
      _
    %p214 = scmp.le.s32.totalorder 1, %s13
    %p215 = scmp.lt.s32.totalorder %s13, 3
    %p216 = pnand %p214, %p215
    %p217 = pneg %p216
    // Predicated region
    $region37: #{contractive_block.7} parent=5 // pred_check
      _
    $region38: #{contractive_block.7} parent=5 // pred_check_branch
      %219 = sbr.rel (%p216) target = $region40
    $region39: #{contractive_block.7} parent=5 // pred_region
      %s220 = ssub.s32 %s13, 1
      %p221 = scmp.lt.s32.totalorder %s18, 1
      %s222 = scalar_select %p221, %s18, 1
      %s223 = smul.addr %s222, 32
      %s224 = smul.addr %s223, 8
      %s225 = scalar_lea.vmem %s0, %s224
      %p226 = pneg %p39
      %p227 = pneg %p36
      %p228 = pneg %p60
      %p229 = pneg %p57
      %p230 = pneg %p81
      %p231 = pneg %p78
      %p232 = pneg %p102
      %p233 = pneg %p99
      %p234 = pneg %p123
      %p235 = pneg %p120
      %p236 = pneg %p149
      %p237 = pneg %p146
      %p238 = scmp.lt.s32.totalorder %s18, 1
      %s239 = scalar_select %p238, %s18, 1
      %s240 = smul.addr %s239, 32
      %s241 = smul.addr %s240, 8
      %s242 = scalar_lea.vmem %s5, %s241
      %p243 = pneg %p175
      %p244 = pneg %p172
      %p245 = scmp.lt.s32.totalorder %s18, 1
      %s246 = scalar_select %p245, %s18, 1
      %s247 = smul.addr %s246, 2
      %s248 = scalar_lea.vmem %s6, %s247
      %p249 = scmp.lt.s32.totalorder %s18, 1
      %s250 = scalar_select %p249, %s18, 1
      %s251 = smul.addr %s250, 32
      %s252 = smul.addr %s251, 8
      %s253 = scalar_lea.vmem %s0, %s252
      %p254 = scmp.lt.s32.totalorder %s18, 1
      %s255 = scalar_select %p254, %s18, 1
      %s256 = smul.addr %s255, 32
      %s257 = smul.addr %s256, 8
      %s258 = scalar_lea.vmem %s5, %s257
      %p259 = scmp.lt.s32.totalorder %s18, 1
      %s260 = scalar_select %p259, %s18, 1
      %s261 = smul.addr %s260, 2
      %s262 = scalar_lea.vmem %s6, %s261
      %v264 = vld [vmem:[%s253] sm:$0xff]
      %v265 = vld [vmem:[%s253 + $0x8] sm:$0xff]
      %v266 = vld [vmem:[%s253 + $0x10] sm:$0xff]
      %v267 = vld [vmem:[%s253 + $0x18] sm:$0xff]
      %v268 = vld [vmem:[%s253 + $0x20] sm:$0xff]
      %v269 = vld [vmem:[%s253 + $0x28] sm:$0xff]
      %v270 = vld [vmem:[%s253 + $0x30] sm:$0xff]
      %v271 = vld [vmem:[%s253 + $0x38] sm:$0xff]
      %v272 = vld [vmem:[%s253 + $0x40] sm:$0xff]
      %v273 = vld [vmem:[%s253 + $0x48] sm:$0xff]
      %v274 = vld [vmem:[%s253 + $0x50] sm:$0xff]
      %v275 = vld [vmem:[%s253 + $0x58] sm:$0xff]
      %v276 = vld [vmem:[%s253 + $0x60] sm:$0xff]
      %v277 = vld [vmem:[%s253 + $0x68] sm:$0xff]
      %v278 = vld [vmem:[%s253 + $0x70] sm:$0xff]
      %v279 = vld [vmem:[%s253 + $0x78] sm:$0xff]
      %v280 = vld [vmem:[%s253 + $0x80] sm:$0xff]
      %v281 = vld [vmem:[%s253 + $0x88] sm:$0xff]
      %v282 = vld [vmem:[%s253 + $0x90] sm:$0xff]
      %v283 = vld [vmem:[%s253 + $0x98] sm:$0xff]
      %v284 = vld [vmem:[%s253 + $0xa0] sm:$0xff]
      %v285 = vld [vmem:[%s253 + $0xa8] sm:$0xff]
      %v286 = vld [vmem:[%s253 + $0xb0] sm:$0xff]
      %v287 = vld [vmem:[%s253 + $0xb8] sm:$0xff]
      %v288 = vld [vmem:[%s253 + $0xc0] sm:$0xff]
      %v289 = vld [vmem:[%s253 + $0xc8] sm:$0xff]
      %v290 = vld [vmem:[%s253 + $0xd0] sm:$0xff]
      %v291 = vld [vmem:[%s253 + $0xd8] sm:$0xff]
      %v292 = vld [vmem:[%s253 + $0xe0] sm:$0xff]
      %v293 = vld [vmem:[%s253 + $0xe8] sm:$0xff]
      %v294 = vld [vmem:[%s253 + $0xf0] sm:$0xff]
      %v295 = vld [vmem:[%s253 + $0xf8] sm:$0xff]
      %v296 = vld [vmem:[%s3] sm:$0x1]
      %v298 = vperm.slane %v296, 0
      %v300 = vmul.f32 %v264, %v298
      %v301 = vmul.f32 %v265, %v298
      %v302 = vmul.f32 %v266, %v298
      %v303 = vmul.f32 %v267, %v298
      %v304 = vmul.f32 %v268, %v298
      %v305 = vmul.f32 %v269, %v298
      %v306 = vmul.f32 %v270, %v298
      %v307 = vmul.f32 %v271, %v298
      %v308 = vmul.f32 %v272, %v298
      %v309 = vmul.f32 %v273, %v298
      %v310 = vmul.f32 %v274, %v298
      %v311 = vmul.f32 %v275, %v298
      %v312 = vmul.f32 %v276, %v298
      %v313 = vmul.f32 %v277, %v298
      %v314 = vmul.f32 %v278, %v298
      %v315 = vmul.f32 %v279, %v298
      %v316 = vmul.f32 %v280, %v298
      %v317 = vmul.f32 %v281, %v298
      %v318 = vmul.f32 %v282, %v298
      %v319 = vmul.f32 %v283, %v298
      %v320 = vmul.f32 %v284, %v298
      %v321 = vmul.f32 %v285, %v298
      %v322 = vmul.f32 %v286, %v298
      %v323 = vmul.f32 %v287, %v298
      %v324 = vmul.f32 %v288, %v298
      %v325 = vmul.f32 %v289, %v298
      %v326 = vmul.f32 %v290, %v298
      %v327 = vmul.f32 %v291, %v298
      %v328 = vmul.f32 %v292, %v298
      %v329 = vmul.f32 %v293, %v298
      %v330 = vmul.f32 %v294, %v298
      %v331 = vmul.f32 %v295, %v298
      %v332 = vld [vmem:[%s4] sm:$0x1]
      %v334 = vperm.slane %v332, 0
      %v336 = vadd.f32 %v300, %v334
      %v337 = vadd.f32 %v301, %v334
      %v338 = vadd.f32 %v302, %v334
      %v339 = vadd.f32 %v303, %v334
      %v340 = vadd.f32 %v304, %v334
      %v341 = vadd.f32 %v305, %v334
      %v342 = vadd.f32 %v306, %v334
      %v343 = vadd.f32 %v307, %v334
      %v344 = vadd.f32 %v308, %v334
      %v345 = vadd.f32 %v309, %v334
      %v346 = vadd.f32 %v310, %v334
      %v347 = vadd.f32 %v311, %v334
      %v348 = vadd.f32 %v312, %v334
      %v349 = vadd.f32 %v313, %v334
      %v350 = vadd.f32 %v314, %v334
      %v351 = vadd.f32 %v315, %v334
      %v352 = vadd.f32 %v316, %v334
      %v353 = vadd.f32 %v317, %v334
      %v354 = vadd.f32 %v318, %v334
      %v355 = vadd.f32 %v319, %v334
      %v356 = vadd.f32 %v320, %v334
      %v357 = vadd.f32 %v321, %v334
      %v358 = vadd.f32 %v322, %v334
      %v359 = vadd.f32 %v323, %v334
      %v360 = vadd.f32 %v324, %v334
      %v361 = vadd.f32 %v325, %v334
      %v362 = vadd.f32 %v326, %v334
      %v363 = vadd.f32 %v327, %v334
      %v364 = vadd.f32 %v328, %v334
      %v365 = vadd.f32 %v329, %v334
      %v366 = vadd.f32 %v330, %v334
      %v367 = vadd.f32 %v331, %v334
      %v368 = vmax.f32 %v336, 0.0
      %v369 = vmax.f32 %v337, 0.0
      %v370 = vmax.f32 %v338, 0.0
      %v371 = vmax.f32 %v339, 0.0
      %v372 = vmax.f32 %v340, 0.0
      %v373 = vmax.f32 %v341, 0.0
      %v374 = vmax.f32 %v342, 0.0
      %v375 = vmax.f32 %v343, 0.0
      %v376 = vmax.f32 %v344, 0.0
      %v377 = vmax.f32 %v345, 0.0
      %v378 = vmax.f32 %v346, 0.0
      %v379 = vmax.f32 %v347, 0.0
      %v380 = vmax.f32 %v348, 0.0
      %v381 = vmax.f32 %v349, 0.0
      %v382 = vmax.f32 %v350, 0.0
      %v383 = vmax.f32 %v351, 0.0
      %v384 = vmax.f32 %v352, 0.0
      %v385 = vmax.f32 %v353, 0.0
      %v386 = vmax.f32 %v354, 0.0
      %v387 = vmax.f32 %v355, 0.0
      %v388 = vmax.f32 %v356, 0.0
      %v389 = vmax.f32 %v357, 0.0
      %v390 = vmax.f32 %v358, 0.0
      %v391 = vmax.f32 %v359, 0.0
      %v392 = vmax.f32 %v360, 0.0
      %v393 = vmax.f32 %v361, 0.0
      %v394 = vmax.f32 %v362, 0.0
      %v395 = vmax.f32 %v363, 0.0
      %v396 = vmax.f32 %v364, 0.0
      %v397 = vmax.f32 %v365, 0.0
      %v398 = vmax.f32 %v366, 0.0
      %v399 = vmax.f32 %v367, 0.0
      %v400 = vpack.c.bf16 %v368, %v368
      %v401 = vpack.c.bf16 %v369, %v369
      %v402 = vpack.c.bf16 %v370, %v370
      %v403 = vpack.c.bf16 %v371, %v371
      %v404 = vpack.c.bf16 %v372, %v372
      %v405 = vpack.c.bf16 %v373, %v373
      %v406 = vpack.c.bf16 %v374, %v374
      %v407 = vpack.c.bf16 %v375, %v375
      %v408 = vpack.c.bf16 %v376, %v376
      %v409 = vpack.c.bf16 %v377, %v377
      %v410 = vpack.c.bf16 %v378, %v378
      %v411 = vpack.c.bf16 %v379, %v379
      %v412 = vpack.c.bf16 %v380, %v380
      %v413 = vpack.c.bf16 %v381, %v381
      %v414 = vpack.c.bf16 %v382, %v382
      %v415 = vpack.c.bf16 %v383, %v383
      %v416 = vpack.c.bf16 %v384, %v384
      %v417 = vpack.c.bf16 %v385, %v385
      %v418 = vpack.c.bf16 %v386, %v386
      %v419 = vpack.c.bf16 %v387, %v387
      %v420 = vpack.c.bf16 %v388, %v388
      %v421 = vpack.c.bf16 %v389, %v389
      %v422 = vpack.c.bf16 %v390, %v390
      %v423 = vpack.c.bf16 %v391, %v391
      %v424 = vpack.c.bf16 %v392, %v392
      %v425 = vpack.c.bf16 %v393, %v393
      %v426 = vpack.c.bf16 %v394, %v394
      %v427 = vpack.c.bf16 %v395, %v395
      %v428 = vpack.c.bf16 %v396, %v396
      %v429 = vpack.c.bf16 %v397, %v397
      %v430 = vpack.c.bf16 %v398, %v398
      %v431 = vpack.c.bf16 %v399, %v399
      %v464 = vunpack.c.l.b16 %v400
      %v465 = vunpack.c.l.b16 %v401
      %v466 = vunpack.c.l.b16 %v402
      %v467 = vunpack.c.l.b16 %v403
      %v468 = vunpack.c.l.b16 %v404
      %v469 = vunpack.c.l.b16 %v405
      %v470 = vunpack.c.l.b16 %v406
      %v471 = vunpack.c.l.b16 %v407
      %v472 = vunpack.c.l.b16 %v408
      %v473 = vunpack.c.l.b16 %v409
      %v474 = vunpack.c.l.b16 %v410
      %v475 = vunpack.c.l.b16 %v411
      %v476 = vunpack.c.l.b16 %v412
      %v477 = vunpack.c.l.b16 %v413
      %v478 = vunpack.c.l.b16 %v414
      %v479 = vunpack.c.l.b16 %v415
      %v480 = vunpack.c.l.b16 %v416
      %v481 = vunpack.c.l.b16 %v417
      %v482 = vunpack.c.l.b16 %v418
      %v483 = vunpack.c.l.b16 %v419
      %v484 = vunpack.c.l.b16 %v420
      %v485 = vunpack.c.l.b16 %v421
      %v486 = vunpack.c.l.b16 %v422
      %v487 = vunpack.c.l.b16 %v423
      %v488 = vunpack.c.l.b16 %v424
      %v489 = vunpack.c.l.b16 %v425
      %v490 = vunpack.c.l.b16 %v426
      %v491 = vunpack.c.l.b16 %v427
      %v492 = vunpack.c.l.b16 %v428
      %v493 = vunpack.c.l.b16 %v429
      %v494 = vunpack.c.l.b16 %v430
      %v495 = vunpack.c.l.b16 %v431
      %v496 = vpack.c.b16 %v465, %v464
      %v497 = vpack.c.b16 %v467, %v466
      %v498 = vpack.c.b16 %v469, %v468
      %v499 = vpack.c.b16 %v471, %v470
      %v500 = vpack.c.b16 %v473, %v472
      %v501 = vpack.c.b16 %v475, %v474
      %v502 = vpack.c.b16 %v477, %v476
      %v503 = vpack.c.b16 %v479, %v478
      %v504 = vpack.c.b16 %v481, %v480
      %v505 = vpack.c.b16 %v483, %v482
      %v506 = vpack.c.b16 %v485, %v484
      %v507 = vpack.c.b16 %v487, %v486
      %v508 = vpack.c.b16 %v489, %v488
      %v509 = vpack.c.b16 %v491, %v490
      %v510 = vpack.c.b16 %v493, %v492
      %v511 = vpack.c.b16 %v495, %v494
      %v513 = vshrl.u32 %v496, 16
      %v515 = vrot.slane %v513, 7
      %v516 = vshll.u32 %v496, 16
      %v518 = vor.u32 %v515, %v516
      %v520 = vshrl.u32 %v497, 16
      %v522 = vrot.slane %v520, 7
      %v523 = vshll.u32 %v497, 16
      %v525 = vor.u32 %v522, %v523
      %v527 = vshrl.u32 %v498, 16
      %v529 = vrot.slane %v527, 7
      %v530 = vshll.u32 %v498, 16
      %v532 = vor.u32 %v529, %v530
      %v534 = vshrl.u32 %v499, 16
      %v536 = vrot.slane %v534, 7
      %v537 = vshll.u32 %v499, 16
      %v539 = vor.u32 %v536, %v537
      %v541 = vshrl.u32 %v500, 16
      %v543 = vrot.slane %v541, 7
      %v544 = vshll.u32 %v500, 16
      %v546 = vor.u32 %v543, %v544
      %v548 = vshrl.u32 %v501, 16
      %v550 = vrot.slane %v548, 7
      %v551 = vshll.u32 %v501, 16
      %v553 = vor.u32 %v550, %v551
      %v555 = vshrl.u32 %v502, 16
      %v557 = vrot.slane %v555, 7
      %v558 = vshll.u32 %v502, 16
      %v560 = vor.u32 %v557, %v558
      %v562 = vshrl.u32 %v503, 16
      %v564 = vrot.slane %v562, 7
      %v565 = vshll.u32 %v503, 16
      %v567 = vor.u32 %v564, %v565
      %v569 = vshrl.u32 %v504, 16
      %v571 = vrot.slane %v569, 7
      %v572 = vshll.u32 %v504, 16
      %v574 = vor.u32 %v571, %v572
      %v576 = vshrl.u32 %v505, 16
      %v578 = vrot.slane %v576, 7
      %v579 = vshll.u32 %v505, 16
      %v581 = vor.u32 %v578, %v579
      %v583 = vshrl.u32 %v506, 16
      %v585 = vrot.slane %v583, 7
      %v586 = vshll.u32 %v506, 16
      %v588 = vor.u32 %v585, %v586
      %v590 = vshrl.u32 %v507, 16
      %v592 = vrot.slane %v590, 7
      %v593 = vshll.u32 %v507, 16
      %v595 = vor.u32 %v592, %v593
      %v597 = vshrl.u32 %v508, 16
      %v599 = vrot.slane %v597, 7
      %v600 = vshll.u32 %v508, 16
      %v602 = vor.u32 %v599, %v600
      %v604 = vshrl.u32 %v509, 16
      %v606 = vrot.slane %v604, 7
      %v607 = vshll.u32 %v509, 16
      %v609 = vor.u32 %v606, %v607
      %v611 = vshrl.u32 %v510, 16
      %v613 = vrot.slane %v611, 7
      %v614 = vshll.u32 %v510, 16
      %v616 = vor.u32 %v613, %v614
      %v618 = vshrl.u32 %v511, 16
      %v620 = vrot.slane %v618, 7
      %v621 = vshll.u32 %v511, 16
      %v623 = vor.u32 %v620, %v621
      %vm640 = vcmask 1040384
      %vm641 = vsmask.f32 256
      %vm642 = vmand %vm640, %vm641
      %v643 = vsel %vm642, 0, %v518
      %v644 = vsel %vm642, 0, %v525
      %v645 = vsel %vm642, 0, %v532
      %v646 = vsel %vm642, 0, %v539
      %v647 = vsel %vm642, 0, %v546
      %v648 = vsel %vm642, 0, %v553
      %v649 = vsel %vm642, 0, %v560
      %v650 = vsel %vm642, 0, %v567
      %v651 = vsel %vm642, 0, %v574
      %v652 = vsel %vm642, 0, %v581
      %v653 = vsel %vm642, 0, %v588
      %v654 = vsel %vm642, 0, %v595
      %v655 = vsel %vm642, 0, %v602
      %v656 = vsel %vm642, 0, %v609
      %v657 = vsel %vm642, 0, %v616
      %v658 = vsel %vm642, 0, %v623
      %v659 = vrot.slane %v516, 1
      %v660 = vor.u32 %v513, %v659
      %v661 = vrot.slane %v523, 1
      %v662 = vor.u32 %v520, %v661
      %v663 = vrot.slane %v530, 1
      %v664 = vor.u32 %v527, %v663
      %v665 = vrot.slane %v537, 1
      %v666 = vor.u32 %v534, %v665
      %v667 = vrot.slane %v544, 1
      %v668 = vor.u32 %v541, %v667
      %v669 = vrot.slane %v551, 1
      %v670 = vor.u32 %v548, %v669
      %v671 = vrot.slane %v558, 1
      %v672 = vor.u32 %v555, %v671
      %v673 = vrot.slane %v565, 1
      %v674 = vor.u32 %v562, %v673
      %v675 = vrot.slane %v572, 1
      %v676 = vor.u32 %v569, %v675
      %v677 = vrot.slane %v579, 1
      %v678 = vor.u32 %v576, %v677
      %v679 = vrot.slane %v586, 1
      %v680 = vor.u32 %v583, %v679
      %v681 = vrot.slane %v593, 1
      %v682 = vor.u32 %v590, %v681
      %v683 = vrot.slane %v600, 1
      %v684 = vor.u32 %v597, %v683
      %v685 = vrot.slane %v607, 1
      %v686 = vor.u32 %v604, %v685
      %v687 = vrot.slane %v614, 1
      %v688 = vor.u32 %v611, %v687
      %v689 = vrot.slane %v621, 1
      %v690 = vor.u32 %v618, %v689
      %vm707 = vcmask 1047552
      %vm708 = vsmask.f32 7424
      %vm709 = vmand %vm707, %vm708
      %v710 = vsel %vm709, %v660, 0
      %v711 = vsel %vm709, %v662, 0
      %v712 = vsel %vm709, %v664, 0
      %v713 = vsel %vm709, %v666, 0
      %v714 = vsel %vm709, %v668, 0
      %v715 = vsel %vm709, %v670, 0
      %v716 = vsel %vm709, %v672, 0
      %v717 = vsel %vm709, %v674, 0
      %v718 = vsel %vm709, %v676, 0
      %v719 = vsel %vm709, %v678, 0
      %v720 = vsel %vm709, %v680, 0
      %v721 = vsel %vm709, %v682, 0
      %v722 = vsel %vm709, %v684, 0
      %v723 = vsel %vm709, %v686, 0
      %v724 = vsel %vm709, %v688, 0
      %v725 = vsel %vm709, %v690, 0
      %726 = vrot.lane.b32.xlu0 %v496, 8
      %v727 = vpop.permute.xlu0 %726
      %728 = vrot.lane.b32.xlu0 %v497, 8
      %v729 = vpop.permute.xlu0 %728
      %730 = vrot.lane.b32.xlu0 %v498, 8
      %v731 = vpop.permute.xlu0 %730
      %732 = vrot.lane.b32.xlu0 %v499, 8
      %v733 = vpop.permute.xlu0 %732
      %734 = vrot.lane.b32.xlu0 %v500, 8
      %v735 = vpop.permute.xlu0 %734
      %736 = vrot.lane.b32.xlu0 %v501, 8
      %v737 = vpop.permute.xlu0 %736
      %738 = vrot.lane.b32.xlu0 %v502, 8
      %v739 = vpop.permute.xlu0 %738
      %740 = vrot.lane.b32.xlu0 %v503, 8
      %v741 = vpop.permute.xlu0 %740
      %742 = vrot.lane.b32.xlu0 %v504, 8
      %v743 = vpop.permute.xlu0 %742
      %744 = vrot.lane.b32.xlu0 %v505, 8
      %v745 = vpop.permute.xlu0 %744
      %746 = vrot.lane.b32.xlu0 %v506, 8
      %v747 = vpop.permute.xlu0 %746
      %748 = vrot.lane.b32.xlu0 %v507, 8
      %v749 = vpop.permute.xlu0 %748
      %750 = vrot.lane.b32.xlu0 %v508, 8
      %v751 = vpop.permute.xlu0 %750
      %752 = vrot.lane.b32.xlu0 %v509, 8
      %v753 = vpop.permute.xlu0 %752
      %754 = vrot.lane.b32.xlu0 %v510, 8
      %v755 = vpop.permute.xlu0 %754
      %756 = vrot.lane.b32.xlu0 %v511, 8
      %v757 = vpop.permute.xlu0 %756
      %774 = vrot.lane.b32.xlu0 %v710, 16
      %v775 = vpop.permute.xlu0 %774
      %776 = vrot.lane.b32.xlu0 %v711, 16
      %v777 = vpop.permute.xlu0 %776
      %778 = vrot.lane.b32.xlu0 %v712, 16
      %v779 = vpop.permute.xlu0 %778
      %780 = vrot.lane.b32.xlu0 %v713, 16
      %v781 = vpop.permute.xlu0 %780
      %782 = vrot.lane.b32.xlu0 %v714, 16
      %v783 = vpop.permute.xlu0 %782
      %784 = vrot.lane.b32.xlu0 %v715, 16
      %v785 = vpop.permute.xlu0 %784
      %786 = vrot.lane.b32.xlu0 %v716, 16
      %v787 = vpop.permute.xlu0 %786
      %788 = vrot.lane.b32.xlu0 %v717, 16
      %v789 = vpop.permute.xlu0 %788
      %790 = vrot.lane.b32.xlu0 %v718, 16
      %v791 = vpop.permute.xlu0 %790
      %792 = vrot.lane.b32.xlu0 %v719, 16
      %v793 = vpop.permute.xlu0 %792
      %794 = vrot.lane.b32.xlu0 %v720, 16
      %v795 = vpop.permute.xlu0 %794
      %796 = vrot.lane.b32.xlu0 %v721, 16
      %v797 = vpop.permute.xlu0 %796
      %798 = vrot.lane.b32.xlu0 %v722, 16
      %v799 = vpop.permute.xlu0 %798
      %800 = vrot.lane.b32.xlu0 %v723, 16
      %v801 = vpop.permute.xlu0 %800
      %802 = vrot.lane.b32.xlu0 %v724, 16
      %v803 = vpop.permute.xlu0 %802
      %804 = vrot.lane.b32.xlu0 %v725, 16
      %v805 = vpop.permute.xlu0 %804
      %vm806 = vcmask 64512
      %v809 = vsel %vm806, %v643, %v727
      %v812 = vsel %vm806, %v644, %v729
      %v815 = vsel %vm806, %v645, %v731
      %v818 = vsel %vm806, %v646, %v733
      %v821 = vsel %vm806, %v647, %v735
      %v824 = vsel %vm806, %v648, %v737
      %v827 = vsel %vm806, %v649, %v739
      %v830 = vsel %vm806, %v650, %v741
      %v833 = vsel %vm806, %v651, %v743
      %v836 = vsel %vm806, %v652, %v745
      %v839 = vsel %vm806, %v653, %v747
      %v842 = vsel %vm806, %v654, %v749
      %v845 = vsel %vm806, %v655, %v751
      %v848 = vsel %vm806, %v656, %v753
      %v851 = vsel %vm806, %v657, %v755
      %v854 = vsel %vm806, %v658, %v757
      %vm855 = vcmask 130048
      %v857 = vsel %vm855, %v809, %v775
      %v859 = vsel %vm855, %v812, %v777
      %v861 = vsel %vm855, %v815, %v779
      %v863 = vsel %vm855, %v818, %v781
      %v865 = vsel %vm855, %v821, %v783
      %v867 = vsel %vm855, %v824, %v785
      %v869 = vsel %vm855, %v827, %v787
      %v871 = vsel %vm855, %v830, %v789
      %v873 = vsel %vm855, %v833, %v791
      %v875 = vsel %vm855, %v836, %v793
      %v877 = vsel %vm855, %v839, %v795
      %v879 = vsel %vm855, %v842, %v797
      %v881 = vsel %vm855, %v845, %v799
      %v883 = vsel %vm855, %v848, %v801
      %v885 = vsel %vm855, %v851, %v803
      %v887 = vsel %vm855, %v854, %v805
      %904 = vrot.lane.b32.xlu0 %v857, 24
      %v905 = vpop.permute.xlu0 %904
      %906 = vrot.lane.b32.xlu0 %v859, 24
      %v907 = vpop.permute.xlu0 %906
      %908 = vrot.lane.b32.xlu0 %v861, 24
      %v909 = vpop.permute.xlu0 %908
      %910 = vrot.lane.b32.xlu0 %v863, 24
      %v911 = vpop.permute.xlu0 %910
      %912 = vrot.lane.b32.xlu0 %v865, 24
      %v913 = vpop.permute.xlu0 %912
      %914 = vrot.lane.b32.xlu0 %v867, 24
      %v915 = vpop.permute.xlu0 %914
      %916 = vrot.lane.b32.xlu0 %v869, 24
      %v917 = vpop.permute.xlu0 %916
      %918 = vrot.lane.b32.xlu0 %v871, 24
      %v919 = vpop.permute.xlu0 %918
      %920 = vrot.lane.b32.xlu0 %v873, 24
      %v921 = vpop.permute.xlu0 %920
      %922 = vrot.lane.b32.xlu0 %v875, 24
      %v923 = vpop.permute.xlu0 %922
      %924 = vrot.lane.b32.xlu0 %v877, 24
      %v925 = vpop.permute.xlu0 %924
      %926 = vrot.lane.b32.xlu0 %v879, 24
      %v927 = vpop.permute.xlu0 %926
      %928 = vrot.lane.b32.xlu0 %v881, 24
      %v929 = vpop.permute.xlu0 %928
      %930 = vrot.lane.b32.xlu0 %v883, 24
      %v931 = vpop.permute.xlu0 %930
      %932 = vrot.lane.b32.xlu0 %v885, 24
      %v933 = vpop.permute.xlu0 %932
      %934 = vrot.lane.b32.xlu0 %v887, 24
      %v935 = vpop.permute.xlu0 %934
      %937 = vrot.lane.b32.xlu0 %v859, 48
      %v938 = vpop.permute.xlu0 %937
      %939 = vrot.lane.b32.xlu0 %v861, 48
      %v940 = vpop.permute.xlu0 %939
      %941 = vrot.lane.b32.xlu0 %v863, 48
      %v942 = vpop.permute.xlu0 %941
      %943 = vrot.lane.b32.xlu0 %v865, 48
      %v944 = vpop.permute.xlu0 %943
      %945 = vrot.lane.b32.xlu0 %v867, 48
      %v946 = vpop.permute.xlu0 %945
      %947 = vrot.lane.b32.xlu0 %v869, 48
      %v948 = vpop.permute.xlu0 %947
      %949 = vrot.lane.b32.xlu0 %v871, 48
      %v950 = vpop.permute.xlu0 %949
      %951 = vrot.lane.b32.xlu0 %v873, 48
      %v952 = vpop.permute.xlu0 %951
      %953 = vrot.lane.b32.xlu0 %v875, 48
      %v954 = vpop.permute.xlu0 %953
      %955 = vrot.lane.b32.xlu0 %v877, 48
      %v956 = vpop.permute.xlu0 %955
      %957 = vrot.lane.b32.xlu0 %v879, 48
      %v958 = vpop.permute.xlu0 %957
      %959 = vrot.lane.b32.xlu0 %v881, 48
      %v960 = vpop.permute.xlu0 %959
      %961 = vrot.lane.b32.xlu0 %v883, 48
      %v962 = vpop.permute.xlu0 %961
      %963 = vrot.lane.b32.xlu0 %v885, 48
      %v964 = vpop.permute.xlu0 %963
      %965 = vrot.lane.b32.xlu0 %v887, 48
      %v966 = vpop.permute.xlu0 %965
      %967 = vrot.lane.b32.xlu0 0, 48
      %v968 = vpop.permute.xlu0 %967
      %vm969 = vcmask 195584
      %v972 = vsel %vm969, 0, %v905
      %v974 = vsel %vm969, %v857, %v907
      %v976 = vsel %vm969, %v859, %v909
      %v978 = vsel %vm969, %v861, %v911
      %v980 = vsel %vm969, %v863, %v913
      %v982 = vsel %vm969, %v865, %v915
      %v984 = vsel %vm969, %v867, %v917
      %v986 = vsel %vm969, %v869, %v919
      %v988 = vsel %vm969, %v871, %v921
      %v990 = vsel %vm969, %v873, %v923
      %v992 = vsel %vm969, %v875, %v925
      %v994 = vsel %vm969, %v877, %v927
      %v996 = vsel %vm969, %v879, %v929
      %v998 = vsel %vm969, %v881, %v931
      %v1000 = vsel %vm969, %v883, %v933
      %v1002 = vsel %vm969, %v885, %v935
      %vm1003 = vcmask 392192
      %v1005 = vsel %vm1003, %v972, %v938
      %v1007 = vsel %vm1003, %v974, %v940
      %v1009 = vsel %vm1003, %v976, %v942
      %v1011 = vsel %vm1003, %v978, %v944
      %v1013 = vsel %vm1003, %v980, %v946
      %v1015 = vsel %vm1003, %v982, %v948
      %v1017 = vsel %vm1003, %v984, %v950
      %v1019 = vsel %vm1003, %v986, %v952
      %v1021 = vsel %vm1003, %v988, %v954
      %v1023 = vsel %vm1003, %v990, %v956
      %v1025 = vsel %vm1003, %v992, %v958
      %v1027 = vsel %vm1003, %v994, %v960
      %v1029 = vsel %vm1003, %v996, %v962
      %v1031 = vsel %vm1003, %v998, %v964
      %v1033 = vsel %vm1003, %v1000, %v966
      %v1035 = vsel %vm1003, %v1002, %v968
      %v1036 = vld [vmem:[%s1] sm:$0xf]
      %v1037 = vld [vmem:[%s1 + $0x4] sm:$0xf]
      %v1038 = vld [vmem:[%s1 + $0x8] sm:$0xf]
      %v1039 = vld [vmem:[%s1 + $0xc] sm:$0xf]
      %v1040 = vld [vmem:[%s1 + $0x10] sm:$0xf]
      %v1041 = vld [vmem:[%s1 + $0x14] sm:$0xf]
      %v1042 = vld [vmem:[%s1 + $0x18] sm:$0xf]
      %v1043 = vld [vmem:[%s1 + $0x1c] sm:$0xf]
      %v1044 = vld [vmem:[%s1 + $0x20] sm:$0xf]
      %v1045 = vld [vmem:[%s2] sm:$0x1]
      %v1047 = vperm.slane %v1045, 0
      %v1058 = vunpack.c.l.b16 %v1036
      %v1059 = vunpack.c.l.b16 %v1037
      %v1060 = vunpack.c.l.b16 %v1038
      %v1061 = vunpack.c.l.b16 %v1039
      %v1062 = vunpack.c.l.b16 %v1040
      %v1063 = vunpack.c.l.b16 %v1041
      %v1064 = vunpack.c.l.b16 %v1042
      %v1065 = vunpack.c.l.b16 %v1043
      %v1066 = vunpack.c.l.b16 %v1044
      %v1067 = vpack.c.b16 %v1059, %v1058
      %v1068 = vpack.c.b16 %v1061, %v1060
      %v1069 = vpack.c.b16 %v1063, %v1062
      %v1070 = vpack.c.b16 %v1065, %v1064
      %v1071 = vpack.c.b16 %v1066, %v1066
      %vm1076 = vcmask 588800
      %v1077 = vsel %vm1076, %v1005, 0
      %v1079 = vsel %vm1076, %v1007, 0
      %v1081 = vsel %vm1076, %v1009, 0
      %v1083 = vsel %vm1076, %v1011, 0
      %v1085 = vsel %vm1076, %v1013, 0
      %v1087 = vsel %vm1076, %v1015, 0
      %v1089 = vsel %vm1076, %v1017, 0
      %v1091 = vsel %vm1076, %v1019, 0
      %v1093 = vsel %vm1076, %v1021, 0
      %v1095 = vsel %vm1076, %v1023, 0
      %v1097 = vsel %vm1076, %v1025, 0
      %v1099 = vsel %vm1076, %v1027, 0
      %v1101 = vsel %vm1076, %v1029, 0
      %v1103 = vsel %vm1076, %v1031, 0
      %v1105 = vsel %vm1076, %v1033, 0
      %v1107 = vsel %vm1076, %v1035, 0
      %vm1109 = vcmask 1043456
      %v1111 = vsel %vm1109, %v1071, 0
      %1113 = vmatpush.bf16.msra.mxu0 0
      %1114 = vmatpush.bf16.msra.mxu0 0
      %1115 = vmatpush.bf16.msra.mxu0 0
      %1116 = vmatpush.bf16.msra.mxu0 %v1111
      %1117 = vmatpush.bf16.msra.mxu0 %v1070
      %1118 = vmatpush.bf16.msra.mxu0 %v1069
      %1119 = vmatpush.bf16.msra.mxu0 %v1068
      %1120 = vmatpush.bf16.msra.mxu0 %v1067
      %1121 = vmatmul.bf16.gmra.mxu0 %v1077
      %v1122 = vpop.f32.mrf.mxu0
      %v1123 = vadd.f32 %v1047, %v1122
      %v1124 = vpop.f32.mrf.mxu0
      %v1125 = vadd.f32 %v1047, %v1124
      %1126 = vmatmul.bf16.gmra.mxu0 %v1079
      %v1127 = vpop.f32.mrf.mxu0
      %v1128 = vadd.f32 %v1047, %v1127
      %v1129 = vpop.f32.mrf.mxu0
      %v1130 = vadd.f32 %v1047, %v1129
      %1131 = vmatmul.bf16.gmra.mxu0 %v1081
      %v1132 = vpop.f32.mrf.mxu0
      %v1133 = vadd.f32 %v1047, %v1132
      %v1134 = vpop.f32.mrf.mxu0
      %v1135 = vadd.f32 %v1047, %v1134
      %1136 = vmatmul.bf16.gmra.mxu0 %v1083
      %v1137 = vpop.f32.mrf.mxu0
      %v1138 = vadd.f32 %v1047, %v1137
      %v1139 = vpop.f32.mrf.mxu0
      %v1140 = vadd.f32 %v1047, %v1139
      %1141 = vmatmul.bf16.gmra.mxu0 %v1085
      %v1142 = vpop.f32.mrf.mxu0
      %v1143 = vadd.f32 %v1047, %v1142
      %v1144 = vpop.f32.mrf.mxu0
      %v1145 = vadd.f32 %v1047, %v1144
      %1146 = vmatmul.bf16.gmra.mxu0 %v1087
      %v1147 = vpop.f32.mrf.mxu0
      %v1148 = vadd.f32 %v1047, %v1147
      %v1149 = vpop.f32.mrf.mxu0
      %v1150 = vadd.f32 %v1047, %v1149
      %1151 = vmatmul.bf16.gmra.mxu0 %v1089
      %v1152 = vpop.f32.mrf.mxu0
      %v1153 = vadd.f32 %v1047, %v1152
      %v1154 = vpop.f32.mrf.mxu0
      %v1155 = vadd.f32 %v1047, %v1154
      %1156 = vmatmul.bf16.gmra.mxu0 %v1091
      %v1157 = vpop.f32.mrf.mxu0
      %v1158 = vadd.f32 %v1047, %v1157
      %v1159 = vpop.f32.mrf.mxu0
      %v1160 = vadd.f32 %v1047, %v1159
      %1161 = vmatmul.bf16.gmra.mxu0 %v1093
      %v1162 = vpop.f32.mrf.mxu0
      %v1163 = vadd.f32 %v1047, %v1162
      %v1164 = vpop.f32.mrf.mxu0
      %v1165 = vadd.f32 %v1047, %v1164
      %1166 = vmatmul.bf16.gmra.mxu0 %v1095
      %v1167 = vpop.f32.mrf.mxu0
      %v1168 = vadd.f32 %v1047, %v1167
      %v1169 = vpop.f32.mrf.mxu0
      %v1170 = vadd.f32 %v1047, %v1169
      %1171 = vmatmul.bf16.gmra.mxu0 %v1097
      %v1172 = vpop.f32.mrf.mxu0
      %v1173 = vadd.f32 %v1047, %v1172
      %v1174 = vpop.f32.mrf.mxu0
      %v1175 = vadd.f32 %v1047, %v1174
      %1176 = vmatmul.bf16.gmra.mxu0 %v1099
      %v1177 = vpop.f32.mrf.mxu0
      %v1178 = vadd.f32 %v1047, %v1177
      %v1179 = vpop.f32.mrf.mxu0
      %v1180 = vadd.f32 %v1047, %v1179
      %1181 = vmatmul.bf16.gmra.mxu0 %v1101
      %v1182 = vpop.f32.mrf.mxu0
      %v1183 = vadd.f32 %v1047, %v1182
      %v1184 = vpop.f32.mrf.mxu0
      %v1185 = vadd.f32 %v1047, %v1184
      %1186 = vmatmul.bf16.gmra.mxu0 %v1103
      %v1187 = vpop.f32.mrf.mxu0
      %v1188 = vadd.f32 %v1047, %v1187
      %v1189 = vpop.f32.mrf.mxu0
      %v1190 = vadd.f32 %v1047, %v1189
      %1191 = vmatmul.bf16.gmra.mxu0 %v1105
      %v1192 = vpop.f32.mrf.mxu0
      %v1193 = vadd.f32 %v1047, %v1192
      %v1194 = vpop.f32.mrf.mxu0
      %v1195 = vadd.f32 %v1047, %v1194
      %1196 = vmatmul.bf16.gmra.mxu0 %v1107
      %v1197 = vpop.f32.mrf.mxu0
      %v1198 = vadd.f32 %v1047, %v1197
      %v1199 = vpop.f32.mrf.mxu0
      %v1200 = vadd.f32 %v1047, %v1199
      %1201 = vdwg.mxu0
      %1202 = vst.msk [vmem:[%s258] sm:$0xff] %vm806, %v1123
      %1203 = vst.msk [vmem:[%s258 + $0x8] sm:$0xff] %vm806, %v1125
      %1204 = vst.msk [vmem:[%s258 + $0x10] sm:$0xff] %vm806, %v1128
      %1205 = vst.msk [vmem:[%s258 + $0x18] sm:$0xff] %vm806, %v1130
      %1206 = vst.msk [vmem:[%s258 + $0x20] sm:$0xff] %vm806, %v1133
      %1207 = vst.msk [vmem:[%s258 + $0x28] sm:$0xff] %vm806, %v1135
      %1208 = vst.msk [vmem:[%s258 + $0x30] sm:$0xff] %vm806, %v1138
      %1209 = vst.msk [vmem:[%s258 + $0x38] sm:$0xff] %vm806, %v1140
      %1210 = vst.msk [vmem:[%s258 + $0x40] sm:$0xff] %vm806, %v1143
      %1211 = vst.msk [vmem:[%s258 + $0x48] sm:$0xff] %vm806, %v1145
      %1212 = vst.msk [vmem:[%s258 + $0x50] sm:$0xff] %vm806, %v1148
      %1213 = vst.msk [vmem:[%s258 + $0x58] sm:$0xff] %vm806, %v1150
      %1214 = vst.msk [vmem:[%s258 + $0x60] sm:$0xff] %vm806, %v1153
      %1215 = vst.msk [vmem:[%s258 + $0x68] sm:$0xff] %vm806, %v1155
      %1216 = vst.msk [vmem:[%s258 + $0x70] sm:$0xff] %vm806, %v1158
      %1217 = vst.msk [vmem:[%s258 + $0x78] sm:$0xff] %vm806, %v1160
      %1218 = vst.msk [vmem:[%s258 + $0x80] sm:$0xff] %vm806, %v1163
      %1219 = vst.msk [vmem:[%s258 + $0x88] sm:$0xff] %vm806, %v1165
      %1220 = vst.msk [vmem:[%s258 + $0x90] sm:$0xff] %vm806, %v1168
      %1221 = vst.msk [vmem:[%s258 + $0x98] sm:$0xff] %vm806, %v1170
      %1222 = vst.msk [vmem:[%s258 + $0xa0] sm:$0xff] %vm806, %v1173
      %1223 = vst.msk [vmem:[%s258 + $0xa8] sm:$0xff] %vm806, %v1175
      %1224 = vst.msk [vmem:[%s258 + $0xb0] sm:$0xff] %vm806, %v1178
      %1225 = vst.msk [vmem:[%s258 + $0xb8] sm:$0xff] %vm806, %v1180
      %1226 = vst.msk [vmem:[%s258 + $0xc0] sm:$0xff] %vm806, %v1183
      %1227 = vst.msk [vmem:[%s258 + $0xc8] sm:$0xff] %vm806, %v1185
      %1228 = vst.msk [vmem:[%s258 + $0xd0] sm:$0xff] %vm806, %v1188
      %1229 = vst.msk [vmem:[%s258 + $0xd8] sm:$0xff] %vm806, %v1190
      %1230 = vst.msk [vmem:[%s258 + $0xe0] sm:$0xff] %vm806, %v1193
      %1231 = vst.msk [vmem:[%s258 + $0xe8] sm:$0xff] %vm806, %v1195
      %1232 = vst.msk [vmem:[%s258 + $0xf0] sm:$0xff] %vm806, %v1198
      %1233 = vst.msk [vmem:[%s258 + $0xf8] sm:$0xff] %vm806, %v1200
      %v1234 = vsel %vm806, %v1123, 0.0
      %v1235 = vsel %vm806, %v1125, 0.0
      %v1236 = vadd.f32 %v1234, %v1235
      %v1237 = vsel %vm806, %v1128, 0.0
      %v1238 = vadd.f32 %v1236, %v1237
      %v1239 = vsel %vm806, %v1130, 0.0
      %v1240 = vadd.f32 %v1238, %v1239
      %v1241 = vsel %vm806, %v1133, 0.0
      %v1242 = vadd.f32 %v1240, %v1241
      %v1243 = vsel %vm806, %v1135, 0.0
      %v1244 = vadd.f32 %v1242, %v1243
      %v1245 = vsel %vm806, %v1138, 0.0
      %v1246 = vadd.f32 %v1244, %v1245
      %v1247 = vsel %vm806, %v1140, 0.0
      %v1248 = vadd.f32 %v1246, %v1247
      %v1249 = vsel %vm806, %v1143, 0.0
      %v1250 = vadd.f32 %v1248, %v1249
      %v1251 = vsel %vm806, %v1145, 0.0
      %v1252 = vadd.f32 %v1250, %v1251
      %v1253 = vsel %vm806, %v1148, 0.0
      %v1254 = vadd.f32 %v1252, %v1253
      %v1255 = vsel %vm806, %v1150, 0.0
      %v1256 = vadd.f32 %v1254, %v1255
      %v1257 = vsel %vm806, %v1153, 0.0
      %v1258 = vadd.f32 %v1256, %v1257
      %v1259 = vsel %vm806, %v1155, 0.0
      %v1260 = vadd.f32 %v1258, %v1259
      %v1261 = vsel %vm806, %v1158, 0.0
      %v1262 = vadd.f32 %v1260, %v1261
      %v1263 = vsel %vm806, %v1160, 0.0
      %v1264 = vadd.f32 %v1262, %v1263
      %v1265 = vsel %vm806, %v1163, 0.0
      %v1266 = vadd.f32 %v1264, %v1265
      %v1267 = vsel %vm806, %v1165, 0.0
      %v1268 = vadd.f32 %v1266, %v1267
      %v1269 = vsel %vm806, %v1168, 0.0
      %v1270 = vadd.f32 %v1268, %v1269
      %v1271 = vsel %vm806, %v1170, 0.0
      %v1272 = vadd.f32 %v1270, %v1271
      %v1273 = vsel %vm806, %v1173, 0.0
      %v1274 = vadd.f32 %v1272, %v1273
      %v1275 = vsel %vm806, %v1175, 0.0
      %v1276 = vadd.f32 %v1274, %v1275
      %v1277 = vsel %vm806, %v1178, 0.0
      %v1278 = vadd.f32 %v1276, %v1277
      %v1279 = vsel %vm806, %v1180, 0.0
      %v1280 = vadd.f32 %v1278, %v1279
      %v1281 = vsel %vm806, %v1183, 0.0
      %v1282 = vadd.f32 %v1280, %v1281
      %v1283 = vsel %vm806, %v1185, 0.0
      %v1284 = vadd.f32 %v1282, %v1283
      %v1285 = vsel %vm806, %v1188, 0.0
      %v1286 = vadd.f32 %v1284, %v1285
      %v1287 = vsel %vm806, %v1190, 0.0
      %v1288 = vadd.f32 %v1286, %v1287
      %v1289 = vsel %vm806, %v1193, 0.0
      %v1290 = vadd.f32 %v1288, %v1289
      %v1291 = vsel %vm806, %v1195, 0.0
      %v1292 = vadd.f32 %v1290, %v1291
      %v1293 = vsel %vm806, %v1198, 0.0
      %v1294 = vadd.f32 %v1292, %v1293
      %v1295 = vsel %vm806, %v1200, 0.0
      %v1296 = vadd.f32 %v1294, %v1295
      %v1297 = vrot.slane %v1296, 4
      %v1298 = vadd.f32 %v1296, %v1297
      %v1299 = vrot.slane %v1298, 2
      %v1300 = vadd.f32 %v1298, %v1299
      %v1301 = vrot.slane %v1300, 1
      %v1302 = vadd.f32 %v1300, %v1301
      %v1303 = vmul.f32 %v1123, %v1123
      %v1304 = vmul.f32 %v1125, %v1125
      %v1305 = vmul.f32 %v1128, %v1128
      %v1306 = vmul.f32 %v1130, %v1130
      %v1307 = vmul.f32 %v1133, %v1133
      %v1308 = vmul.f32 %v1135, %v1135
      %v1309 = vmul.f32 %v1138, %v1138
      %v1310 = vmul.f32 %v1140, %v1140
      %v1311 = vmul.f32 %v1143, %v1143
      %v1312 = vmul.f32 %v1145, %v1145
      %v1313 = vmul.f32 %v1148, %v1148
      %v1314 = vmul.f32 %v1150, %v1150
      %v1315 = vmul.f32 %v1153, %v1153
      %v1316 = vmul.f32 %v1155, %v1155
      %v1317 = vmul.f32 %v1158, %v1158
      %v1318 = vmul.f32 %v1160, %v1160
      %v1319 = vmul.f32 %v1163, %v1163
      %v1320 = vmul.f32 %v1165, %v1165
      %v1321 = vmul.f32 %v1168, %v1168
      %v1322 = vmul.f32 %v1170, %v1170
      %v1323 = vmul.f32 %v1173, %v1173
      %v1324 = vmul.f32 %v1175, %v1175
      %v1325 = vmul.f32 %v1178, %v1178
      %v1326 = vmul.f32 %v1180, %v1180
      %v1327 = vmul.f32 %v1183, %v1183
      %v1328 = vmul.f32 %v1185, %v1185
      %v1329 = vmul.f32 %v1188, %v1188
      %v1330 = vmul.f32 %v1190, %v1190
      %v1331 = vmul.f32 %v1193, %v1193
      %v1332 = vmul.f32 %v1195, %v1195
      %v1333 = vmul.f32 %v1198, %v1198
      %v1334 = vmul.f32 %v1200, %v1200
      %v1335 = vsel %vm806, %v1303, 0.0
      %v1336 = vsel %vm806, %v1304, 0.0
      %v1337 = vadd.f32 %v1335, %v1336
      %v1338 = vsel %vm806, %v1305, 0.0
      %v1339 = vadd.f32 %v1337, %v1338
      %v1340 = vsel %vm806, %v1306, 0.0
      %v1341 = vadd.f32 %v1339, %v1340
      %v1342 = vsel %vm806, %v1307, 0.0
      %v1343 = vadd.f32 %v1341, %v1342
      %v1344 = vsel %vm806, %v1308, 0.0
      %v1345 = vadd.f32 %v1343, %v1344
      %v1346 = vsel %vm806, %v1309, 0.0
      %v1347 = vadd.f32 %v1345, %v1346
      %v1348 = vsel %vm806, %v1310, 0.0
      %v1349 = vadd.f32 %v1347, %v1348
      %v1350 = vsel %vm806, %v1311, 0.0
      %v1351 = vadd.f32 %v1349, %v1350
      %v1352 = vsel %vm806, %v1312, 0.0
      %v1353 = vadd.f32 %v1351, %v1352
      %v1354 = vsel %vm806, %v1313, 0.0
      %v1355 = vadd.f32 %v1353, %v1354
      %v1356 = vsel %vm806, %v1314, 0.0
      %v1357 = vadd.f32 %v1355, %v1356
      %v1358 = vsel %vm806, %v1315, 0.0
      %v1359 = vadd.f32 %v1357, %v1358
      %v1360 = vsel %vm806, %v1316, 0.0
      %v1361 = vadd.f32 %v1359, %v1360
      %v1362 = vsel %vm806, %v1317, 0.0
      %v1363 = vadd.f32 %v1361, %v1362
      %v1364 = vsel %vm806, %v1318, 0.0
      %v1365 = vadd.f32 %v1363, %v1364
      %v1366 = vsel %vm806, %v1319, 0.0
      %v1367 = vadd.f32 %v1365, %v1366
      %v1368 = vsel %vm806, %v1320, 0.0
      %v1369 = vadd.f32 %v1367, %v1368
      %v1370 = vsel %vm806, %v1321, 0.0
      %v1371 = vadd.f32 %v1369, %v1370
      %v1372 = vsel %vm806, %v1322, 0.0
      %v1373 = vadd.f32 %v1371, %v1372
      %v1374 = vsel %vm806, %v1323, 0.0
      %v1375 = vadd.f32 %v1373, %v1374
      %v1376 = vsel %vm806, %v1324, 0.0
      %v1377 = vadd.f32 %v1375, %v1376
      %v1378 = vsel %vm806, %v1325, 0.0
      %v1379 = vadd.f32 %v1377, %v1378
      %v1380 = vsel %vm806, %v1326, 0.0
      %v1381 = vadd.f32 %v1379, %v1380
      %v1382 = vsel %vm806, %v1327, 0.0
      %v1383 = vadd.f32 %v1381, %v1382
      %v1384 = vsel %vm806, %v1328, 0.0
      %v1385 = vadd.f32 %v1383, %v1384
      %v1386 = vsel %vm806, %v1329, 0.0
      %v1387 = vadd.f32 %v1385, %v1386
      %v1388 = vsel %vm806, %v1330, 0.0
      %v1389 = vadd.f32 %v1387, %v1388
      %v1390 = vsel %vm806, %v1331, 0.0
      %v1391 = vadd.f32 %v1389, %v1390
      %v1392 = vsel %vm806, %v1332, 0.0
      %v1393 = vadd.f32 %v1391, %v1392
      %v1394 = vsel %vm806, %v1333, 0.0
      %v1395 = vadd.f32 %v1393, %v1394
      %v1396 = vsel %vm806, %v1334, 0.0
      %v1397 = vadd.f32 %v1395, %v1396
      %v1398 = vrot.slane %v1397, 4
      %v1399 = vadd.f32 %v1397, %v1398
      %v1400 = vrot.slane %v1399, 2
      %v1401 = vadd.f32 %v1399, %v1400
      %v1402 = vrot.slane %v1401, 1
      %v1403 = vadd.f32 %v1401, %v1402
      %vm1404 = vcmask 1040384
      %v1405 = vsel %vm1404, %v1302, %v1403
      %vm1406 = vcmask 58368
      %1407 = vst.msk [vmem:[%s262] sm:$0x3] %vm1406, %v1405
      %p1408 = scmp.lt.s32.totalorder %s18, 1
      %s1409 = scalar_select %p1408, %s18, 1
      %s1410 = smul.addr %s1409, 32
      %s1411 = smul.addr %s1410, 8
      %s1412 = scalar_lea.vmem %s5, %s1411
      %p1413 = scmp.lt.s32.totalorder %s18, 1
      %s1414 = scalar_select %p1413, %s18, 1
      %s1415 = smul.addr %s1414, 2
      %s1416 = scalar_lea.vmem %s6, %s1415
      // Predicated region
      $region41: #{contractive_block.7} parent=39 // pred_check
        %p1417 = pneg %p146
      $region42: #{contractive_block.7} parent=39 // pred_check_branch
        %1419 = sbr.rel (%p1417) target = $region44
      $region43: #{contractive_block.7} parent=39 // pred_region
        _
      $region44: #{contractive_block.7} parent=39 // pred_fallthru
        _
      // Predicated region
      $region45: #{contractive_block.7} parent=39 // pred_check
        %p1420 = pneg %p172
      $region46: #{contractive_block.7} parent=39 // pred_check_branch
        %1422 = sbr.rel (%p1420) target = $region48
      $region47: #{contractive_block.7} parent=39 // pred_region
        _
      $region48: #{contractive_block.7} parent=39 // pred_fallthru
        _
    $region40: #{contractive_block.7} parent=5 // pred_fallthru
      _
    %p1423 = scmp.le.s32.totalorder 2, %s13
    // Predicated region
    $region49: #{contractive_block.7} parent=5 // pred_check
      %p1424 = pneg %p1423
    $region50: #{contractive_block.7} parent=5 // pred_check_branch
      %1426 = sbr.rel (%p1424) target = $region52
    $region51: #{contractive_block.7} parent=5 // pred_region
      %s1427 = ssub.s32 %s13, 2
      // Predicated region
      $region53: #{contractive_block.7} parent=51 // pred_check
        %p1428 = pneg %p152
      $region54: #{contractive_block.7} parent=51 // pred_check_branch
        %1430 = sbr.rel (%p1428) target = $region56
      $region55: #{contractive_block.7} parent=51 // pred_region
        %p1431 = scmp.lt.s32.totalorder %s19, 1
        %s1432 = scalar_select %p1431, %s19, 1
        %s1433 = smul.addr %s1432, 32
        %s1434 = smul.addr %s1433, 8
        %s1435 = scalar_lea.vmem %s5, %s1434
      $region56: #{contractive_block.7} parent=51 // pred_fallthru
        _
      // Predicated region
      $region57: #{contractive_block.7} parent=51 // pred_check
        %p1436 = pneg %p178
      $region58: #{contractive_block.7} parent=51 // pred_check_branch
        %1438 = sbr.rel (%p1436) target = $region60
      $region59: #{contractive_block.7} parent=51 // pred_region
        %p1439 = scmp.lt.s32.totalorder %s19, 1
        %s1440 = scalar_select %p1439, %s19, 1
        %s1441 = smul.addr %s1440, 2
        %s1442 = scalar_lea.vmem %s6, %s1441
      $region60: #{contractive_block.7} parent=51 // pred_fallthru
        _
    $region52: #{contractive_block.7} parent=5 // pred_fallthru
      _
  $region6: #{contractive_block.7} parent=0 // loop_footer
    %s17 = sadd.s32 1, %s13
  $region7: #{contractive_block.7} parent=0 // loop_footer_branch
    %12 = sbr.rel target = $region3
  $region8: #{contractive_block.7} parent=0 // loop_exit
    _

// kernel: contractive_block.11
$region0: #{contractive_block.11}
  #allocation0 [shape = 'u32[]', space=smem, size = 0x4, offset = 0x4, fixed_abs, tag = 'smem constant byte address 0x4 - core index']
  #allocation1 [shape = 'u32[72,128]{1,0:T(1,128)}', space=vmem, size = 0x9000, scoped, tag = 'internal scratch']
  %s0 = inlined_call_operand.vmem [shape: f32[2,8,8,16], index: 0, kind: input, shape index: {}]
  %s1 = inlined_call_operand.vmem [shape: f32[1,16], index: 1, kind: input, shape index: {}]
  %s2 = inlined_call_operand.vmem [shape: f32[1,16], index: 2, kind: input, shape index: {}]
  %s3 = inlined_call_operand.hbm [shape: f32[2,8,8,16], index: 3, kind: output, shape index: {0}]
  %s4 = inlined_call_operand.hbm [shape: f32[2,4,4,16], index: 4, kind: output, shape index: {1}]
  %5 = xla_tuple %s3, %s4
  %s6 = sld [smem:[#allocation0]]
  $region53: #{contractive_block.11} parent=0
    _
  %s8 = ssub.s32 1, %s6
  %s9 = scalar_select 0, %s8, %s6
  $region1: #{contractive_block.11} parent=0
    #allocation2 [shape = 'u8[65536]{0}', space=vmem, size = 0x10000, scoped, tag = 'output window, operand 0']
    #allocation3 [shape = 's32[2]{0}', space=sflag, size = 0x8, scoped, tag = 'scoped memory for contractive_block.11']
    #allocation4 [shape = 'u8[16384]{0}', space=vmem, size = 0x4000, scoped, tag = 'output window, operand 1']
    #allocation5 [shape = 's32[2]{0}', space=sflag, size = 0x8, scoped, tag = 'scoped memory for contractive_block.11']
    %10 = vsyncpa [#allocation3], 0
    %s11 = scalar_lea.sflag [#allocation3], 1
    %12 = vsyncpa %s11, 0
    %13 = vsyncpa [#allocation5], 0
    %s14 = scalar_lea.sflag [#allocation5], 1
    %15 = vsyncpa %s14, 0
    loop: start=0, step=1, limit=4
    $region2: #{contractive_block.11} parent=1 // loop_pre_header
      _
    $region3: #{contractive_block.11} parent=1 // loop_header
      %s17 = sphi 0, %s21
      %p18 = scmp.ge.s32.totalorder %s17, 4
      %s27 = sphi 0, %s29
      %s30 = sphi 0, %s27
      %s31 = sphi 0, %s30
      %s47 = sphi 0, %s31
      %s51 = sphi 0, %s51
      %s53 = sphi 0, %s51
      %s54 = sphi 0, %s53
      %s68 = sphi 0, %s54
      %s72 = sphi 0, %s72
      %s74 = sphi 0, %s72
      %s75 = sphi 0, %s74
      %s89 = sphi 0, %s75
      %s95 = sphi 0, %s97
      %s98 = sphi 0, %s95
      %s99 = sphi 0, %s98
      %s115 = sphi 0, %s99
      %s121 = sphi 0, %s123
      %s124 = sphi 0, %s121
      %s125 = sphi 0, %s124
      %s141 = sphi 0, %s125
    $region4: #{contractive_block.11} parent=1 // loop_header_branch
      %20 = sbr.rel (%p18) target = $region8
    $region5: #{contractive_block.11} parent=1 // loop_body
      %s22 = ssub.s32 %s17, 1
      %s23 = ssub.s32 %s17, 2
      %s24 = sadd.s32 %s17, 1
      %s25 = ssub.s32 %s17, %s24
      %p26 = scmp.eq.s32.totalorder %s25, 0
      %s28 = sadd.s32 %s27, 1
      %s29 = scalar_select %p26, %s27, %s28
      %p32 = pneg %p26
      %p33 = scmp.eq.s32.totalorder %s17, 1
      %p34 = por %p32, %p33
      %p35 = scmp.ne.s32.totalorder %s27, %s30
      %p36 = scmp.eq.s32.totalorder %s17, 0
      %p37 = por %p35, %p36
      %p38 = scmp.ne.s32.totalorder %s27, %s30
      %p39 = scmp.eq.s32.totalorder %s22, 1
      %p40 = por %p38, %p39
      %p41 = scmp.ne.s32.totalorder %s30, %s31
      %p42 = scmp.eq.s32.totalorder %s22, 0
      %p43 = por %p41, %p42
      %p44 = scmp.ne.s32.totalorder %s30, %s31
      %p45 = scmp.eq.s32.totalorder %s23, 1
      %p46 = por %p44, %p45
      %p48 = scmp.ne.s32.totalorder %s31, %s47
      %p49 = scmp.eq.s32.totalorder %s23, 0
      %p50 = por %p48, %p49
      %s52 = sadd.s32 %s51, 1
      %p55 = scmp.eq.s32.totalorder %s17, 1
      %p56 = scmp.ne.s32.totalorder %s51, %s53
      %p57 = scmp.eq.s32.totalorder %s17, 0
      %p58 = por %p56, %p57
      %p59 = scmp.ne.s32.totalorder %s51, %s53
      %p60 = scmp.eq.s32.totalorder %s22, 1
      %p61 = por %p59, %p60
      %p62 = scmp.ne.s32.totalorder %s53, %s54
      %p63 = scmp.eq.s32.totalorder %s22, 0
      %p64 = por %p62, %p63
      %p65 = scmp.ne.s32.totalorder %s53, %s54
      %p66 = scmp.eq.s32.totalorder %s23, 1
      %p67 = por %p65, %p66
      %p69 = scmp.ne.s32.totalorder %s54, %s68
      %p70 = scmp.eq.s32.totalorder %s23, 0
      %p71 = por %p69, %p70
      %s73 = sadd.s32 %s72, 1
      %p76 = scmp.eq.s32.totalorder %s17, 1
      %p77 = scmp.ne.s32.totalorder %s72, %s74
      %p78 = scmp.eq.s32.totalorder %s17, 0
      %p79 = por %p77, %p78
      %p80 = scmp.ne.s32.totalorder %s72, %s74
      %p81 = scmp.eq.s32.totalorder %s22, 1
      %p82 = por %p80, %p81
      %p83 = scmp.ne.s32.totalorder %s74, %s75
      %p84 = scmp.eq.s32.totalorder %s22, 0
      %p85 = por %p83, %p84
      %p86 = scmp.ne.s32.totalorder %s74, %s75
      %p87 = scmp.eq.s32.totalorder %s23, 1
      %p88 = por %p86, %p87
      %p90 = scmp.ne.s32.totalorder %s75, %s89
      %p91 = scmp.eq.s32.totalorder %s23, 0
      %p92 = por %p90, %p91
      %s93 = ssub.s32 %s17, %s24
      %p94 = scmp.eq.s32.totalorder %s93, 0
      %s96 = sadd.s32 %s95, 1
      %s97 = scalar_select %p94, %s95, %s96
      %p100 = pneg %p94
      %p101 = scmp.eq.s32.totalorder %s17, 1
      %p102 = por %p100, %p101
      %p103 = scmp.ne.s32.totalorder %s95, %s98
      %p104 = scmp.eq.s32.totalorder %s17, 0
      %p105 = por %p103, %p104
      %p106 = scmp.ne.s32.totalorder %s95, %s98
      %p107 = scmp.eq.s32.totalorder %s22, 1
      %p108 = por %p106, %p107
      %p109 = scmp.ne.s32.totalorder %s98, %s99
      %p110 = scmp.eq.s32.totalorder %s22, 0
      %p111 = por %p109, %p110
      %p112 = scmp.ne.s32.totalorder %s98, %s99
      %p113 = scmp.eq.s32.totalorder %s23, 1
      %p114 = por %p112, %p113
      %p116 = scmp.ne.s32.totalorder %s99, %s115
      %p117 = scmp.eq.s32.totalorder %s23, 0
      %p118 = por %p116, %p117
      %s119 = ssub.s32 %s17, %s24
      %p120 = scmp.eq.s32.totalorder %s119, 0
      %s122 = sadd.s32 %s121, 1
      %s123 = scalar_select %p120, %s121, %s122
      %p126 = pneg %p120
      %p127 = scmp.eq.s32.totalorder %s17, 1
      %p128 = por %p126, %p127
      %p129 = scmp.ne.s32.totalorder %s121, %s124
      %p130 = scmp.eq.s32.totalorder %s17, 0
      %p131 = por %p129, %p130
      %p132 = scmp.ne.s32.totalorder %s121, %s124
      %p133 = scmp.eq.s32.totalorder %s22, 1
      %p134 = por %p132, %p133
      %p135 = scmp.ne.s32.totalorder %s124, %s125
      %p136 = scmp.eq.s32.totalorder %s22, 0
      %p137 = por %p135, %p136
      %p138 = scmp.ne.s32.totalorder %s124, %s125
      %p139 = scmp.eq.s32.totalorder %s23, 1
      %p140 = por %p138, %p139
      %p142 = scmp.ne.s32.totalorder %s125, %s141
      %p143 = scmp.eq.s32.totalorder %s23, 0
      %p144 = por %p142, %p143
      %p145 = scmp.le.s32.totalorder 1, %s17
      %p146 = scmp.lt.s32.totalorder %s17, 3
      %p147 = pnand %p145, %p146
      %p148 = pneg %p147
      // Predicated region
      $region9: #{contractive_block.11} parent=5 // pred_check
        _
      $region10: #{contractive_block.11} parent=5 // pred_check_branch
        %150 = sbr.rel (%p147) target = $region12
      $region11: #{contractive_block.11} parent=5 // pred_region
        %s151 = ssub.s32 %s17, 1
        // Predicated region
        $region13: #{contractive_block.11} parent=11 // pred_check
          %p152 = pneg %p64
        $region14: #{contractive_block.11} parent=11 // pred_check_branch
          %154 = sbr.rel (%p152) target = $region16
        $region15: #{contractive_block.11} parent=11 // pred_region
          _
        $region16: #{contractive_block.11} parent=11 // pred_fallthru
          _
        // Predicated region
        $region17: #{contractive_block.11} parent=11 // pred_check
          %p155 = pneg %p85
        $region18: #{contractive_block.11} parent=11 // pred_check_branch
          %157 = sbr.rel (%p155) target = $region20
        $region19: #{contractive_block.11} parent=11 // pred_region
          _
        $region20: #{contractive_block.11} parent=11 // pred_fallthru
          _
      $region12: #{contractive_block.11} parent=5 // pred_fallthru
        _
      %p158 = scmp.lt.s32.totalorder %s17, 2
      // Predicated region
      $region21: #{contractive_block.11} parent=5 // pred_check
        %p159 = pneg %p158
      $region22: #{contractive_block.11} parent=5 // pred_check_branch
        %161 = sbr.rel (%p159) target = $region24
      $region23: #{contractive_block.11} parent=5 // pred_region
        // Predicated region
        $region25: #{contractive_block.11} parent=23 // pred_check
          %p162 = pneg %p37
        $region26: #{contractive_block.11} parent=23 // pred_check_branch
          %164 = sbr.rel (%p162) target = $region28
        $region27: #{contractive_block.11} parent=23 // pred_region
          %p165 = scmp.lt.s32.totalorder %s17, 1
          %s166 = scalar_select %p165, %s17, 1
          %s167 = smul.addr %s166, 8
          %s168 = smul.addr %s167, 8
          %s169 = scalar_lea.vmem %s0, %s168
        $region28: #{contractive_block.11} parent=23 // pred_fallthru
          _
      $region24: #{contractive_block.11} parent=5 // pred_fallthru
        _
      %p170 = scmp.le.s32.totalorder 1, %s17
      %p171 = scmp.lt.s32.totalorder %s17, 3
      %p172 = pnand %p170, %p171
      %p173 = pneg %p172
      // Predicated region
      $region29: #{contractive_block.11} parent=5 // pred_check
        _
      $region30: #{contractive_block.11} parent=5 // pred_check_branch
        %175 = sbr.rel (%p172) target = $region32
      $region31: #{contractive_block.11} parent=5 // pred_region
        %s176 = ssub.s32 %s17, 1
        %p177 = scmp.lt.s32.totalorder %s22, 1
        %s178 = scalar_select %p177, %s22, 1
        %s179 = smul.addr %s178, 8
        %s180 = smul.addr %s179, 8
        %s181 = scalar_lea.vmem %s0, %s180
        %p182 = pneg %p43
        %p183 = pneg %p40
        %p184 = pneg %p64
        %p185 = pneg %p61
        %p186 = pneg %p85
        %p187 = pneg %p82
        %p188 = pneg %p111
        %p189 = pneg %p108
        %s190 = sand.u32 %s98, 1
        %s191 = scalar_lea.sflag [#allocation3], %s190
        %s192 = sand.u32 %s98, 1
        %s193 = smul.addr %s192, 64
        %s194 = scalar_lea.vmem [#allocation2], %s193
        %p195 = pneg %p137
        %p196 = pneg %p134
        %s197 = sand.u32 %s124, 1
        %s198 = scalar_lea.sflag [#allocation5], %s197
        %s199 = sand.u32 %s124, 1
        %s200 = smul.addr %s199, 16
        %s201 = scalar_lea.vmem [#allocation4], %s200
        %p202 = scmp.lt.s32.totalorder %s22, 1
        %s203 = scalar_select %p202, %s22, 1
        %s204 = smul.addr %s203, 8
        %s205 = smul.addr %s204, 8
        %s206 = scalar_lea.vmem %s0, %s205
        %v207 = vld [vmem:[%s206] sm:$0xff]
        %v208 = vld [vmem:[%s206 + $0x8] sm:$0xff]
        %v209 = vld [vmem:[%s206 + $0x10] sm:$0xff]
        %v210 = vld [vmem:[%s206 + $0x18] sm:$0xff]
        %v211 = vld [vmem:[%s206 + $0x20] sm:$0xff]
        %v212 = vld [vmem:[%s206 + $0x28] sm:$0xff]
        %v213 = vld [vmem:[%s206 + $0x30] sm:$0xff]
        %v214 = vld [vmem:[%s206 + $0x38] sm:$0xff]
        %v215 = vld [vmem:[%s1] sm:$0x1]
        %v217 = vperm.slane %v215, 0
        %v219 = vmul.f32 %v207, %v217
        %v220 = vmul.f32 %v208, %v217
        %v221 = vmul.f32 %v209, %v217
        %v222 = vmul.f32 %v210, %v217
        %v223 = vmul.f32 %v211, %v217
        %v224 = vmul.f32 %v212, %v217
        %v225 = vmul.f32 %v213, %v217
        %v226 = vmul.f32 %v214, %v217
        %v227 = vld [vmem:[%s2] sm:$0x1]
        %v229 = vperm.slane %v227, 0
        %v231 = vadd.f32 %v219, %v229
        %v232 = vadd.f32 %v220, %v229
        %v233 = vadd.f32 %v221, %v229
        %v234 = vadd.f32 %v222, %v229
        %v235 = vadd.f32 %v223, %v229
        %v236 = vadd.f32 %v224, %v229
        %v237 = vadd.f32 %v225, %v229
        %v238 = vadd.f32 %v226, %v229
        %v239 = vmax.f32 %v231, 0.0
        %v240 = vmax.f32 %v232, 0.0
        %v241 = vmax.f32 %v233, 0.0
        %v242 = vmax.f32 %v234, 0.0
        %v243 = vmax.f32 %v235, 0.0
        %v244 = vmax.f32 %v236, 0.0
        %v245 = vmax.f32 %v237, 0.0
        %v246 = vmax.f32 %v238, 0.0
        %vm247 = vcmask 130048
        %248 = vst.msk [vmem:[%s194] sm:$0xff] %vm247, %v239
        %249 = vst.msk [vmem:[%s194 + $0x8] sm:$0xff] %vm247, %v240
        %250 = vst.msk [vmem:[%s194 + $0x10] sm:$0xff] %vm247, %v241
        %251 = vst.msk [vmem:[%s194 + $0x18] sm:$0xff] %vm247, %v242
        %252 = vst.msk [vmem:[%s194 + $0x20] sm:$0xff] %vm247, %v243
        %253 = vst.msk [vmem:[%s194 + $0x28] sm:$0xff] %vm247, %v244
        %254 = vst.msk [vmem:[%s194 + $0x30] sm:$0xff] %vm247, %v245
        %255 = vst.msk [vmem:[%s194 + $0x38] sm:$0xff] %vm247, %v246
        %v256 = vsel %vm247, %v239, -inf
        %v257 = vsel %vm247, %v240, -inf
        %v258 = vmax.f32 %v256, %v257
        %v259 = vsel %vm247, %v241, -inf
        %v260 = vsel %vm247, %v242, -inf
        %v261 = vmax.f32 %v259, %v260
        %v262 = vsel %vm247, %v243, -inf
        %v263 = vsel %vm247, %v244, -inf
        %v264 = vmax.f32 %v262, %v263
        %v265 = vsel %vm247, %v245, -inf
        %v266 = vsel %vm247, %v246, -inf
        %v267 = vmax.f32 %v265, %v266
        %v272 = vrot.slane %v258, 2
        %v273 = vrot.slane %v258, 4
        %v274 = vrot.slane %v258, 6
        %v275 = vrot.slane %v261, 2
        %v276 = vrot.slane %v261, 4
        %v277 = vrot.slane %v261, 6
        %v278 = vrot.slane %v264, 2
        %v279 = vrot.slane %v264, 4
        %v280 = vrot.slane %v264, 6
        %v281 = vrot.slane %v267, 2
        %v282 = vrot.slane %v267, 4
        %v283 = vrot.slane %v267, 6
        %vm296 = vcmask 123904
        %v297 = vsel %vm296, %v258, -inf
        %v298 = vrot.slane %v297, 4
        %v299 = vmax.f32 %v297, %v298
        %v300 = vrot.slane %v299, 2
        %v301 = vmax.f32 %v299, %v300
        %v302 = vrot.slane %v301, 1
        %v303 = vmax.f32 %v301, %v302
        %v304 = vsel %vm296, %v272, -inf
        %v305 = vrot.slane %v304, 4
        %v306 = vmax.f32 %v304, %v305
        %v307 = vrot.slane %v306, 2
        %v308 = vmax.f32 %v306, %v307
        %v309 = vrot.slane %v308, 1
        %v310 = vmax.f32 %v308, %v309
        %v311 = vsel %vm296, %v273, -inf
        %v312 = vrot.slane %v311, 4
        %v313 = vmax.f32 %v311, %v312
        %v314 = vrot.slane %v313, 2
        %v315 = vmax.f32 %v313, %v314
        %v316 = vrot.slane %v315, 1
        %v317 = vmax.f32 %v315, %v316
        %v318 = vsel %vm296, %v274, -inf
        %v319 = vrot.slane %v318, 4
        %v320 = vmax.f32 %v318, %v319
        %v321 = vrot.slane %v320, 2
        %v322 = vmax.f32 %v320, %v321
        %v323 = vrot.slane %v322, 1
        %v324 = vmax.f32 %v322, %v323
        %v325 = vsel %vm296, %v261, -inf
        %v326 = vrot.slane %v325, 4
        %v327 = vmax.f32 %v325, %v326
        %v328 = vrot.slane %v327, 2
        %v329 = vmax.f32 %v327, %v328
        %v330 = vrot.slane %v329, 1
        %v331 = vmax.f32 %v329, %v330
        %v332 = vsel %vm296, %v275, -inf
        %v333 = vrot.slane %v332, 4
        %v334 = vmax.f32 %v332, %v333
        %v335 = vrot.slane %v334, 2
        %v336 = vmax.f32 %v334, %v335
        %v337 = vrot.slane %v336, 1
        %v338 = vmax.f32 %v336, %v337
        %v339 = vsel %vm296, %v276, -inf
        %v340 = vrot.slane %v339, 4
        %v341 = vmax.f32 %v339, %v340
        %v342 = vrot.slane %v341, 2
        %v343 = vmax.f32 %v341, %v342
        %v344 = vrot.slane %v343, 1
        %v345 = vmax.f32 %v343, %v344
        %v346 = vsel %vm296, %v277, -inf
        %v347 = vrot.slane %v346, 4
        %v348 = vmax.f32 %v346, %v347
        %v349 = vrot.slane %v348, 2
        %v350 = vmax.f32 %v348, %v349
        %v351 = vrot.slane %v350, 1
        %v352 = vmax.f32 %v350, %v351
        %v353 = vsel %vm296, %v264, -inf
        %v354 = vrot.slane %v353, 4
        %v355 = vmax.f32 %v353, %v354
        %v356 = vrot.slane %v355, 2
        %v357 = vmax.f32 %v355, %v356
        %v358 = vrot.slane %v357, 1
        %v359 = vmax.f32 %v357, %v358
        %v360 = vsel %vm296, %v278, -inf
        %v361 = vrot.slane %v360, 4
        %v362 = vmax.f32 %v360, %v361
        %v363 = vrot.slane %v362, 2
        %v364 = vmax.f32 %v362, %v363
        %v365 = vrot.slane %v364, 1
        %v366 = vmax.f32 %v364, %v365
        %v367 = vsel %vm296, %v279, -inf
        %v368 = vrot.slane %v367, 4
        %v369 = vmax.f32 %v367, %v368
        %v370 = vrot.slane %v369, 2
        %v371 = vmax.f32 %v369, %v370
        %v372 = vrot.slane %v371, 1
        %v373 = vmax.f32 %v371, %v372
        %v374 = vsel %vm296, %v280, -inf
        %v375 = vrot.slane %v374, 4
        %v376 = vmax.f32 %v374, %v375
        %v377 = vrot.slane %v376, 2
        %v378 = vmax.f32 %v376, %v377
        %v379 = vrot.slane %v378, 1
        %v380 = vmax.f32 %v378, %v379
        %v381 = vsel %vm296, %v267, -inf
        %v382 = vrot.slane %v381, 4
        %v383 = vmax.f32 %v381, %v382
        %v384 = vrot.slane %v383, 2
        %v385 = vmax.f32 %v383, %v384
        %v386 = vrot.slane %v385, 1
        %v387 = vmax.f32 %v385, %v386
        %v388 = vsel %vm296, %v281, -inf
        %v389 = vrot.slane %v388, 4
        %v390 = vmax.f32 %v388, %v389
        %v391 = vrot.slane %v390, 2
        %v392 = vmax.f32 %v390, %v391
        %v393 = vrot.slane %v392, 1
        %v394 = vmax.f32 %v392, %v393
        %v395 = vsel %vm296, %v282, -inf
        %v396 = vrot.slane %v395, 4
        %v397 = vmax.f32 %v395, %v396
        %v398 = vrot.slane %v397, 2
        %v399 = vmax.f32 %v397, %v398
        %v400 = vrot.slane %v399, 1
        %v401 = vmax.f32 %v399, %v400
        %v402 = vsel %vm296, %v283, -inf
        %v403 = vrot.slane %v402, 4
        %v404 = vmax.f32 %v402, %v403
        %v405 = vrot.slane %v404, 2
        %v406 = vmax.f32 %v404, %v405
        %v407 = vrot.slane %v406, 1
        %v408 = vmax.f32 %v406, %v407
        %vm425 = vcmask 1041409
        %v426 = vsel %vm425, %v310, %v303
        %vm427 = vcmask 1042434
        %v428 = vsel %vm427, %v317, %v426
        %vm429 = vcmask 1043459
        %v430 = vsel %vm429, %v324, %v428
        %v431 = vsel %vm425, %v338, %v331
        %v432 = vsel %vm427, %v345, %v431
        %v433 = vsel %vm429, %v352, %v432
        %v434 = vsel %vm425, %v366, %v359
        %v435 = vsel %vm427, %v373, %v434
        %v436 = vsel %vm429, %v380, %v435
        %v437 = vsel %vm425, %v394, %v387
        %v438 = vsel %vm427, %v401, %v437
        %v439 = vsel %vm429, %v408, %v438
        %vm444 = vcmask 125952
        %445 = vst.msk [vmem:[%s201] sm:$0xf] %vm444, %v430
        %446 = vst.msk [vmem:[%s201 + $0x4] sm:$0xf] %vm444, %v433
        %447 = vst.msk [vmem:[%s201 + $0x8] sm:$0xf] %vm444, %v436
        %448 = vst.msk [vmem:[%s201 + $0xc] sm:$0xf] %vm444, %v439
        %s449 = sand.u32 %s98, 1
        %s450 = scalar_lea.sflag [#allocation3], %s449
        %s451 = sand.u32 %s98, 1
        %s452 = smul.addr %s451, 64
        %s453 = scalar_lea.vmem [#allocation2], %s452
        %s454 = sand.u32 %s124, 1
        %s455 = scalar_lea.sflag [#allocation5], %s454
        %s456 = sand.u32 %s124, 1
        %s457 = smul.addr %s456, 16
        %s458 = scalar_lea.vmem [#allocation4], %s457
        // Predicated region
        $region33: #{contractive_block.11} parent=31 // pred_check
          %p459 = pneg %p108
        $region34: #{contractive_block.11} parent=31 // pred_check_branch
          %461 = sbr.rel (%p459) target = $region36
        $region35: #{contractive_block.11} parent=31 // pred_region
          %463 = vsyncadd %s450, 0
          %s464 = smul.addr %s22, 8
          %s465 = smul.addr %s464, 8
          %s466 = scalar_lea.hbm %s3, %s465
          %s467 = sshll.u32 %s453, 4
          %s468 = int_to_ptr.vmem [resolvable:$true] %s467
          %s469 = sshll.u32 %s466, 4
          %s470 = int_to_ptr.hbm [resolvable:$true] %s469
          %475 = dma.vmem_to_hbm [thread:$0]  %s468, 1024, %s470, %s450, 128, 128, 8
        $region36: #{contractive_block.11} parent=31 // pred_fallthru
          _
        // Predicated region
        $region37: #{contractive_block.11} parent=31 // pred_check
          %p476 = pneg %p134
        $region38: #{contractive_block.11} parent=31 // pred_check_branch
          %478 = sbr.rel (%p476) target = $region40
        $region39: #{contractive_block.11} parent=31 // pred_region
          %480 = vsyncadd %s455, 0
          %s481 = smul.addr %s22, 4
          %s482 = smul.addr %s481, 4
          %s483 = scalar_lea.hbm %s4, %s482
          %s484 = sshll.u32 %s458, 4
          %s485 = int_to_ptr.vmem [resolvable:$true] %s484
          %s486 = sshll.u32 %s483, 4
          %s487 = int_to_ptr.hbm [resolvable:$true] %s486
          %492 = dma.vmem_to_hbm [thread:$0]  %s485, 256, %s487, %s455, 64, 64, 4
        $region40: #{contractive_block.11} parent=31 // pred_fallthru
          _
      $region32: #{contractive_block.11} parent=5 // pred_fallthru
        _
      %p493 = scmp.le.s32.totalorder 2, %s17
      // Predicated region
      $region41: #{contractive_block.11} parent=5 // pred_check
        %p494 = pneg %p493
      $region42: #{contractive_block.11} parent=5 // pred_check_branch
        %496 = sbr.rel (%p494) target = $region44
      $region43: #{contractive_block.11} parent=5 // pred_region
        %s497 = ssub.s32 %s17, 2
        // Predicated region
        $region45: #{contractive_block.11} parent=43 // pred_check
          %p498 = pneg %p114
        $region46: #{contractive_block.11} parent=43 // pred_check_branch
          %500 = sbr.rel (%p498) target = $region48
        $region47: #{contractive_block.11} parent=43 // pred_region
          %s501 = sand.u32 %s99, 1
          %s502 = scalar_lea.sflag [#allocation3], %s501
          %s503 = sand.u32 %s99, 1
          %s504 = smul.addr %s503, 64
          %s505 = scalar_lea.vmem [#allocation2], %s504
          %507 = dma.done %s502, 1024
        $region48: #{contractive_block.11} parent=43 // pred_fallthru
          _
        // Predicated region
        $region49: #{contractive_block.11} parent=43 // pred_check
          %p508 = pneg %p140
        $region50: #{contractive_block.11} parent=43 // pred_check_branch
          %510 = sbr.rel (%p508) target = $region52
        $region51: #{contractive_block.11} parent=43 // pred_region
          %s511 = sand.u32 %s125, 1
          %s512 = scalar_lea.sflag [#allocation5], %s511
          %s513 = sand.u32 %s125, 1
          %s514 = smul.addr %s513, 16
          %s515 = scalar_lea.vmem [#allocation4], %s514
          %517 = dma.done %s512, 256
        $region52: #{contractive_block.11} parent=43 // pred_fallthru
          _
      $region44: #{contractive_block.11} parent=5 // pred_fallthru
        _
    $region6: #{contractive_block.11} parent=1 // loop_footer
      %s21 = sadd.s32 1, %s17
    $region7: #{contractive_block.11} parent=1 // loop_footer_branch
      %16 = sbr.rel target = $region3
    $region8: #{contractive_block.11} parent=1 // loop_exit
      _
    %518 = vsyncpa [#allocation3], 1
    %s519 = scalar_lea.sflag [#allocation3], 1
    %520 = vsyncpa %s519, 1
    %521 = vsyncpa [#allocation5], 1
    %s522 = scalar_lea.sflag [#allocation5], 1
    %523 = vsyncpa %s522, 1

// kernel: contractive_block.10
$region0: #{contractive_block.10}
  #allocation0 [shape = 'u32[]', space=smem, size = 0x4, offset = 0x4, fixed_abs, tag = 'smem constant byte address 0x4 - core index']
  #allocation1 [shape = 'u32[72,128]{1,0:T(1,128)}', space=vmem, size = 0x9000, scoped, tag = 'internal scratch']
  %s0 = inlined_call_operand.vmem [shape: f32[2,8,8,16], index: 0, kind: input, shape index: {}]
  %s1 = inlined_call_operand.vmem [shape: bf16[144,16], index: 1, kind: input, shape index: {}]
  %s2 = inlined_call_operand.vmem [shape: f32[1,16], index: 2, kind: input, shape index: {}]
  %s3 = inlined_call_operand.vmem [shape: f32[1,16], index: 3, kind: input, shape index: {}]
  %s4 = inlined_call_operand.vmem [shape: f32[1,16], index: 4, kind: input, shape index: {}]
  %s5 = inlined_call_operand.vmem [shape: f32[2,8,8,16], index: 5, kind: output, shape index: {0}]
  %s6 = inlined_call_operand.vmem [shape: f32[2,2,16], index: 6, kind: output, shape index: {1}]
  %7 = xla_tuple %s5, %s6
  %s8 = sld [smem:[#allocation0]]
  $region61: #{contractive_block.10} parent=0
    _
  %s10 = ssub.s32 1, %s8
  %s11 = scalar_select 0, %s10, %s8
  loop: start=0, step=1, limit=4
  $region2: #{contractive_block.10} parent=0 // loop_pre_header
    _
  $region3: #{contractive_block.10} parent=0 // loop_header
    %s13 = sphi 0, %s17
    %p14 = scmp.ge.s32.totalorder %s13, 4
    %s23 = sphi 0, %s25
    %s26 = sphi 0, %s23
    %s27 = sphi 0, %s26
    %s43 = sphi 0, %s27
    %s47 = sphi 0, %s47
    %s49 = sphi 0, %s47
    %s50 = sphi 0, %s49
    %s64 = sphi 0, %s50
    %s68 = sphi 0, %s68
    %s70 = sphi 0, %s68
    %s71 = sphi 0, %s70
    %s85 = sphi 0, %s71
    %s89 = sphi 0, %s89
    %s91 = sphi 0, %s89
    %s92 = sphi 0, %s91
    %s106 = sphi 0, %s92
    %s110 = sphi 0, %s110
    %s112 = sphi 0, %s110
    %s113 = sphi 0, %s112
    %s127 = sphi 0, %s113
    %s133 = sphi 0, %s135
    %s136 = sphi 0, %s133
    %s137 = sphi 0, %s136
    %s153 = sphi 0, %s137
    %s159 = sphi 0, %s161
    %s162 = sphi 0, %s159
    %s163 = sphi 0, %s162
    %s179 = sphi 0, %s163
  $region4: #{contractive_block.10} parent=0 // loop_header_branch
    %16 = sbr.rel (%p14) target = $region8
  $region5: #{contractive_block.10} parent=0 // loop_body
    %s18 = ssub.s32 %s13, 1
    %s19 = ssub.s32 %s13, 2
    %s20 = sadd.s32 %s13, 1
    %s21 = ssub.s32 %s13, %s20
    %p22 = scmp.eq.s32.totalorder %s21, 0
    %s24 = sadd.s32 %s23, 1
    %s25 = scalar_select %p22, %s23, %s24
    %p28 = pneg %p22
    %p29 = scmp.eq.s32.totalorder %s13, 1
    %p30 = por %p28, %p29
    %p31 = scmp.ne.s32.totalorder %s23, %s26
    %p32 = scmp.eq.s32.totalorder %s13, 0
    %p33 = por %p31, %p32
    %p34 = scmp.ne.s32.totalorder %s23, %s26
    %p35 = scmp.eq.s32.totalorder %s18, 1
    %p36 = por %p34, %p35
    %p37 = scmp.ne.s32.totalorder %s26, %s27
    %p38 = scmp.eq.s32.totalorder %s18, 0
    %p39 = por %p37, %p38
    %p40 = scmp.ne.s32.totalorder %s26, %s27
    %p41 = scmp.eq.s32.totalorder %s19, 1
    %p42 = por %p40, %p41
    %p44 = scmp.ne.s32.totalorder %s27, %s43
    %p45 = scmp.eq.s32.totalorder %s19, 0
    %p46 = por %p44, %p45
    %s48 = sadd.s32 %s47, 1
    %p51 = scmp.eq.s32.totalorder %s13, 1
    %p52 = scmp.ne.s32.totalorder %s47, %s49
    %p53 = scmp.eq.s32.totalorder %s13, 0
    %p54 = por %p52, %p53
    %p55 = scmp.ne.s32.totalorder %s47, %s49
    %p56 = scmp.eq.s32.totalorder %s18, 1
    %p57 = por %p55, %p56
    %p58 = scmp.ne.s32.totalorder %s49, %s50
    %p59 = scmp.eq.s32.totalorder %s18, 0
    %p60 = por %p58, %p59
    %p61 = scmp.ne.s32.totalorder %s49, %s50
    %p62 = scmp.eq.s32.totalorder %s19, 1
    %p63 = por %p61, %p62
    %p65 = scmp.ne.s32.totalorder %s50, %s64
    %p66 = scmp.eq.s32.totalorder %s19, 0
    %p67 = por %p65, %p66
    %s69 = sadd.s32 %s68, 1
    %p72 = scmp.eq.s32.totalorder %s13, 1
    %p73 = scmp.ne.s32.totalorder %s68, %s70
    %p74 = scmp.eq.s32.totalorder %s13, 0
    %p75 = por %p73, %p74
    %p76 = scmp.ne.s32.totalorder %s68, %s70
    %p77 = scmp.eq.s32.totalorder %s18, 1
    %p78 = por %p76, %p77
    %p79 = scmp.ne.s32.totalorder %s70, %s71
    %p80 = scmp.eq.s32.totalorder %s18, 0
    %p81 = por %p79, %p80
    %p82 = scmp.ne.s32.totalorder %s70, %s71
    %p83 = scmp.eq.s32.totalorder %s19, 1
    %p84 = por %p82, %p83
    %p86 = scmp.ne.s32.totalorder %s71, %s85
    %p87 = scmp.eq.s32.totalorder %s19, 0
    %p88 = por %p86, %p87
    %s90 = sadd.s32 %s89, 1
    %p93 = scmp.eq.s32.totalorder %s13, 1
    %p94 = scmp.ne.s32.totalorder %s89, %s91
    %p95 = scmp.eq.s32.totalorder %s13, 0
    %p96 = por %p94, %p95
    %p97 = scmp.ne.s32.totalorder %s89, %s91
    %p98 = scmp.eq.s32.totalorder %s18, 1
    %p99 = por %p97, %p98
    %p100 = scmp.ne.s32.totalorder %s91, %s92
    %p101 = scmp.eq.s32.totalorder %s18, 0
    %p102 = por %p100, %p101
    %p103 = scmp.ne.s32.totalorder %s91, %s92
    %p104 = scmp.eq.s32.totalorder %s19, 1
    %p105 = por %p103, %p104
    %p107 = scmp.ne.s32.totalorder %s92, %s106
    %p108 = scmp.eq.s32.totalorder %s19, 0
    %p109 = por %p107, %p108
    %s111 = sadd.s32 %s110, 1
    %p114 = scmp.eq.s32.totalorder %s13, 1
    %p115 = scmp.ne.s32.totalorder %s110, %s112
    %p116 = scmp.eq.s32.totalorder %s13, 0
    %p117 = por %p115, %p116
    %p118 = scmp.ne.s32.totalorder %s110, %s112
    %p119 = scmp.eq.s32.totalorder %s18, 1
    %p120 = por %p118, %p119
    %p121 = scmp.ne.s32.totalorder %s112, %s113
    %p122 = scmp.eq.s32.totalorder %s18, 0
    %p123 = por %p121, %p122
    %p124 = scmp.ne.s32.totalorder %s112, %s113
    %p125 = scmp.eq.s32.totalorder %s19, 1
    %p126 = por %p124, %p125
    %p128 = scmp.ne.s32.totalorder %s113, %s127
    %p129 = scmp.eq.s32.totalorder %s19, 0
    %p130 = por %p128, %p129
    %s131 = ssub.s32 %s13, %s20
    %p132 = scmp.eq.s32.totalorder %s131, 0
    %s134 = sadd.s32 %s133, 1
    %s135 = scalar_select %p132, %s133, %s134
    %p138 = pneg %p132
    %p139 = scmp.eq.s32.totalorder %s13, 1
    %p140 = por %p138, %p139
    %p141 = scmp.ne.s32.totalorder %s133, %s136
    %p142 = scmp.eq.s32.totalorder %s13, 0
    %p143 = por %p141, %p142
    %p144 = scmp.ne.s32.totalorder %s133, %s136
    %p145 = scmp.eq.s32.totalorder %s18, 1
    %p146 = por %p144, %p145
    %p147 = scmp.ne.s32.totalorder %s136, %s137
    %p148 = scmp.eq.s32.totalorder %s18, 0
    %p149 = por %p147, %p148
    %p150 = scmp.ne.s32.totalorder %s136, %s137
    %p151 = scmp.eq.s32.totalorder %s19, 1
    %p152 = por %p150, %p151
    %p154 = scmp.ne.s32.totalorder %s137, %s153
    %p155 = scmp.eq.s32.totalorder %s19, 0
    %p156 = por %p154, %p155
    %s157 = ssub.s32 %s13, %s20
    %p158 = scmp.eq.s32.totalorder %s157, 0
    %s160 = sadd.s32 %s159, 1
    %s161 = scalar_select %p158, %s159, %s160
    %p164 = pneg %p158
    %p165 = scmp.eq.s32.totalorder %s13, 1
    %p166 = por %p164, %p165
    %p167 = scmp.ne.s32.totalorder %s159, %s162
    %p168 = scmp.eq.s32.totalorder %s13, 0
    %p169 = por %p167, %p168
    %p170 = scmp.ne.s32.totalorder %s159, %s162
    %p171 = scmp.eq.s32.totalorder %s18, 1
    %p172 = por %p170, %p171
    %p173 = scmp.ne.s32.totalorder %s162, %s163
    %p174 = scmp.eq.s32.totalorder %s18, 0
    %p175 = por %p173, %p174
    %p176 = scmp.ne.s32.totalorder %s162, %s163
    %p177 = scmp.eq.s32.totalorder %s19, 1
    %p178 = por %p176, %p177
    %p180 = scmp.ne.s32.totalorder %s163, %s179
    %p181 = scmp.eq.s32.totalorder %s19, 0
    %p182 = por %p180, %p181
    %p183 = scmp.le.s32.totalorder 1, %s13
    %p184 = scmp.lt.s32.totalorder %s13, 3
    %p185 = pnand %p183, %p184
    %p186 = pneg %p185
    // Predicated region
    $region9: #{contractive_block.10} parent=5 // pred_check
      _
    $region10: #{contractive_block.10} parent=5 // pred_check_branch
      %188 = sbr.rel (%p185) target = $region12
    $region11: #{contractive_block.10} parent=5 // pred_region
      %s189 = ssub.s32 %s13, 1
      // Predicated region
      $region13: #{contractive_block.10} parent=11 // pred_check
        %p190 = pneg %p60
      $region14: #{contractive_block.10} parent=11 // pred_check_branch
        %192 = sbr.rel (%p190) target = $region16
      $region15: #{contractive_block.10} parent=11 // pred_region
        _
      $region16: #{contractive_block.10} parent=11 // pred_fallthru
        _
      // Predicated region
      $region17: #{contractive_block.10} parent=11 // pred_check
        %p193 = pneg %p81
      $region18: #{contractive_block.10} parent=11 // pred_check_branch
        %195 = sbr.rel (%p193) target = $region20
      $region19: #{contractive_block.10} parent=11 // pred_region
        _
      $region20: #{contractive_block.10} parent=11 // pred_fallthru
        _
      // Predicated region
      $region21: #{contractive_block.10} parent=11 // pred_check
        %p196 = pneg %p102
      $region22: #{contractive_block.10} parent=11 // pred_check_branch
        %198 = sbr.rel (%p196) target = $region24
      $region23: #{contractive_block.10} parent=11 // pred_region
        _
      $region24: #{contractive_block.10} parent=11 // pred_fallthru
        _
      // Predicated region
      $region25: #{contractive_block.10} parent=11 // pred_check
        %p199 = pneg %p123
      $region26: #{contractive_block.10} parent=11 // pred_check_branch
        %201 = sbr.rel (%p199) target = $region28
      $region27: #{contractive_block.10} parent=11 // pred_region
        _
      $region28: #{contractive_block.10} parent=11 // pred_fallthru
        _
    $region12: #{contractive_block.10} parent=5 // pred_fallthru
      _
    %p202 = scmp.lt.s32.totalorder %s13, 2
    // Predicated region
    $region29: #{contractive_block.10} parent=5 // pred_check
      %p203 = pneg %p202
    $region30: #{contractive_block.10} parent=5 // pred_check_branch
      %205 = sbr.rel (%p203) target = $region32
    $region31: #{contractive_block.10} parent=5 // pred_region
      // Predicated region
      $region33: #{contractive_block.10} parent=31 // pred_check
        %p206 = pneg %p33
      $region34: #{contractive_block.10} parent=31 // pred_check_branch
        %208 = sbr.rel (%p206) target = $region36
      $region35: #{contractive_block.10} parent=31 // pred_region
        %p209 = scmp.lt.s32.totalorder %s13, 1
        %s210 = scalar_select %p209, %s13, 1
        %s211 = smul.addr %s210, 8
        %s212 = smul.addr %s211, 8
        %s213 = scalar_lea.vmem %s0, %s212
      $region36: #{contractive_block.10} parent=31 // pred_fallthru
        _
    $region32: #{contractive_block.10} parent=5 // pred_fallthru
      _
    %p214 = scmp.le.s32.totalorder 1, %s13
    %p215 = scmp.lt.s32.totalorder %s13, 3
    %p216 = pnand %p214, %p215
    %p217 = pneg %p216
    // Predicated region
    $region37: #{contractive_block.10} parent=5 // pred_check
      _
    $region38: #{contractive_block.10} parent=5 // pred_check_branch
      %219 = sbr.rel (%p216) target = $region40
    $region39: #{contractive_block.10} parent=5 // pred_region
      %s220 = ssub.s32 %s13, 1
      %p221 = scmp.lt.s32.totalorder %s18, 1
      %s222 = scalar_select %p221, %s18, 1
      %s223 = smul.addr %s222, 8
      %s224 = smul.addr %s223, 8
      %s225 = scalar_lea.vmem %s0, %s224
      %p226 = pneg %p39
      %p227 = pneg %p36
      %p228 = pneg %p60
      %p229 = pneg %p57
      %p230 = pneg %p81
      %p231 = pneg %p78
      %p232 = pneg %p102
      %p233 = pneg %p99
      %p234 = pneg %p123
      %p235 = pneg %p120
      %p236 = pneg %p149
      %p237 = pneg %p146
      %p238 = scmp.lt.s32.totalorder %s18, 1
      %s239 = scalar_select %p238, %s18, 1
      %s240 = smul.addr %s239, 8
      %s241 = smul.addr %s240, 8
      %s242 = scalar_lea.vmem %s5, %s241
      %p243 = pneg %p175
      %p244 = pneg %p172
      %p245 = scmp.lt.s32.totalorder %s18, 1
      %s246 = scalar_select %p245, %s18, 1
      %s247 = smul.addr %s246, 2
      %s248 = scalar_lea.vmem %s6, %s247
      %p249 = scmp.lt.s32.totalorder %s18, 1
      %s250 = scalar_select %p249, %s18, 1
      %s251 = smul.addr %s250, 8
      %s252 = smul.addr %s251, 8
      %s253 = scalar_lea.vmem %s0, %s252
      %p254 = scmp.lt.s32.totalorder %s18, 1
      %s255 = scalar_select %p254, %s18, 1
      %s256 = smul.addr %s255, 8
      %s257 = smul.addr %s256, 8
      %s258 = scalar_lea.vmem %s5, %s257
      %p259 = scmp.lt.s32.totalorder %s18, 1
      %s260 = scalar_select %p259, %s18, 1
      %s261 = smul.addr %s260, 2
      %s262 = scalar_lea.vmem %s6, %s261
      %v264 = vld [vmem:[%s253] sm:$0xff]
      %v265 = vld [vmem:[%s253 + $0x8] sm:$0xff]
      %v266 = vld [vmem:[%s253 + $0x10] sm:$0xff]
      %v267 = vld [vmem:[%s253 + $0x18] sm:$0xff]
      %v268 = vld [vmem:[%s253 + $0x20] sm:$0xff]
      %v269 = vld [vmem:[%s253 + $0x28] sm:$0xff]
      %v270 = vld [vmem:[%s253 + $0x30] sm:$0xff]
      %v271 = vld [vmem:[%s253 + $0x38] sm:$0xff]
      %v272 = vld [vmem:[%s3] sm:$0x1]
      %v274 = vperm.slane %v272, 0
      %v276 = vmul.f32 %v264, %v274
      %v277 = vmul.f32 %v265, %v274
      %v278 = vmul.f32 %v266, %v274
      %v279 = vmul.f32 %v267, %v274
      %v280 = vmul.f32 %v268, %v274
      %v281 = vmul.f32 %v269, %v274
      %v282 = vmul.f32 %v270, %v274
      %v283 = vmul.f32 %v271, %v274
      %v284 = vld [vmem:[%s4] sm:$0x1]
      %v286 = vperm.slane %v284, 0
      %v288 = vadd.f32 %v276, %v286
      %v289 = vadd.f32 %v277, %v286
      %v290 = vadd.f32 %v278, %v286
      %v291 = vadd.f32 %v279, %v286
      %v292 = vadd.f32 %v280, %v286
      %v293 = vadd.f32 %v281, %v286
      %v294 = vadd.f32 %v282, %v286
      %v295 = vadd.f32 %v283, %v286
      %v296 = vmax.f32 %v288, 0.0
      %v297 = vmax.f32 %v289, 0.0
      %v298 = vmax.f32 %v290, 0.0
      %v299 = vmax.f32 %v291, 0.0
      %v300 = vmax.f32 %v292, 0.0
      %v301 = vmax.f32 %v293, 0.0
      %v302 = vmax.f32 %v294, 0.0
      %v303 = vmax.f32 %v295, 0.0
      %v304 = vpack.c.bf16 %v296, %v296
      %v305 = vpack.c.bf16 %v297, %v297
      %v306 = vpack.c.bf16 %v298, %v298
      %v307 = vpack.c.bf16 %v299, %v299
      %v308 = vpack.c.bf16 %v300, %v300
      %v309 = vpack.c.bf16 %v301, %v301
      %v310 = vpack.c.bf16 %v302, %v302
      %v311 = vpack.c.bf16 %v303, %v303
      %v320 = vunpack.c.l.b16 %v304
      %v321 = vunpack.c.l.b16 %v305
      %v322 = vunpack.c.l.b16 %v306
      %v323 = vunpack.c.l.b16 %v307
      %v324 = vunpack.c.l.b16 %v308
      %v325 = vunpack.c.l.b16 %v309
      %v326 = vunpack.c.l.b16 %v310
      %v327 = vunpack.c.l.b16 %v311
      %v328 = vpack.c.b16 %v320, %v320
      %v329 = vpack.c.b16 %v321, %v321
      %v330 = vpack.c.b16 %v322, %v322
      %v331 = vpack.c.b16 %v323, %v323
      %v332 = vpack.c.b16 %v324, %v324
      %v333 = vpack.c.b16 %v325, %v325
      %v334 = vpack.c.b16 %v326, %v326
      %v335 = vpack.c.b16 %v327, %v327
      %v337 = vshrl.u32 %v328, 16
      %v339 = vrot.slane %v337, 7
      %v340 = vshll.u32 %v328, 16
      %v342 = vor.u32 %v339, %v340
      %v344 = vshrl.u32 %v329, 16
      %v346 = vrot.slane %v344, 7
      %v347 = vshll.u32 %v329, 16
      %v349 = vor.u32 %v346, %v347
      %v351 = vshrl.u32 %v330, 16
      %v353 = vrot.slane %v351, 7
      %v354 = vshll.u32 %v330, 16
      %v356 = vor.u32 %v353, %v354
      %v358 = vshrl.u32 %v331, 16
      %v360 = vrot.slane %v358, 7
      %v361 = vshll.u32 %v331, 16
      %v363 = vor.u32 %v360, %v361
      %v365 = vshrl.u32 %v332, 16
      %v367 = vrot.slane %v365, 7
      %v368 = vshll.u32 %v332, 16
      %v370 = vor.u32 %v367, %v368
      %v372 = vshrl.u32 %v333, 16
      %v374 = vrot.slane %v372, 7
      %v375 = vshll.u32 %v333, 16
      %v377 = vor.u32 %v374, %v375
      %v379 = vshrl.u32 %v334, 16
      %v381 = vrot.slane %v379, 7
      %v382 = vshll.u32 %v334, 16
      %v384 = vor.u32 %v381, %v382
      %v386 = vshrl.u32 %v335, 16
      %v388 = vrot.slane %v386, 7
      %v389 = vshll.u32 %v335, 16
      %v391 = vor.u32 %v388, %v389
      %vm400 = vcmask 1040384
      %vm401 = vsmask.f32 256
      %vm402 = vmand %vm400, %vm401
      %v403 = vsel %vm402, 0, %v342
      %v404 = vsel %vm402, 0, %v349
      %v405 = vsel %vm402, 0, %v356
      %v406 = vsel %vm402, 0, %v363
      %v407 = vsel %vm402, 0, %v370
      %v408 = vsel %vm402, 0, %v377
      %v409 = vsel %vm402, 0, %v384
      %v410 = vsel %vm402, 0, %v391
      %v411 = vrot.slane %v340, 1
      %v412 = vor.u32 %v337, %v411
      %v413 = vrot.slane %v347, 1
      %v414 = vor.u32 %v344, %v413
      %v415 = vrot.slane %v354, 1
      %v416 = vor.u32 %v351, %v415
      %v417 = vrot.slane %v361, 1
      %v418 = vor.u32 %v358, %v417
      %v419 = vrot.slane %v368, 1
      %v420 = vor.u32 %v365, %v419
      %v421 = vrot.slane %v375, 1
      %v422 = vor.u32 %v372, %v421
      %v423 = vrot.slane %v382, 1
      %v424 = vor.u32 %v379, %v423
      %v425 = vrot.slane %v389, 1
      %v426 = vor.u32 %v386, %v425
      %vm435 = vcmask 1043456
      %vm436 = vsmask.f32 3328
      %vm437 = vmand %vm435, %vm436
      %v438 = vsel %vm437, %v412, 0
      %v439 = vsel %vm437, %v414, 0
      %v440 = vsel %vm437, %v416, 0
      %v441 = vsel %vm437, %v418, 0
      %v442 = vsel %vm437, %v420, 0
      %v443 = vsel %vm437, %v422, 0
      %v444 = vsel %vm437, %v424, 0
      %v445 = vsel %vm437, %v426, 0
      %446 = vrot.lane.b32.xlu0 %v328, 16
      %v447 = vpop.permute.xlu0 %446
      %448 = vrot.lane.b32.xlu0 %v329, 16
      %v449 = vpop.permute.xlu0 %448
      %450 = vrot.lane.b32.xlu0 %v330, 16
      %v451 = vpop.permute.xlu0 %450
      %452 = vrot.lane.b32.xlu0 %v331, 16
      %v453 = vpop.permute.xlu0 %452
      %454 = vrot.lane.b32.xlu0 %v332, 16
      %v455 = vpop.permute.xlu0 %454
      %456 = vrot.lane.b32.xlu0 %v333, 16
      %v457 = vpop.permute.xlu0 %456
      %458 = vrot.lane.b32.xlu0 %v334, 16
      %v459 = vpop.permute.xlu0 %458
      %460 = vrot.lane.b32.xlu0 %v335, 16
      %v461 = vpop.permute.xlu0 %460
      %470 = vrot.lane.b32.xlu0 %v438, 32
      %v471 = vpop.permute.xlu0 %470
      %472 = vrot.lane.b32.xlu0 %v439, 32
      %v473 = vpop.permute.xlu0 %472
      %474 = vrot.lane.b32.xlu0 %v440, 32
      %v475 = vpop.permute.xlu0 %474
      %476 = vrot.lane.b32.xlu0 %v441, 32
      %v477 = vpop.permute.xlu0 %476
      %478 = vrot.lane.b32.xlu0 %v442, 32
      %v479 = vpop.permute.xlu0 %478
      %480 = vrot.lane.b32.xlu0 %v443, 32
      %v481 = vpop.permute.xlu0 %480
      %482 = vrot.lane.b32.xlu0 %v444, 32
      %v483 = vpop.permute.xlu0 %482
      %484 = vrot.lane.b32.xlu0 %v445, 32
      %v485 = vpop.permute.xlu0 %484
      %vm486 = vcmask 130048
      %v489 = vsel %vm486, %v403, %v447
      %v492 = vsel %vm486, %v404, %v449
      %v495 = vsel %vm486, %v405, %v451
      %v498 = vsel %vm486, %v406, %v453
      %v501 = vsel %vm486, %v407, %v455
      %v504 = vsel %vm486, %v408, %v457
      %v507 = vsel %vm486, %v409, %v459
      %v510 = vsel %vm486, %v410, %v461
      %vm511 = vcmask 261120
      %v513 = vsel %vm511, %v489, %v471
      %v515 = vsel %vm511, %v492, %v473
      %v517 = vsel %vm511, %v495, %v475
      %v519 = vsel %vm511, %v498, %v477
      %v521 = vsel %vm511, %v501, %v479
      %v523 = vsel %vm511, %v504, %v481
      %v525 = vsel %vm511, %v507, %v483
      %v527 = vsel %vm511, %v510, %v485
      %536 = vrot.lane.b32.xlu0 %v513, 48
      %v537 = vpop.permute.xlu0 %536
      %538 = vrot.lane.b32.xlu0 %v515, 48
      %v539 = vpop.permute.xlu0 %538
      %540 = vrot.lane.b32.xlu0 %v517, 48
      %v541 = vpop.permute.xlu0 %540
      %542 = vrot.lane.b32.xlu0 %v519, 48
      %v543 = vpop.permute.xlu0 %542
      %544 = vrot.lane.b32.xlu0 %v521, 48
      %v545 = vpop.permute.xlu0 %544
      %546 = vrot.lane.b32.xlu0 %v523, 48
      %v547 = vpop.permute.xlu0 %546
      %548 = vrot.lane.b32.xlu0 %v525, 48
      %v549 = vpop.permute.xlu0 %548
      %550 = vrot.lane.b32.xlu0 %v527, 48
      %v551 = vpop.permute.xlu0 %550
      %553 = vrot.lane.b32.xlu0 %v515, 96
      %v554 = vpop.permute.xlu0 %553
      %555 = vrot.lane.b32.xlu0 %v517, 96
      %v556 = vpop.permute.xlu0 %555
      %557 = vrot.lane.b32.xlu0 %v519, 96
      %v558 = vpop.permute.xlu0 %557
      %559 = vrot.lane.b32.xlu0 %v521, 96
      %v560 = vpop.permute.xlu0 %559
      %561 = vrot.lane.b32.xlu0 %v523, 96
      %v562 = vpop.permute.xlu0 %561
      %563 = vrot.lane.b32.xlu0 %v525, 96
      %v564 = vpop.permute.xlu0 %563
      %565 = vrot.lane.b32.xlu0 %v527, 96
      %v566 = vpop.permute.xlu0 %565
      %567 = vrot.lane.b32.xlu0 0, 96
      %v568 = vpop.permute.xlu0 %567
      %vm569 = vcmask 392192
      %v572 = vsel %vm569, 0, %v537
      %v574 = vsel %vm569, %v513, %v539
      %v576 = vsel %vm569, %v515, %v541
      %v578 = vsel %vm569, %v517, %v543
      %v580 = vsel %vm569, %v519, %v545
      %v582 = vsel %vm569, %v521, %v547
      %v584 = vsel %vm569, %v523, %v549
      %v586 = vsel %vm569, %v525, %v551
      %vm587 = vcmask 785408
      %v589 = vsel %vm587, %v572, %v554
      %v591 = vsel %vm587, %v574, %v556
      %v593 = vsel %vm587, %v576, %v558
      %v595 = vsel %vm587, %v578, %v560
      %v597 = vsel %vm587, %v580, %v562
      %v599 = vsel %vm587, %v582, %v564
      %v601 = vsel %vm587, %v584, %v566
      %v603 = vsel %vm587, %v586, %v568
      %v612 = vunpack.c.l.b16 %v589
      %v613 = vunpack.c.l.b16 %v554
      %v614 = vunpack.c.l.b16 %v591
      %v615 = vunpack.c.l.b16 %v556
      %v616 = vunpack.c.l.b16 %v593
      %v617 = vunpack.c.l.b16 %v558
      %v618 = vunpack.c.l.b16 %v595
      %v619 = vunpack.c.l.b16 %v560
      %v620 = vunpack.c.l.b16 %v597
      %v621 = vunpack.c.l.b16 %v562
      %v622 = vunpack.c.l.b16 %v599
      %v623 = vunpack.c.l.b16 %v564
      %v624 = vunpack.c.l.b16 %v601
      %v625 = vunpack.c.l.b16 %v566
      %v626 = vunpack.c.l.b16 %v603
      %v627 = vunpack.c.l.b16 %v568
      %v628 = vld [vmem:[%s1] sm:$0xf]
      %v629 = vld [vmem:[%s1 + $0x4] sm:$0xf]
      %v630 = vld [vmem:[%s1 + $0x8] sm:$0xf]
      %v631 = vld [vmem:[%s1 + $0xc] sm:$0xf]
      %v632 = vld [vmem:[%s1 + $0x10] sm:$0xf]
      %v633 = vld [vmem:[%s1 + $0x14] sm:$0xf]
      %v634 = vld [vmem:[%s1 + $0x18] sm:$0xf]
      %v635 = vld [vmem:[%s1 + $0x1c] sm:$0xf]
      %v636 = vld [vmem:[%s1 + $0x20] sm:$0xf]
      %v637 = vld [vmem:[%s1 + $0x24] sm:$0xf]
      %v638 = vld [vmem:[%s1 + $0x28] sm:$0xf]
      %v639 = vld [vmem:[%s1 + $0x2c] sm:$0xf]
      %v640 = vld [vmem:[%s1 + $0x30] sm:$0xf]
      %v641 = vld [vmem:[%s1 + $0x34] sm:$0xf]
      %v642 = vld [vmem:[%s1 + $0x38] sm:$0xf]
      %v643 = vld [vmem:[%s1 + $0x3c] sm:$0xf]
      %v644 = vld [vmem:[%s1 + $0x40] sm:$0xf]
      %v645 = vld [vmem:[%s1 + $0x44] sm:$0xf]
      %v646 = vld [vmem:[%s2] sm:$0x1]
      %v648 = vperm.slane %v646, 0
      %v650 = vpack.c.b16 %v614, %v612
      %v651 = vpack.c.b16 %v615, %v613
      %v652 = vpack.c.b16 %v618, %v616
      %v653 = vpack.c.b16 %v619, %v617
      %v654 = vpack.c.b16 %v622, %v620
      %v655 = vpack.c.b16 %v623, %v621
      %v656 = vpack.c.b16 %v626, %v624
      %v657 = vpack.c.b16 %v627, %v625
      %v680 = vunpack.c.l.b16 %v628
      %v681 = vunpack.c.l.b16 %v629
      %v682 = vunpack.c.l.b16 %v630
      %v683 = vunpack.c.l.b16 %v631
      %v684 = vunpack.c.l.b16 %v632
      %v685 = vunpack.c.l.b16 %v633
      %v686 = vunpack.c.l.b16 %v634
      %v687 = vunpack.c.l.b16 %v635
      %v688 = vunpack.c.l.b16 %v636
      %v689 = vunpack.c.l.b16 %v637
      %v690 = vunpack.c.l.b16 %v638
      %v691 = vunpack.c.l.b16 %v639
      %v692 = vunpack.c.l.b16 %v640
      %v693 = vunpack.c.l.b16 %v641
      %v694 = vunpack.c.l.b16 %v642
      %v695 = vunpack.c.l.b16 %v643
      %v696 = vunpack.c.l.b16 %v644
      %v697 = vunpack.c.l.b16 %v645
      %v698 = vpack.c.b16 %v681, %v680
      %v699 = vpack.c.b16 %v683, %v682
      %v700 = vpack.c.b16 %v685, %v684
      %v701 = vpack.c.b16 %v687, %v686
      %v702 = vpack.c.b16 %v689, %v688
      %v703 = vpack.c.b16 %v691, %v690
      %v704 = vpack.c.b16 %v693, %v692
      %v705 = vpack.c.b16 %v695, %v694
      %v706 = vpack.c.b16 %v697, %v696
      %v717 = vsel %vm486, %v651, 0
      %v720 = vsel %vm486, %v653, 0
      %v723 = vsel %vm486, %v655, 0
      %v726 = vsel %vm486, %v657, 0
      %728 = vmatpush.bf16.msra.mxu0 %v705
      %729 = vmatpush.bf16.msra.mxu0 %v704
      %730 = vmatpush.bf16.msra.mxu0 %v703
      %731 = vmatpush.bf16.msra.mxu0 %v702
      %732 = vmatpush.bf16.msra.mxu0 %v701
      %733 = vmatpush.bf16.msra.mxu0 %v700
      %734 = vmatpush.bf16.msra.mxu0 %v699
      %735 = vmatpush.bf16.msra.mxu0 %v698
      %736 = vmatmul.bf16.gmra.mxu0 %v650
      %v737 = vpop.f32.mrf.mxu0
      %v738 = vadd.f32 %v648, %v737
      %v739 = vpop.f32.mrf.mxu0
      %v740 = vadd.f32 %v648, %v739
      %741 = vmatmul.bf16.gmra.mxu0 %v652
      %v742 = vpop.f32.mrf.mxu0
      %v743 = vadd.f32 %v648, %v742
      %v744 = vpop.f32.mrf.mxu0
      %v745 = vadd.f32 %v648, %v744
      %746 = vmatmul.bf16.gmra.mxu0 %v654
      %v747 = vpop.f32.mrf.mxu0
      %v748 = vadd.f32 %v648, %v747
      %v749 = vpop.f32.mrf.mxu0
      %v750 = vadd.f32 %v648, %v749
      %751 = vmatmul.bf16.gmra.mxu0 %v656
      %v752 = vpop.f32.mrf.mxu0
      %v753 = vadd.f32 %v648, %v752
      %v754 = vpop.f32.mrf.mxu0
      %v755 = vadd.f32 %v648, %v754
      %756 = vdwg.mxu0
      %757 = vmatpush.bf16.msra.mxu0 0
      %758 = vmatpush.bf16.msra.mxu0 0
      %759 = vmatpush.bf16.msra.mxu0 0
      %760 = vmatpush.bf16.msra.mxu0 0
      %761 = vmatpush.bf16.msra.mxu0 0
      %762 = vmatpush.bf16.msra.mxu0 0
      %763 = vmatpush.bf16.msra.mxu0 0
      %764 = vmatpush.bf16.msra.mxu0 %v706
      %765 = vmatmul.bf16.gmra.mxu0 %v717
      %v766 = vpop.f32.mrf.mxu0
      %v767 = vadd.f32 %v738, %v766
      %v768 = vpop.f32.mrf.mxu0
      %v769 = vadd.f32 %v740, %v768
      %770 = vmatmul.bf16.gmra.mxu0 %v720
      %v771 = vpop.f32.mrf.mxu0
      %v772 = vadd.f32 %v743, %v771
      %v773 = vpop.f32.mrf.mxu0
      %v774 = vadd.f32 %v745, %v773
      %775 = vmatmul.bf16.gmra.mxu0 %v723
      %v776 = vpop.f32.mrf.mxu0
      %v777 = vadd.f32 %v748, %v776
      %v778 = vpop.f32.mrf.mxu0
      %v779 = vadd.f32 %v750, %v778
      %780 = vmatmul.bf16.gmra.mxu0 %v726
      %v781 = vpop.f32.mrf.mxu0
      %v782 = vadd.f32 %v753, %v781
      %v783 = vpop.f32.mrf.mxu0
      %v784 = vadd.f32 %v755, %v783
      %785 = vdwg.mxu0
      %786 = vst.msk [vmem:[%s258] sm:$0xff] %vm486, %v767
      %787 = vst.msk [vmem:[%s258 + $0x8] sm:$0xff] %vm486, %v769
      %788 = vst.msk [vmem:[%s258 + $0x10] sm:$0xff] %vm486, %v772
      %789 = vst.msk [vmem:[%s258 + $0x18] sm:$0xff] %vm486, %v774
      %790 = vst.msk [vmem:[%s258 + $0x20] sm:$0xff] %vm486, %v777
      %791 = vst.msk [vmem:[%s258 + $0x28] sm:$0xff] %vm486, %v779
      %792 = vst.msk [vmem:[%s258 + $0x30] sm:$0xff] %vm486, %v782
      %793 = vst.msk [vmem:[%s258 + $0x38] sm:$0xff] %vm486, %v784
      %v794 = vsel %vm486, %v767, 0.0
      %v795 = vsel %vm486, %v769, 0.0
      %v796 = vadd.f32 %v794, %v795
      %v797 = vsel %vm486, %v772, 0.0
      %v798 = vadd.f32 %v796, %v797
      %v799 = vsel %vm486, %v774, 0.0
      %v800 = vadd.f32 %v798, %v799
      %v801 = vsel %vm486, %v777, 0.0
      %v802 = vadd.f32 %v800, %v801
      %v803 = vsel %vm486, %v779, 0.0
      %v804 = vadd.f32 %v802, %v803
      %v805 = vsel %vm486, %v782, 0.0
      %v806 = vadd.f32 %v804, %v805
      %v807 = vsel %vm486, %v784, 0.0
      %v808 = vadd.f32 %v806, %v807
      %v809 = vrot.slane %v808, 4
      %v810 = vadd.f32 %v808, %v809
      %v811 = vrot.slane %v810, 2
      %v812 = vadd.f32 %v810, %v811
      %v813 = vrot.slane %v812, 1
      %v814 = vadd.f32 %v812, %v813
      %v815 = vmul.f32 %v767, %v767
      %v816 = vmul.f32 %v769, %v769
      %v817 = vmul.f32 %v772, %v772
      %v818 = vmul.f32 %v774, %v774
      %v819 = vmul.f32 %v777, %v777
      %v820 = vmul.f32 %v779, %v779
      %v821 = vmul.f32 %v782, %v782
      %v822 = vmul.f32 %v784, %v784
      %v823 = vsel %vm486, %v815, 0.0
      %v824 = vsel %vm486, %v816, 0.0
      %v825 = vadd.f32 %v823, %v824
      %v826 = vsel %vm486, %v817, 0.0
      %v827 = vadd.f32 %v825, %v826
      %v828 = vsel %vm486, %v818, 0.0
      %v829 = vadd.f32 %v827, %v828
      %v830 = vsel %vm486, %v819, 0.0
      %v831 = vadd.f32 %v829, %v830
      %v832 = vsel %vm486, %v820, 0.0
      %v833 = vadd.f32 %v831, %v832
      %v834 = vsel %vm486, %v821, 0.0
      %v835 = vadd.f32 %v833, %v834
      %v836 = vsel %vm486, %v822, 0.0
      %v837 = vadd.f32 %v835, %v836
      %v838 = vrot.slane %v837, 4
      %v839 = vadd.f32 %v837, %v838
      %v840 = vrot.slane %v839, 2
      %v841 = vadd.f32 %v839, %v840
      %v842 = vrot.slane %v841, 1
      %v843 = vadd.f32 %v841, %v842
      %vm844 = vcmask 1040384
      %v845 = vsel %vm844, %v814, %v843
      %vm846 = vcmask 123904
      %847 = vst.msk [vmem:[%s262] sm:$0x3] %vm846, %v845
      %p848 = scmp.lt.s32.totalorder %s18, 1
      %s849 = scalar_select %p848, %s18, 1
      %s850 = smul.addr %s849, 8
      %s851 = smul.addr %s850, 8
      %s852 = scalar_lea.vmem %s5, %s851
      %p853 = scmp.lt.s32.totalorder %s18, 1
      %s854 = scalar_select %p853, %s18, 1
      %s855 = smul.addr %s854, 2
      %s856 = scalar_lea.vmem %s6, %s855
      // Predicated region
      $region41: #{contractive_block.10} parent=39 // pred_check
        %p857 = pneg %p146
      $region42: #{contractive_block.10} parent=39 // pred_check_branch
        %859 = sbr.rel (%p857) target = $region44
      $region43: #{contractive_block.10} parent=39 // pred_region
        _
      $region44: #{contractive_block.10} parent=39 // pred_fallthru
        _
      // Predicated region
      $region45: #{contractive_block.10} parent=39 // pred_check
        %p860 = pneg %p172
      $region46: #{contractive_block.10} parent=39 // pred_check_branch
        %862 = sbr.rel (%p860) target = $region48
      $region47: #{contractive_block.10} parent=39 // pred_region
        _
      $region48: #{contractive_block.10} parent=39 // pred_fallthru
        _
    $region40: #{contractive_block.10} parent=5 // pred_fallthru
      _
    %p863 = scmp.le.s32.totalorder 2, %s13
    // Predicated region
    $region49: #{contractive_block.10} parent=5 // pred_check
      %p864 = pneg %p863
    $region50: #{contractive_block.10} parent=5 // pred_check_branch
      %866 = sbr.rel (%p864) target = $region52
    $region51: #{contractive_block.10} parent=5 // pred_region
      %s867 = ssub.s32 %s13, 2
      // Predicated region
      $region53: #{contractive_block.10} parent=51 // pred_check
        %p868 = pneg %p152
      $region54: #{contractive_block.10} parent=51 // pred_check_branch
        %870 = sbr.rel (%p868) target = $region56
      $region55: #{contractive_block.10} parent=51 // pred_region
        %p871 = scmp.lt.s32.totalorder %s19, 1
        %s872 = scalar_select %p871, %s19, 1
        %s873 = smul.addr %s872, 8
        %s874 = smul.addr %s873, 8
        %s875 = scalar_lea.vmem %s5, %s874
      $region56: #{contractive_block.10} parent=51 // pred_fallthru
        _
      // Predicated region
      $region57: #{contractive_block.10} parent=51 // pred_check
        %p876 = pneg %p178
      $region58: #{contractive_block.10} parent=51 // pred_check_branch
        %878 = sbr.rel (%p876) target = $region60
      $region59: #{contractive_block.10} parent=51 // pred_region
        %p879 = scmp.lt.s32.totalorder %s19, 1
        %s880 = scalar_select %p879, %s19, 1
        %s881 = smul.addr %s880, 2
        %s882 = scalar_lea.vmem %s6, %s881
      $region60: #{contractive_block.10} parent=51 // pred_fallthru
        _
    $region52: #{contractive_block.10} parent=5 // pred_fallthru
      _
  $region6: #{contractive_block.10} parent=0 // loop_footer
    %s17 = sadd.s32 1, %s13
  $region7: #{contractive_block.10} parent=0 // loop_footer_branch
    %12 = sbr.rel target = $region3
  $region8: #{contractive_block.10} parent=0 // loop_exit
    _

</llo_original>
